<compile_context>
chip_gen: v5e
topology: v5e:2x2
jax: 0.10.0
libtpu: 0.0.40
codegen_flags: <defaults>
</compile_context>

<pallas_src>
import jax
import jax.numpy as jnp
from jax.experimental import pallas as pl
from jax.experimental.pallas import tpu as pltpu

D_IN, D1, D2, D3 = 28 * 28, 1024, 512, 256
OUT_PAD = 128  # lane-dense padded width of the final (N=1) layer


def _round_up(n, m):
    return ((n + m - 1) // m) * m


def _leaky_relu(h, slope=0.2):
    return jnp.where(h > 0, h, slope * h)


def critic_kernel(x_ref,
                  w1_ref, b1_ref,
                  w2_ref, b2_ref,
                  w3_ref, b3_ref,
                  w4_ref, b4_ref,
                  o_ref):
    bf16 = jnp.bfloat16
    # Layer 1: 784 -> 1024, LeakyReLU(0.2)   (bf16 matmul, f32 accumulate)
    h = jnp.dot(x_ref[...].astype(bf16), w1_ref[...],
                preferred_element_type=jnp.float32) + b1_ref[...]
    h = _leaky_relu(h)
    # (Dropout(0.3) -> identity in eval mode)
    # Layer 2: 1024 -> 512, LeakyReLU(0.2)
    h = jnp.dot(h.astype(bf16), w2_ref[...],
                preferred_element_type=jnp.float32) + b2_ref[...]
    h = _leaky_relu(h)
    # Layer 3: 512 -> 256, LeakyReLU(0.2)
    h = jnp.dot(h.astype(bf16), w3_ref[...],
                preferred_element_type=jnp.float32) + b3_ref[...]
    h = _leaky_relu(h)
    # Layer 4: 256 -> 1, zero-padded to 128 output lanes (lane-dense store)
    o_ref[...] = jnp.dot(h.astype(bf16), w4_ref[...],
                         preferred_element_type=jnp.float32) + b4_ref[...]


def critic_forward(x, params):
    """x: (B, 784) float32.  Returns (B,) float32, matching .squeeze(1)."""
    B = x.shape[0]
    w1, b1, w2, b2, w3, b3, w4, b4 = params
    bf16 = jnp.bfloat16

    # Host-side operand prep: bf16 weights, f32 biases, padded lane-dense layer 4.
    w1b, w2b, w3b = w1.astype(bf16), w2.astype(bf16), w3.astype(bf16)
    w4p = jnp.zeros((D3, OUT_PAD), bf16).at[:, :1].set(w4.astype(bf16))
    b4p = jnp.zeros((1, OUT_PAD), jnp.float32).at[:, :1].set(b4)

    # Batch tiling: TM rows per grid step; pad B so the grid divides evenly.
    TM = 256 if B >= 256 else max(16, _round_up(B, 16))
    B_pad = _round_up(B, TM)
    if B_pad != B:
        x = jnp.pad(x, ((0, B_pad - B), (0, 0)))
    grid = (B_pad // TM,)

    # Weights/biases: constant index_map -> DMA'd once, resident across tiles.
    resident = lambda a: pl.BlockSpec(a.shape, lambda i: (0, 0))

    flops = 2 * B_pad * (D_IN * D1 + D1 * D2 + D2 * D3 + D3 * OUT_PAD)
    bytes_accessed = (
        x.size * 4
        + (w1b.size + w2b.size + w3b.size + w4p.size) * 2
        + (b1.size + b2.size + b3.size + b4p.size) * 4
        + B_pad * OUT_PAD * 4
    )

    out = pl.pallas_call(
        critic_kernel,
        out_shape=jax.ShapeDtypeStruct((B_pad, OUT_PAD), jnp.float32),
        grid=grid,
        in_specs=[
            pl.BlockSpec((TM, D_IN), lambda i: (i, 0)),
            resident(w1b), resident(b1),
            resident(w2b), resident(b2),
            resident(w3b), resident(b3),
            resident(w4p), resident(b4p),
        ],
        out_specs=pl.BlockSpec((TM, OUT_PAD), lambda i: (i, 0)),
        compiler_params=pltpu.CompilerParams(
            dimension_semantics=("parallel",),
            vmem_limit_bytes=32 << 20,
        ),
        cost_estimate=pl.CostEstimate(
            flops=flops, transcendentals=0, bytes_accessed=bytes_accessed),
    )(x, w1b, b1, w2b, b2, w3b, b3, w4p, b4p)

    return out[:B, 0]  # drop batch padding + squeeze(1)


def init_params(key):
    """Deterministic init mirroring Critic.init_weights(): W ~ N(0, 0.05), b = 0.
    Weights returned as (in, out) = PyTorch weight transposed."""
    sizes = [(D_IN, D1), (D1, D2), (D2, D3), (D3, 1)]
    params = []
    for fin, fout in sizes:
        key, sub = jax.random.split(key)
        w = 0.05 * jax.random.normal(sub, (fin, fout), dtype=jnp.float32)
        b = jnp.zeros((1, fout), dtype=jnp.float32)
        params.extend([w, b])
    return tuple(params)


if __name__ == "__main__":
    key = jax.random.PRNGKey(0)
    k_x, k_p = jax.random.split(key)

    B = 8
    x = jax.random.normal(k_x, (B, D_IN), dtype=jnp.float32)
    params = init_params(k_p)

    out = critic_forward(x, params)
    jax.block_until_ready(out)
    assert out.shape == (B,), out.shape

    # Reference in plain JAX mirroring the kernel's numerics
    # (bf16 weights/activations into each matmul, f32 accumulate, f32 epilogue).
    def ref(x, params):
        w1, b1, w2, b2, w3, b3, w4, b4 = params
        bf = lambda a: a.astype(jnp.bfloat16)
        h = jnp.dot(bf(x), bf(w1), preferred_element_type=jnp.float32) + b1
        h = jnp.where(h > 0, h, 0.2 * h)
        h = jnp.dot(bf(h), bf(w2), preferred_element_type=jnp.float32) + b2
        h = jnp.where(h > 0, h, 0.2 * h)
        h = jnp.dot(bf(h), bf(w3), preferred_element_type=jnp.float32) + b3
        h = jnp.where(h > 0, h, 0.2 * h)
        return (jnp.dot(bf(h), bf(w4), preferred_element_type=jnp.float32) + b4)[:, 0]

    ref_out = ref(x, params)
    assert jnp.allclose(out, ref_out, atol=1e-2, rtol=1e-2), (
        jnp.max(jnp.abs(out - ref_out)))

    print("KERNEL_OK")
</pallas_src>

<mosaic_0001>
module attributes {stable_mosaic.version = 11 : i64} {
  func.func @critic_kernel(%arg0: i32, %arg1: memref<16x784xf32, #tpu.memory_space<vmem>>, %arg2: memref<784x1024xbf16, #tpu.memory_space<vmem>>, %arg3: memref<1x1024xf32, #tpu.memory_space<vmem>>, %arg4: memref<1024x512xbf16, #tpu.memory_space<vmem>>, %arg5: memref<1x512xf32, #tpu.memory_space<vmem>>, %arg6: memref<512x256xbf16, #tpu.memory_space<vmem>>, %arg7: memref<1x256xf32, #tpu.memory_space<vmem>>, %arg8: memref<256x128xbf16, #tpu.memory_space<vmem>>, %arg9: memref<1x128xf32, #tpu.memory_space<vmem>>, %arg10: memref<16x128xf32, #tpu.memory_space<vmem>>) attributes {dimension_semantics = [#tpu.dimension_semantics<parallel>], iteration_bounds = array<i64: 1>, scalar_prefetch = 0 : i64, scratch_operands = 0 : i64, tpu.core_type = #tpu.core_type<tc>, window_params = [{transform_indices = @transform_0, window_bounds = array<i64: 16, 784>}, {pipeline_mode = #tpu.pipeline_mode<synchronous>, transform_indices = @transform_1, window_bounds = array<i64: 784, 1024>}, {pipeline_mode = #tpu.pipeline_mode<synchronous>, transform_indices = @transform_2, window_bounds = array<i64: 1, 1024>}, {pipeline_mode = #tpu.pipeline_mode<synchronous>, transform_indices = @transform_3, window_bounds = array<i64: 1024, 512>}, {pipeline_mode = #tpu.pipeline_mode<synchronous>, transform_indices = @transform_4, window_bounds = array<i64: 1, 512>}, {pipeline_mode = #tpu.pipeline_mode<synchronous>, transform_indices = @transform_5, window_bounds = array<i64: 512, 256>}, {pipeline_mode = #tpu.pipeline_mode<synchronous>, transform_indices = @transform_6, window_bounds = array<i64: 1, 256>}, {pipeline_mode = #tpu.pipeline_mode<synchronous>, transform_indices = @transform_7, window_bounds = array<i64: 256, 128>}, {pipeline_mode = #tpu.pipeline_mode<synchronous>, transform_indices = @transform_8, window_bounds = array<i64: 1, 128>}, {transform_indices = @transform_9, window_bounds = array<i64: 16, 128>}]} {
    %c0 = arith.constant 0 : index
    %c0_0 = arith.constant 0 : index
    %0 = vector.load %arg1[%c0, %c0_0] : memref<16x784xf32, #tpu.memory_space<vmem>>, vector<16x784xf32>
    %1 = arith.truncf %0 : vector<16x784xf32> to vector<16x784xbf16>
    %c0_1 = arith.constant 0 : index
    %c0_2 = arith.constant 0 : index
    %2 = vector.load %arg2[%c0_1, %c0_2] : memref<784x1024xbf16, #tpu.memory_space<vmem>>, vector<784x1024xbf16>
    %cst = arith.constant dense<0.000000e+00> : vector<16x1024xf32>
    %3 = tpu.matmul %1, %2, %cst {dimension_numbers = #tpu.dot_dimension_numbers<[1], [0], [0], [1], [0, 0, 1, 1], [], []>} : vector<16x784xbf16>, vector<784x1024xbf16>, vector<16x1024xf32> -> vector<16x1024xf32>
    %c0_3 = arith.constant 0 : index
    %c0_4 = arith.constant 0 : index
    %4 = vector.load %arg3[%c0_3, %c0_4] : memref<1x1024xf32, #tpu.memory_space<vmem>>, vector<1x1024xf32>
    %5 = vector.broadcast %4 : vector<1x1024xf32> to vector<16x1024xf32>
    %6 = arith.addf %3, %5 : vector<16x1024xf32>
    %cst_5 = arith.constant 0.000000e+00 : f32
    %7 = vector.broadcast %cst_5 : f32 to vector<16x1024xf32>
    %8 = arith.cmpf ogt, %6, %7 : vector<16x1024xf32>
    %cst_6 = arith.constant 2.000000e-01 : f32
    %9 = vector.broadcast %cst_6 : f32 to vector<16x1024xf32>
    %10 = arith.mulf %9, %6 : vector<16x1024xf32>
    %11 = arith.select %8, %6, %10 : vector<16x1024xi1>, vector<16x1024xf32>
    %12 = arith.truncf %11 : vector<16x1024xf32> to vector<16x1024xbf16>
    %c0_7 = arith.constant 0 : index
    %c0_8 = arith.constant 0 : index
    %13 = vector.load %arg4[%c0_7, %c0_8] : memref<1024x512xbf16, #tpu.memory_space<vmem>>, vector<1024x512xbf16>
    %cst_9 = arith.constant dense<0.000000e+00> : vector<16x512xf32>
    %14 = tpu.matmul %12, %13, %cst_9 {dimension_numbers = #tpu.dot_dimension_numbers<[1], [0], [0], [1], [0, 0, 1, 1], [], []>} : vector<16x1024xbf16>, vector<1024x512xbf16>, vector<16x512xf32> -> vector<16x512xf32>
    %c0_10 = arith.constant 0 : index
    %c0_11 = arith.constant 0 : index
    %15 = vector.load %arg5[%c0_10, %c0_11] : memref<1x512xf32, #tpu.memory_space<vmem>>, vector<1x512xf32>
    %16 = vector.broadcast %15 : vector<1x512xf32> to vector<16x512xf32>
    %17 = arith.addf %14, %16 : vector<16x512xf32>
    %cst_12 = arith.constant 0.000000e+00 : f32
    %18 = vector.broadcast %cst_12 : f32 to vector<16x512xf32>
    %19 = arith.cmpf ogt, %17, %18 : vector<16x512xf32>
    %cst_13 = arith.constant 2.000000e-01 : f32
    %20 = vector.broadcast %cst_13 : f32 to vector<16x512xf32>
    %21 = arith.mulf %20, %17 : vector<16x512xf32>
    %22 = arith.select %19, %17, %21 : vector<16x512xi1>, vector<16x512xf32>
    %23 = arith.truncf %22 : vector<16x512xf32> to vector<16x512xbf16>
    %c0_14 = arith.constant 0 : index
    %c0_15 = arith.constant 0 : index
    %24 = vector.load %arg6[%c0_14, %c0_15] : memref<512x256xbf16, #tpu.memory_space<vmem>>, vector<512x256xbf16>
    %cst_16 = arith.constant dense<0.000000e+00> : vector<16x256xf32>
    %25 = tpu.matmul %23, %24, %cst_16 {dimension_numbers = #tpu.dot_dimension_numbers<[1], [0], [0], [1], [0, 0, 1, 1], [], []>} : vector<16x512xbf16>, vector<512x256xbf16>, vector<16x256xf32> -> vector<16x256xf32>
    %c0_17 = arith.constant 0 : index
    %c0_18 = arith.constant 0 : index
    %26 = vector.load %arg7[%c0_17, %c0_18] : memref<1x256xf32, #tpu.memory_space<vmem>>, vector<1x256xf32>
    %27 = vector.broadcast %26 : vector<1x256xf32> to vector<16x256xf32>
    %28 = arith.addf %25, %27 : vector<16x256xf32>
    %cst_19 = arith.constant 0.000000e+00 : f32
    %29 = vector.broadcast %cst_19 : f32 to vector<16x256xf32>
    %30 = arith.cmpf ogt, %28, %29 : vector<16x256xf32>
    %cst_20 = arith.constant 2.000000e-01 : f32
    %31 = vector.broadcast %cst_20 : f32 to vector<16x256xf32>
    %32 = arith.mulf %31, %28 : vector<16x256xf32>
    %33 = arith.select %30, %28, %32 : vector<16x256xi1>, vector<16x256xf32>
    %34 = arith.truncf %33 : vector<16x256xf32> to vector<16x256xbf16>
    %c0_21 = arith.constant 0 : index
    %c0_22 = arith.constant 0 : index
    %35 = vector.load %arg8[%c0_21, %c0_22] : memref<256x128xbf16, #tpu.memory_space<vmem>>, vector<256x128xbf16>
    %cst_23 = arith.constant dense<0.000000e+00> : vector<16x128xf32>
    %36 = tpu.matmul %34, %35, %cst_23 {dimension_numbers = #tpu.dot_dimension_numbers<[1], [0], [0], [1], [0, 0, 1, 1], [], []>} : vector<16x256xbf16>, vector<256x128xbf16>, vector<16x128xf32> -> vector<16x128xf32>
    %c0_24 = arith.constant 0 : index
    %c0_25 = arith.constant 0 : index
    %37 = vector.load %arg9[%c0_24, %c0_25] : memref<1x128xf32, #tpu.memory_space<vmem>>, vector<1x128xf32>
    %38 = vector.broadcast %37 : vector<1x128xf32> to vector<16x128xf32>
    %39 = arith.addf %36, %38 : vector<16x128xf32>
    %c0_26 = arith.constant 0 : index
    %c0_27 = arith.constant 0 : index
    %40 = vector.load %arg10[%c0_26, %c0_27] : memref<16x128xf32, #tpu.memory_space<vmem>>, vector<16x128xf32>
    tpu.vector_store %arg10[%c0_26, %c0_27], %39 {strides = array<i32>} : memref<16x128xf32, #tpu.memory_space<vmem>>, vector<16x128xf32>,
    return
  }
  func.func @transform_0(%arg0: i32) -> (i32, i32) {
    %c0_i32 = arith.constant 0 : i32
    %c0_i32_0 = arith.constant 0 : i32
    return %arg0, %c0_i32 : i32, i32
  }
  func.func @transform_1(%arg0: i32) -> (i32, i32) {
    %c0_i32 = arith.constant 0 : i32
    %c0_i32_0 = arith.constant 0 : i32
    %c0_i32_1 = arith.constant 0 : i32
    return %c0_i32, %c0_i32_0 : i32, i32
  }
  func.func @transform_2(%arg0: i32) -> (i32, i32) {
    %c0_i32 = arith.constant 0 : i32
    %c0_i32_0 = arith.constant 0 : i32
    %c0_i32_1 = arith.constant 0 : i32
    return %c0_i32, %c0_i32_0 : i32, i32
  }
  func.func @transform_3(%arg0: i32) -> (i32, i32) {
    %c0_i32 = arith.constant 0 : i32
    %c0_i32_0 = arith.constant 0 : i32
    %c0_i32_1 = arith.constant 0 : i32
    return %c0_i32, %c0_i32_0 : i32, i32
  }
  func.func @transform_4(%arg0: i32) -> (i32, i32) {
    %c0_i32 = arith.constant 0 : i32
    %c0_i32_0 = arith.constant 0 : i32
    %c0_i32_1 = arith.constant 0 : i32
    return %c0_i32, %c0_i32_0 : i32, i32
  }
  func.func @transform_5(%arg0: i32) -> (i32, i32) {
    %c0_i32 = arith.constant 0 : i32
    %c0_i32_0 = arith.constant 0 : i32
    %c0_i32_1 = arith.constant 0 : i32
    return %c0_i32, %c0_i32_0 : i32, i32
  }
  func.func @transform_6(%arg0: i32) -> (i32, i32) {
    %c0_i32 = arith.constant 0 : i32
    %c0_i32_0 = arith.constant 0 : i32
    %c0_i32_1 = arith.constant 0 : i32
    return %c0_i32, %c0_i32_0 : i32, i32
  }
  func.func @transform_7(%arg0: i32) -> (i32, i32) {
    %c0_i32 = arith.constant 0 : i32
    %c0_i32_0 = arith.constant 0 : i32
    %c0_i32_1 = arith.constant 0 : i32
    return %c0_i32, %c0_i32_0 : i32, i32
  }
  func.func @transform_8(%arg0: i32) -> (i32, i32) {
    %c0_i32 = arith.constant 0 : i32
    %c0_i32_0 = arith.constant 0 : i32
    %c0_i32_1 = arith.constant 0 : i32
    return %c0_i32, %c0_i32_0 : i32, i32
  }
  func.func @transform_9(%arg0: i32) -> (i32, i32) {
    %c0_i32 = arith.constant 0 : i32
    %c0_i32_0 = arith.constant 0 : i32
    return %arg0, %c0_i32 : i32, i32
  }
}

</mosaic_0001>

<llo_original>
// kernel: tpu_custom_call.1
$region0: #{tpu_custom_call.1}
  #allocation0 [shape = 'u32[]', space=smem, size = 0x4, offset = 0x4, fixed_abs, tag = 'smem constant byte address 0x4 - core index']
  #allocation1 [shape = 'u32[72,128]{1,0:T(1,128)}', space=vmem, size = 0x9000, scoped, tag = 'internal scratch']
  %s0 = inlined_call_operand.hbm [shape: f32[16,784], index: 0, kind: input, shape index: {}]
  %s1 = inlined_call_operand.hbm [shape: bf16[784,1024], index: 1, kind: input, shape index: {}]
  %s2 = inlined_call_operand.hbm [shape: f32[1,1024], index: 2, kind: input, shape index: {}]
  %s3 = inlined_call_operand.hbm [shape: bf16[1024,512], index: 3, kind: input, shape index: {}]
  %s4 = inlined_call_operand.hbm [shape: f32[1,512], index: 4, kind: input, shape index: {}]
  %s5 = inlined_call_operand.hbm [shape: bf16[512,256], index: 5, kind: input, shape index: {}]
  %s6 = inlined_call_operand.hbm [shape: f32[1,256], index: 6, kind: input, shape index: {}]
  %s7 = inlined_call_operand.hbm [shape: bf16[256,128], index: 7, kind: input, shape index: {}]
  %s8 = inlined_call_operand.hbm [shape: f32[1,128], index: 8, kind: input, shape index: {}]
  %s9 = inlined_call_operand.hbm [shape: f32[16,128], index: 9, kind: output, shape index: {}]
  %s10 = sld [smem:[#allocation0]]
  $region82: #{tpu_custom_call.1} parent=0
    _
  %s12 = ssub.s32 1, %s10
  %s13 = scalar_select 0, %s12, %s10
  $region1: #{tpu_custom_call.1} parent=0
    #allocation2 [shape = 'u8[57344]{0}', space=vmem, size = 0xe000, scoped, tag = 'input window, operand 0, single buffered']
    #allocation3 [shape = 's32[1]{0}', space=sflag, size = 0x4, scoped, tag = 'scoped memory for tpu_custom_call.1']
    #allocation4 [shape = 's32[1]{0}', space=sflag, size = 0x4, scoped, tag = 'scoped memory for tpu_custom_call.1']
    #allocation5 [shape = 'u8[1605632]{0}', space=vmem, size = 0x188000, scoped, tag = 'input window, operand 1, single buffered']
    #allocation6 [shape = 's32[1]{0}', space=sflag, size = 0x4, scoped, tag = 'scoped memory for tpu_custom_call.1']
    #allocation7 [shape = 'u8[4096]{0}', space=vmem, size = 0x1000, scoped, tag = 'input window, operand 2, single buffered']
    #allocation8 [shape = 'u8[1048576]{0}', space=vmem, size = 0x100000, scoped, tag = 'input window, operand 3, single buffered']
    #allocation9 [shape = 's32[1]{0}', space=sflag, size = 0x4, scoped, tag = 'scoped memory for tpu_custom_call.1']
    #allocation10 [shape = 'u8[2048]{0}', space=vmem, size = 0x800, scoped, tag = 'input window, operand 4, single buffered']
    #allocation11 [shape = 'u8[262144]{0}', space=vmem, size = 0x40000, scoped, tag = 'input window, operand 5, single buffered']
    #allocation12 [shape = 's32[1]{0}', space=sflag, size = 0x4, scoped, tag = 'scoped memory for tpu_custom_call.1']
    #allocation13 [shape = 'u8[1024]{0}', space=vmem, size = 0x400, scoped, tag = 'input window, operand 6, single buffered']
    #allocation14 [shape = 'u8[65536]{0}', space=vmem, size = 0x10000, scoped, tag = 'input window, operand 7, single buffered']
    #allocation15 [shape = 's32[1]{0}', space=sflag, size = 0x4, scoped, tag = 'scoped memory for tpu_custom_call.1']
    #allocation16 [shape = 'u8[512]{0}', space=vmem, size = 0x400, scoped, tag = 'input window, operand 8, single buffered']
    #allocation17 [shape = 'u8[8192]{0}', space=vmem, size = 0x2000, scoped, tag = 'output window, operand 0, single buffered']
    %14 = vsyncpa [#allocation3], 0
    %15 = vsyncpa [#allocation6], 0
    %16 = vsyncpa [#allocation9], 0
    %17 = vsyncpa [#allocation12], 0
    %18 = vsyncpa [#allocation15], 0
    %19 = vsyncpa [#allocation4], 0
    // Predicated region
    $region2: #{tpu_custom_call.1} parent=1 // pred_check
      _
    $region3: #{tpu_custom_call.1} parent=1 // pred_check_branch
      %21 = sbr.rel (0) target = $region5
    $region4: #{tpu_custom_call.1} parent=1 // pred_region
      %23 = vsyncadd [#allocation3], 0
      %s24 = sshll.u32 %s0, 4
      %s25 = int_to_ptr.hbm [resolvable:$true] %s24
      %s26 = sshll.u32 [#allocation2], 4
      %s27 = int_to_ptr.vmem [resolvable:$true] %s26
      %32 = dma.hbm_to_vmem [thread:$0]  %s25, 1792, %s27, [#allocation3], 896, 896, 56
    $region5: #{tpu_custom_call.1} parent=1 // pred_fallthru
      _
    // Predicated region
    $region6: #{tpu_custom_call.1} parent=1 // pred_check
      _
    $region7: #{tpu_custom_call.1} parent=1 // pred_check_branch
      %34 = sbr.rel (0) target = $region9
    $region8: #{tpu_custom_call.1} parent=1 // pred_region
      %36 = vsyncadd [#allocation6], 0
      %s37 = sshll.u32 %s1, 4
      %s38 = int_to_ptr.hbm [resolvable:$true] %s37
      %s39 = sshll.u32 [#allocation5], 4
      %s40 = int_to_ptr.vmem [resolvable:$true] %s39
      %45 = dma.hbm_to_vmem [thread:$0]  %s38, 50176, %s40, [#allocation6], 512, 512, 32
    $region9: #{tpu_custom_call.1} parent=1 // pred_fallthru
      _
    // Predicated region
    $region10: #{tpu_custom_call.1} parent=1 // pred_check
      _
    $region11: #{tpu_custom_call.1} parent=1 // pred_check_branch
      %47 = sbr.rel (0) target = $region13
    $region12: #{tpu_custom_call.1} parent=1 // pred_region
      %49 = vsyncadd [#allocation6], 0
      %s51 = sshll.u32 %s2, 4
      %s52 = int_to_ptr.hbm [resolvable:$true] %s51
      %s53 = sshll.u32 [#allocation7], 4
      %s54 = int_to_ptr.vmem [resolvable:$true] %s53
      %56 = dma.hbm_to_vmem [thread:$0]  %s52, 128, %s54, [#allocation6]
    $region13: #{tpu_custom_call.1} parent=1 // pred_fallthru
      _
    // Predicated region
    $region14: #{tpu_custom_call.1} parent=1 // pred_check
      _
    $region15: #{tpu_custom_call.1} parent=1 // pred_check_branch
      %58 = sbr.rel (0) target = $region17
    $region16: #{tpu_custom_call.1} parent=1 // pred_region
      %60 = vsyncadd [#allocation9], 0
      %s61 = sshll.u32 %s3, 4
      %s62 = int_to_ptr.hbm [resolvable:$true] %s61
      %s63 = sshll.u32 [#allocation8], 4
      %s64 = int_to_ptr.vmem [resolvable:$true] %s63
      %69 = dma.hbm_to_vmem [thread:$0]  %s62, 32768, %s64, [#allocation9], 256, 256, 16
    $region17: #{tpu_custom_call.1} parent=1 // pred_fallthru
      _
    // Predicated region
    $region18: #{tpu_custom_call.1} parent=1 // pred_check
      _
    $region19: #{tpu_custom_call.1} parent=1 // pred_check_branch
      %71 = sbr.rel (0) target = $region21
    $region20: #{tpu_custom_call.1} parent=1 // pred_region
      %73 = vsyncadd [#allocation9], 0
      %s75 = sshll.u32 %s4, 4
      %s76 = int_to_ptr.hbm [resolvable:$true] %s75
      %s77 = sshll.u32 [#allocation10], 4
      %s78 = int_to_ptr.vmem [resolvable:$true] %s77
      %80 = dma.hbm_to_vmem [thread:$0]  %s76, 64, %s78, [#allocation9]
    $region21: #{tpu_custom_call.1} parent=1 // pred_fallthru
      _
    // Predicated region
    $region22: #{tpu_custom_call.1} parent=1 // pred_check
      _
    $region23: #{tpu_custom_call.1} parent=1 // pred_check_branch
      %82 = sbr.rel (0) target = $region25
    $region24: #{tpu_custom_call.1} parent=1 // pred_region
      %84 = vsyncadd [#allocation12], 0
      %s85 = sshll.u32 %s5, 4
      %s86 = int_to_ptr.hbm [resolvable:$true] %s85
      %s87 = sshll.u32 [#allocation11], 4
      %s88 = int_to_ptr.vmem [resolvable:$true] %s87
      %93 = dma.hbm_to_vmem [thread:$0]  %s86, 8192, %s88, [#allocation12], 128, 128, 8
    $region25: #{tpu_custom_call.1} parent=1 // pred_fallthru
      _
    // Predicated region
    $region26: #{tpu_custom_call.1} parent=1 // pred_check
      _
    $region27: #{tpu_custom_call.1} parent=1 // pred_check_branch
      %95 = sbr.rel (0) target = $region29
    $region28: #{tpu_custom_call.1} parent=1 // pred_region
      %97 = vsyncadd [#allocation12], 0
      %s99 = sshll.u32 %s6, 4
      %s100 = int_to_ptr.hbm [resolvable:$true] %s99
      %s101 = sshll.u32 [#allocation13], 4
      %s102 = int_to_ptr.vmem [resolvable:$true] %s101
      %104 = dma.hbm_to_vmem [thread:$0]  %s100, 32, %s102, [#allocation12]
    $region29: #{tpu_custom_call.1} parent=1 // pred_fallthru
      _
    // Predicated region
    $region30: #{tpu_custom_call.1} parent=1 // pred_check
      _
    $region31: #{tpu_custom_call.1} parent=1 // pred_check_branch
      %106 = sbr.rel (0) target = $region33
    $region32: #{tpu_custom_call.1} parent=1 // pred_region
      %108 = vsyncadd [#allocation15], 0
      %s109 = sshll.u32 %s7, 4
      %s110 = int_to_ptr.hbm [resolvable:$true] %s109
      %s111 = sshll.u32 [#allocation14], 4
      %s112 = int_to_ptr.vmem [resolvable:$true] %s111
      %117 = dma.hbm_to_vmem [thread:$0]  %s110, 2048, %s112, [#allocation15], 64, 64, 4
    $region33: #{tpu_custom_call.1} parent=1 // pred_fallthru
      _
    // Predicated region
    $region34: #{tpu_custom_call.1} parent=1 // pred_check
      _
    $region35: #{tpu_custom_call.1} parent=1 // pred_check_branch
      %119 = sbr.rel (0) target = $region37
    $region36: #{tpu_custom_call.1} parent=1 // pred_region
      %121 = vsyncadd [#allocation15], 0
      %s123 = sshll.u32 %s8, 4
      %s124 = int_to_ptr.hbm [resolvable:$true] %s123
      %s125 = sshll.u32 [#allocation16], 4
      %s126 = int_to_ptr.vmem [resolvable:$true] %s125
      %128 = dma.hbm_to_vmem [thread:$0]  %s124, 16, %s126, [#allocation15]
    $region37: #{tpu_custom_call.1} parent=1 // pred_fallthru
      _
    // Predicated region
    $region38: #{tpu_custom_call.1} parent=1 // pred_check
      _
    $region39: #{tpu_custom_call.1} parent=1 // pred_check_branch
      %130 = sbr.rel (0) target = $region41
    $region40: #{tpu_custom_call.1} parent=1 // pred_region
      %132 = dma.done [#allocation3], 1792
    $region41: #{tpu_custom_call.1} parent=1 // pred_fallthru
      _
    // Predicated region
    $region42: #{tpu_custom_call.1} parent=1 // pred_check
      _
    $region43: #{tpu_custom_call.1} parent=1 // pred_check_branch
      %134 = sbr.rel (0) target = $region45
    $region44: #{tpu_custom_call.1} parent=1 // pred_region
      %136 = dma.done [#allocation6], 50176
    $region45: #{tpu_custom_call.1} parent=1 // pred_fallthru
      _
    // Predicated region
    $region46: #{tpu_custom_call.1} parent=1 // pred_check
      _
    $region47: #{tpu_custom_call.1} parent=1 // pred_check_branch
      %138 = sbr.rel (0) target = $region49
    $region48: #{tpu_custom_call.1} parent=1 // pred_region
      %140 = dma.done [#allocation6], 128
    $region49: #{tpu_custom_call.1} parent=1 // pred_fallthru
      _
    // Predicated region
    $region50: #{tpu_custom_call.1} parent=1 // pred_check
      _
    $region51: #{tpu_custom_call.1} parent=1 // pred_check_branch
      %142 = sbr.rel (0) target = $region53
    $region52: #{tpu_custom_call.1} parent=1 // pred_region
      %144 = dma.done [#allocation9], 32768
    $region53: #{tpu_custom_call.1} parent=1 // pred_fallthru
      _
    // Predicated region
    $region54: #{tpu_custom_call.1} parent=1 // pred_check
      _
    $region55: #{tpu_custom_call.1} parent=1 // pred_check_branch
      %146 = sbr.rel (0) target = $region57
    $region56: #{tpu_custom_call.1} parent=1 // pred_region
      %148 = dma.done [#allocation9], 64
    $region57: #{tpu_custom_call.1} parent=1 // pred_fallthru
      _
    // Predicated region
    $region58: #{tpu_custom_call.1} parent=1 // pred_check
      _
    $region59: #{tpu_custom_call.1} parent=1 // pred_check_branch
      %150 = sbr.rel (0) target = $region61
    $region60: #{tpu_custom_call.1} parent=1 // pred_region
      %152 = dma.done [#allocation12], 8192
    $region61: #{tpu_custom_call.1} parent=1 // pred_fallthru
      _
    // Predicated region
    $region62: #{tpu_custom_call.1} parent=1 // pred_check
      _
    $region63: #{tpu_custom_call.1} parent=1 // pred_check_branch
      %154 = sbr.rel (0) target = $region65
    $region64: #{tpu_custom_call.1} parent=1 // pred_region
      %156 = dma.done [#allocation12], 32
    $region65: #{tpu_custom_call.1} parent=1 // pred_fallthru
      _
    // Predicated region
    $region66: #{tpu_custom_call.1} parent=1 // pred_check
      _
    $region67: #{tpu_custom_call.1} parent=1 // pred_check_branch
      %158 = sbr.rel (0) target = $region69
    $region68: #{tpu_custom_call.1} parent=1 // pred_region
      %160 = dma.done [#allocation15], 2048
    $region69: #{tpu_custom_call.1} parent=1 // pred_fallthru
      _
    // Predicated region
    $region70: #{tpu_custom_call.1} parent=1 // pred_check
      _
    $region71: #{tpu_custom_call.1} parent=1 // pred_check_branch
      %162 = sbr.rel (0) target = $region73
    $region72: #{tpu_custom_call.1} parent=1 // pred_region
      %164 = dma.done [#allocation15], 16
    $region73: #{tpu_custom_call.1} parent=1 // pred_fallthru
      _
    %v166 = vld [vmem:[#allocation2] sm:$0xff]
    %v167 = vld [vmem:[#allocation2 + $0x8] sm:$0xff]
    %v168 = vld [vmem:[#allocation2 + $0x10] sm:$0xff]
    %v169 = vld [vmem:[#allocation2 + $0x18] sm:$0xff]
    %v170 = vld [vmem:[#allocation2 + $0x20] sm:$0xff]
    %v171 = vld [vmem:[#allocation2 + $0x28] sm:$0xff]
    %v172 = vld [vmem:[#allocation2 + $0x30] sm:$0xff]
    %v173 = vld [vmem:[#allocation2 + $0x38] sm:$0xff]
    %v174 = vld [vmem:[#allocation2 + $0x40] sm:$0xff]
    %v175 = vld [vmem:[#allocation2 + $0x48] sm:$0xff]
    %v176 = vld [vmem:[#allocation2 + $0x50] sm:$0xff]
    %v177 = vld [vmem:[#allocation2 + $0x58] sm:$0xff]
    %v178 = vld [vmem:[#allocation2 + $0x60] sm:$0xff]
    %v179 = vld [vmem:[#allocation2 + $0x68] sm:$0xff]
    %v180 = vpack.c.bf16 %v173, %v166
    %v181 = vpack.c.bf16 %v174, %v167
    %v182 = vpack.c.bf16 %v175, %v168
    %v183 = vpack.c.bf16 %v176, %v169
    %v184 = vpack.c.bf16 %v177, %v170
    %v185 = vpack.c.bf16 %v178, %v171
    %v186 = vpack.c.bf16 %v179, %v172
    %v187 = vld [vmem:[#allocation5] sm:$0xff]
    %v188 = vld [vmem:[#allocation5 + $0x8] sm:$0xff]
    %v189 = vld [vmem:[#allocation5 + $0x10] sm:$0xff]
    %v190 = vld [vmem:[#allocation5 + $0x18] sm:$0xff]
    %v191 = vld [vmem:[#allocation5 + $0x20] sm:$0xff]
    %v192 = vld [vmem:[#allocation5 + $0x28] sm:$0xff]
    %v193 = vld [vmem:[#allocation5 + $0x30] sm:$0xff]
    %v194 = vld [vmem:[#allocation5 + $0x38] sm:$0xff]
    %v195 = vld [vmem:[#allocation5 + $0x40] sm:$0xff]
    %v196 = vld [vmem:[#allocation5 + $0x48] sm:$0xff]
    %v197 = vld [vmem:[#allocation5 + $0x50] sm:$0xff]
    %v198 = vld [vmem:[#allocation5 + $0x58] sm:$0xff]
    %v199 = vld [vmem:[#allocation5 + $0x60] sm:$0xff]
    %v200 = vld [vmem:[#allocation5 + $0x68] sm:$0xff]
    %v201 = vld [vmem:[#allocation5 + $0x70] sm:$0xff]
    %v202 = vld [vmem:[#allocation5 + $0x78] sm:$0xff]
    %v203 = vld [vmem:[#allocation5 + $0x80] sm:$0xff]
    %v204 = vld [vmem:[#allocation5 + $0x88] sm:$0xff]
    %v205 = vld [vmem:[#allocation5 + $0x90] sm:$0xff]
    %v206 = vld [vmem:[#allocation5 + $0x98] sm:$0xff]
    %v207 = vld [vmem:[#allocation5 + $0xa0] sm:$0xff]
    %v208 = vld [vmem:[#allocation5 + $0xa8] sm:$0xff]
    %v209 = vld [vmem:[#allocation5 + $0xb0] sm:$0xff]
    %v210 = vld [vmem:[#allocation5 + $0xb8] sm:$0xff]
    %v211 = vld [vmem:[#allocation5 + $0xc0] sm:$0xff]
    %v212 = vld [vmem:[#allocation5 + $0xc8] sm:$0xff]
    %v213 = vld [vmem:[#allocation5 + $0xd0] sm:$0xff]
    %v214 = vld [vmem:[#allocation5 + $0xd8] sm:$0xff]
    %v215 = vld [vmem:[#allocation5 + $0xe0] sm:$0xff]
    %v216 = vld [vmem:[#allocation5 + $0xe8] sm:$0xff]
    %v217 = vld [vmem:[#allocation5 + $0xf0] sm:$0xff]
    %v218 = vld [vmem:[#allocation5 + $0xf8] sm:$0xff]
    %v219 = vld [vmem:[#allocation5 + $0x100] sm:$0xff]
    %v220 = vld [vmem:[#allocation5 + $0x108] sm:$0xff]
    %v221 = vld [vmem:[#allocation5 + $0x110] sm:$0xff]
    %v222 = vld [vmem:[#allocation5 + $0x118] sm:$0xff]
    %v223 = vld [vmem:[#allocation5 + $0x120] sm:$0xff]
    %v224 = vld [vmem:[#allocation5 + $0x128] sm:$0xff]
    %v225 = vld [vmem:[#allocation5 + $0x130] sm:$0xff]
    %v226 = vld [vmem:[#allocation5 + $0x138] sm:$0xff]
    %v227 = vld [vmem:[#allocation5 + $0x140] sm:$0xff]
    %v228 = vld [vmem:[#allocation5 + $0x148] sm:$0xff]
    %v229 = vld [vmem:[#allocation5 + $0x150] sm:$0xff]
    %v230 = vld [vmem:[#allocation5 + $0x158] sm:$0xff]
    %v231 = vld [vmem:[#allocation5 + $0x160] sm:$0xff]
    %v232 = vld [vmem:[#allocation5 + $0x168] sm:$0xff]
    %v233 = vld [vmem:[#allocation5 + $0x170] sm:$0xff]
    %v234 = vld [vmem:[#allocation5 + $0x178] sm:$0xff]
    %v235 = vld [vmem:[#allocation5 + $0x180] sm:$0xff]
    %v236 = vld [vmem:[#allocation5 + $0x188] sm:$0xff]
    %v237 = vld [vmem:[#allocation5 + $0x190] sm:$0xff]
    %v238 = vld [vmem:[#allocation5 + $0x198] sm:$0xff]
    %v239 = vld [vmem:[#allocation5 + $0x1a0] sm:$0xff]
    %v240 = vld [vmem:[#allocation5 + $0x1a8] sm:$0xff]
    %v241 = vld [vmem:[#allocation5 + $0x1b0] sm:$0xff]
    %v242 = vld [vmem:[#allocation5 + $0x1b8] sm:$0xff]
    %v243 = vld [vmem:[#allocation5 + $0x1c0] sm:$0xff]
    %v244 = vld [vmem:[#allocation5 + $0x1c8] sm:$0xff]
    %v245 = vld [vmem:[#allocation5 + $0x1d0] sm:$0xff]
    %v246 = vld [vmem:[#allocation5 + $0x1d8] sm:$0xff]
    %v247 = vld [vmem:[#allocation5 + $0x1e0] sm:$0xff]
    %v248 = vld [vmem:[#allocation5 + $0x1e8] sm:$0xff]
    %v249 = vld [vmem:[#allocation5 + $0x1f0] sm:$0xff]
    %v250 = vld [vmem:[#allocation5 + $0x1f8] sm:$0xff]
    %v251 = vld [vmem:[#allocation5 + $0x200] sm:$0xff]
    %v252 = vld [vmem:[#allocation5 + $0x208] sm:$0xff]
    %v253 = vld [vmem:[#allocation5 + $0x210] sm:$0xff]
    %v254 = vld [vmem:[#allocation5 + $0x218] sm:$0xff]
    %v255 = vld [vmem:[#allocation5 + $0x220] sm:$0xff]
    %v256 = vld [vmem:[#allocation5 + $0x228] sm:$0xff]
    %v257 = vld [vmem:[#allocation5 + $0x230] sm:$0xff]
    %v258 = vld [vmem:[#allocation5 + $0x238] sm:$0xff]
    %v259 = vld [vmem:[#allocation5 + $0x240] sm:$0xff]
    %v260 = vld [vmem:[#allocation5 + $0x248] sm:$0xff]
    %v261 = vld [vmem:[#allocation5 + $0x250] sm:$0xff]
    %v262 = vld [vmem:[#allocation5 + $0x258] sm:$0xff]
    %v263 = vld [vmem:[#allocation5 + $0x260] sm:$0xff]
    %v264 = vld [vmem:[#allocation5 + $0x268] sm:$0xff]
    %v265 = vld [vmem:[#allocation5 + $0x270] sm:$0xff]
    %v266 = vld [vmem:[#allocation5 + $0x278] sm:$0xff]
    %v267 = vld [vmem:[#allocation5 + $0x280] sm:$0xff]
    %v268 = vld [vmem:[#allocation5 + $0x288] sm:$0xff]
    %v269 = vld [vmem:[#allocation5 + $0x290] sm:$0xff]
    %v270 = vld [vmem:[#allocation5 + $0x298] sm:$0xff]
    %v271 = vld [vmem:[#allocation5 + $0x2a0] sm:$0xff]
    %v272 = vld [vmem:[#allocation5 + $0x2a8] sm:$0xff]
    %v273 = vld [vmem:[#allocation5 + $0x2b0] sm:$0xff]
    %v274 = vld [vmem:[#allocation5 + $0x2b8] sm:$0xff]
    %v275 = vld [vmem:[#allocation5 + $0x2c0] sm:$0xff]
    %v276 = vld [vmem:[#allocation5 + $0x2c8] sm:$0xff]
    %v277 = vld [vmem:[#allocation5 + $0x2d0] sm:$0xff]
    %v278 = vld [vmem:[#allocation5 + $0x2d8] sm:$0xff]
    %v279 = vld [vmem:[#allocation5 + $0x2e0] sm:$0xff]
    %v280 = vld [vmem:[#allocation5 + $0x2e8] sm:$0xff]
    %v281 = vld [vmem:[#allocation5 + $0x2f0] sm:$0xff]
    %v282 = vld [vmem:[#allocation5 + $0x2f8] sm:$0xff]
    %v283 = vld [vmem:[#allocation5 + $0x300] sm:$0xff]
    %v284 = vld [vmem:[#allocation5 + $0x308] sm:$0xff]
    %v285 = vld [vmem:[#allocation5 + $0x310] sm:$0xff]
    %v286 = vld [vmem:[#allocation5 + $0x318] sm:$0xff]
    %v287 = vld [vmem:[#allocation5 + $0x320] sm:$0xff]
    %v288 = vld [vmem:[#allocation5 + $0x328] sm:$0xff]
    %v289 = vld [vmem:[#allocation5 + $0x330] sm:$0xff]
    %v290 = vld [vmem:[#allocation5 + $0x338] sm:$0xff]
    %v291 = vld [vmem:[#allocation5 + $0x340] sm:$0xff]
    %v292 = vld [vmem:[#allocation5 + $0x348] sm:$0xff]
    %v293 = vld [vmem:[#allocation5 + $0x350] sm:$0xff]
    %v294 = vld [vmem:[#allocation5 + $0x358] sm:$0xff]
    %v295 = vld [vmem:[#allocation5 + $0x360] sm:$0xff]
    %v296 = vld [vmem:[#allocation5 + $0x368] sm:$0xff]
    %v297 = vld [vmem:[#allocation5 + $0x370] sm:$0xff]
    %v298 = vld [vmem:[#allocation5 + $0x378] sm:$0xff]
    %v299 = vld [vmem:[#allocation5 + $0x380] sm:$0xff]
    %v300 = vld [vmem:[#allocation5 + $0x388] sm:$0xff]
    %v301 = vld [vmem:[#allocation5 + $0x390] sm:$0xff]
    %v302 = vld [vmem:[#allocation5 + $0x398] sm:$0xff]
    %v303 = vld [vmem:[#allocation5 + $0x3a0] sm:$0xff]
    %v304 = vld [vmem:[#allocation5 + $0x3a8] sm:$0xff]
    %v305 = vld [vmem:[#allocation5 + $0x3b0] sm:$0xff]
    %v306 = vld [vmem:[#allocation5 + $0x3b8] sm:$0xff]
    %v307 = vld [vmem:[#allocation5 + $0x3c0] sm:$0xff]
    %v308 = vld [vmem:[#allocation5 + $0x3c8] sm:$0xff]
    %v309 = vld [vmem:[#allocation5 + $0x3d0] sm:$0xff]
    %v310 = vld [vmem:[#allocation5 + $0x3d8] sm:$0xff]
    %v311 = vld [vmem:[#allocation5 + $0x3e0] sm:$0xff]
    %v312 = vld [vmem:[#allocation5 + $0x3e8] sm:$0xff]
    %v313 = vld [vmem:[#allocation5 + $0x3f0] sm:$0xff]
    %v314 = vld [vmem:[#allocation5 + $0x3f8] sm:$0xff]
    %v315 = vld [vmem:[#allocation5 + $0x400] sm:$0xff]
    %v316 = vld [vmem:[#allocation5 + $0x408] sm:$0xff]
    %v317 = vld [vmem:[#allocation5 + $0x410] sm:$0xff]
    %v318 = vld [vmem:[#allocation5 + $0x418] sm:$0xff]
    %v319 = vld [vmem:[#allocation5 + $0x420] sm:$0xff]
    %v320 = vld [vmem:[#allocation5 + $0x428] sm:$0xff]
    %v321 = vld [vmem:[#allocation5 + $0x430] sm:$0xff]
    %v322 = vld [vmem:[#allocation5 + $0x438] sm:$0xff]
    %v323 = vld [vmem:[#allocation5 + $0x440] sm:$0xff]
    %v324 = vld [vmem:[#allocation5 + $0x448] sm:$0xff]
    %v325 = vld [vmem:[#allocation5 + $0x450] sm:$0xff]
    %v326 = vld [vmem:[#allocation5 + $0x458] sm:$0xff]
    %v327 = vld [vmem:[#allocation5 + $0x460] sm:$0xff]
    %v328 = vld [vmem:[#allocation5 + $0x468] sm:$0xff]
    %v329 = vld [vmem:[#allocation5 + $0x470] sm:$0xff]
    %v330 = vld [vmem:[#allocation5 + $0x478] sm:$0xff]
    %v331 = vld [vmem:[#allocation5 + $0x480] sm:$0xff]
    %v332 = vld [vmem:[#allocation5 + $0x488] sm:$0xff]
    %v333 = vld [vmem:[#allocation5 + $0x490] sm:$0xff]
    %v334 = vld [vmem:[#allocation5 + $0x498] sm:$0xff]
    %v335 = vld [vmem:[#allocation5 + $0x4a0] sm:$0xff]
    %v336 = vld [vmem:[#allocation5 + $0x4a8] sm:$0xff]
    %v337 = vld [vmem:[#allocation5 + $0x4b0] sm:$0xff]
    %v338 = vld [vmem:[#allocation5 + $0x4b8] sm:$0xff]
    %v339 = vld [vmem:[#allocation5 + $0x4c0] sm:$0xff]
    %v340 = vld [vmem:[#allocation5 + $0x4c8] sm:$0xff]
    %v341 = vld [vmem:[#allocation5 + $0x4d0] sm:$0xff]
    %v342 = vld [vmem:[#allocation5 + $0x4d8] sm:$0xff]
    %v343 = vld [vmem:[#allocation5 + $0x4e0] sm:$0xff]
    %v344 = vld [vmem:[#allocation5 + $0x4e8] sm:$0xff]
    %v345 = vld [vmem:[#allocation5 + $0x4f0] sm:$0xff]
    %v346 = vld [vmem:[#allocation5 + $0x4f8] sm:$0xff]
    %v347 = vld [vmem:[#allocation5 + $0x500] sm:$0xff]
    %v348 = vld [vmem:[#allocation5 + $0x508] sm:$0xff]
    %v349 = vld [vmem:[#allocation5 + $0x510] sm:$0xff]
    %v350 = vld [vmem:[#allocation5 + $0x518] sm:$0xff]
    %v351 = vld [vmem:[#allocation5 + $0x520] sm:$0xff]
    %v352 = vld [vmem:[#allocation5 + $0x528] sm:$0xff]
    %v353 = vld [vmem:[#allocation5 + $0x530] sm:$0xff]
    %v354 = vld [vmem:[#allocation5 + $0x538] sm:$0xff]
    %v355 = vld [vmem:[#allocation5 + $0x540] sm:$0xff]
    %v356 = vld [vmem:[#allocation5 + $0x548] sm:$0xff]
    %v357 = vld [vmem:[#allocation5 + $0x550] sm:$0xff]
    %v358 = vld [vmem:[#allocation5 + $0x558] sm:$0xff]
    %v359 = vld [vmem:[#allocation5 + $0x560] sm:$0xff]
    %v360 = vld [vmem:[#allocation5 + $0x568] sm:$0xff]
    %v361 = vld [vmem:[#allocation5 + $0x570] sm:$0xff]
    %v362 = vld [vmem:[#allocation5 + $0x578] sm:$0xff]
    %v363 = vld [vmem:[#allocation5 + $0x580] sm:$0xff]
    %v364 = vld [vmem:[#allocation5 + $0x588] sm:$0xff]
    %v365 = vld [vmem:[#allocation5 + $0x590] sm:$0xff]
    %v366 = vld [vmem:[#allocation5 + $0x598] sm:$0xff]
    %v367 = vld [vmem:[#allocation5 + $0x5a0] sm:$0xff]
    %v368 = vld [vmem:[#allocation5 + $0x5a8] sm:$0xff]
    %v369 = vld [vmem:[#allocation5 + $0x5b0] sm:$0xff]
    %v370 = vld [vmem:[#allocation5 + $0x5b8] sm:$0xff]
    %v371 = vld [vmem:[#allocation5 + $0x5c0] sm:$0xff]
    %v372 = vld [vmem:[#allocation5 + $0x5c8] sm:$0xff]
    %v373 = vld [vmem:[#allocation5 + $0x5d0] sm:$0xff]
    %v374 = vld [vmem:[#allocation5 + $0x5d8] sm:$0xff]
    %v375 = vld [vmem:[#allocation5 + $0x5e0] sm:$0xff]
    %v376 = vld [vmem:[#allocation5 + $0x5e8] sm:$0xff]
    %v377 = vld [vmem:[#allocation5 + $0x5f0] sm:$0xff]
    %v378 = vld [vmem:[#allocation5 + $0x5f8] sm:$0xff]
    %v379 = vld [vmem:[#allocation5 + $0x600] sm:$0xff]
    %v380 = vld [vmem:[#allocation5 + $0x608] sm:$0xff]
    %v381 = vld [vmem:[#allocation5 + $0x610] sm:$0xff]
    %v382 = vld [vmem:[#allocation5 + $0x618] sm:$0xff]
    %v383 = vld [vmem:[#allocation5 + $0x620] sm:$0xff]
    %v384 = vld [vmem:[#allocation5 + $0x628] sm:$0xff]
    %v385 = vld [vmem:[#allocation5 + $0x630] sm:$0xff]
    %v386 = vld [vmem:[#allocation5 + $0x638] sm:$0xff]
    %v387 = vld [vmem:[#allocation5 + $0x640] sm:$0xff]
    %v388 = vld [vmem:[#allocation5 + $0x648] sm:$0xff]
    %v389 = vld [vmem:[#allocation5 + $0x650] sm:$0xff]
    %v390 = vld [vmem:[#allocation5 + $0x658] sm:$0xff]
    %v391 = vld [vmem:[#allocation5 + $0x660] sm:$0xff]
    %v392 = vld [vmem:[#allocation5 + $0x668] sm:$0xff]
    %v393 = vld [vmem:[#allocation5 + $0x670] sm:$0xff]
    %v394 = vld [vmem:[#allocation5 + $0x678] sm:$0xff]
    %v395 = vld [vmem:[#allocation5 + $0x680] sm:$0xff]
    %v396 = vld [vmem:[#allocation5 + $0x688] sm:$0xff]
    %v397 = vld [vmem:[#allocation5 + $0x690] sm:$0xff]
    %v398 = vld [vmem:[#allocation5 + $0x698] sm:$0xff]
    %v399 = vld [vmem:[#allocation5 + $0x6a0] sm:$0xff]
    %v400 = vld [vmem:[#allocation5 + $0x6a8] sm:$0xff]
    %v401 = vld [vmem:[#allocation5 + $0x6b0] sm:$0xff]
    %v402 = vld [vmem:[#allocation5 + $0x6b8] sm:$0xff]
    %v403 = vld [vmem:[#allocation5 + $0x6c0] sm:$0xff]
    %v404 = vld [vmem:[#allocation5 + $0x6c8] sm:$0xff]
    %v405 = vld [vmem:[#allocation5 + $0x6d0] sm:$0xff]
    %v406 = vld [vmem:[#allocation5 + $0x6d8] sm:$0xff]
    %v407 = vld [vmem:[#allocation5 + $0x6e0] sm:$0xff]
    %v408 = vld [vmem:[#allocation5 + $0x6e8] sm:$0xff]
    %v409 = vld [vmem:[#allocation5 + $0x6f0] sm:$0xff]
    %v410 = vld [vmem:[#allocation5 + $0x6f8] sm:$0xff]
    %v411 = vld [vmem:[#allocation5 + $0x700] sm:$0xff]
    %v412 = vld [vmem:[#allocation5 + $0x708] sm:$0xff]
    %v413 = vld [vmem:[#allocation5 + $0x710] sm:$0xff]
    %v414 = vld [vmem:[#allocation5 + $0x718] sm:$0xff]
    %v415 = vld [vmem:[#allocation5 + $0x720] sm:$0xff]
    %v416 = vld [vmem:[#allocation5 + $0x728] sm:$0xff]
    %v417 = vld [vmem:[#allocation5 + $0x730] sm:$0xff]
    %v418 = vld [vmem:[#allocation5 + $0x738] sm:$0xff]
    %v419 = vld [vmem:[#allocation5 + $0x740] sm:$0xff]
    %v420 = vld [vmem:[#allocation5 + $0x748] sm:$0xff]
    %v421 = vld [vmem:[#allocation5 + $0x750] sm:$0xff]
    %v422 = vld [vmem:[#allocation5 + $0x758] sm:$0xff]
    %v423 = vld [vmem:[#allocation5 + $0x760] sm:$0xff]
    %v424 = vld [vmem:[#allocation5 + $0x768] sm:$0xff]
    %v425 = vld [vmem:[#allocation5 + $0x770] sm:$0xff]
    %v426 = vld [vmem:[#allocation5 + $0x778] sm:$0xff]
    %v427 = vld [vmem:[#allocation5 + $0x780] sm:$0xff]
    %v428 = vld [vmem:[#allocation5 + $0x788] sm:$0xff]
    %v429 = vld [vmem:[#allocation5 + $0x790] sm:$0xff]
    %v430 = vld [vmem:[#allocation5 + $0x798] sm:$0xff]
    %v431 = vld [vmem:[#allocation5 + $0x7a0] sm:$0xff]
    %v432 = vld [vmem:[#allocation5 + $0x7a8] sm:$0xff]
    %v433 = vld [vmem:[#allocation5 + $0x7b0] sm:$0xff]
    %v434 = vld [vmem:[#allocation5 + $0x7b8] sm:$0xff]
    %v435 = vld [vmem:[#allocation5 + $0x7c0] sm:$0xff]
    %v436 = vld [vmem:[#allocation5 + $0x7c8] sm:$0xff]
    %v437 = vld [vmem:[#allocation5 + $0x7d0] sm:$0xff]
    %v438 = vld [vmem:[#allocation5 + $0x7d8] sm:$0xff]
    %v439 = vld [vmem:[#allocation5 + $0x7e0] sm:$0xff]
    %v440 = vld [vmem:[#allocation5 + $0x7e8] sm:$0xff]
    %v441 = vld [vmem:[#allocation5 + $0x7f0] sm:$0xff]
    %v442 = vld [vmem:[#allocation5 + $0x7f8] sm:$0xff]
    %v443 = vld [vmem:[#allocation5 + $0x800] sm:$0xff]
    %v444 = vld [vmem:[#allocation5 + $0x808] sm:$0xff]
    %v445 = vld [vmem:[#allocation5 + $0x810] sm:$0xff]
    %v446 = vld [vmem:[#allocation5 + $0x818] sm:$0xff]
    %v447 = vld [vmem:[#allocation5 + $0x820] sm:$0xff]
    %v448 = vld [vmem:[#allocation5 + $0x828] sm:$0xff]
    %v449 = vld [vmem:[#allocation5 + $0x830] sm:$0xff]
    %v450 = vld [vmem:[#allocation5 + $0x838] sm:$0xff]
    %v451 = vld [vmem:[#allocation5 + $0x840] sm:$0xff]
    %v452 = vld [vmem:[#allocation5 + $0x848] sm:$0xff]
    %v453 = vld [vmem:[#allocation5 + $0x850] sm:$0xff]
    %v454 = vld [vmem:[#allocation5 + $0x858] sm:$0xff]
    %v455 = vld [vmem:[#allocation5 + $0x860] sm:$0xff]
    %v456 = vld [vmem:[#allocation5 + $0x868] sm:$0xff]
    %v457 = vld [vmem:[#allocation5 + $0x870] sm:$0xff]
    %v458 = vld [vmem:[#allocation5 + $0x878] sm:$0xff]
    %v459 = vld [vmem:[#allocation5 + $0x880] sm:$0xff]
    %v460 = vld [vmem:[#allocation5 + $0x888] sm:$0xff]
    %v461 = vld [vmem:[#allocation5 + $0x890] sm:$0xff]
    %v462 = vld [vmem:[#allocation5 + $0x898] sm:$0xff]
    %v463 = vld [vmem:[#allocation5 + $0x8a0] sm:$0xff]
    %v464 = vld [vmem:[#allocation5 + $0x8a8] sm:$0xff]
    %v465 = vld [vmem:[#allocation5 + $0x8b0] sm:$0xff]
    %v466 = vld [vmem:[#allocation5 + $0x8b8] sm:$0xff]
    %v467 = vld [vmem:[#allocation5 + $0x8c0] sm:$0xff]
    %v468 = vld [vmem:[#allocation5 + $0x8c8] sm:$0xff]
    %v469 = vld [vmem:[#allocation5 + $0x8d0] sm:$0xff]
    %v470 = vld [vmem:[#allocation5 + $0x8d8] sm:$0xff]
    %v471 = vld [vmem:[#allocation5 + $0x8e0] sm:$0xff]
    %v472 = vld [vmem:[#allocation5 + $0x8e8] sm:$0xff]
    %v473 = vld [vmem:[#allocation5 + $0x8f0] sm:$0xff]
    %v474 = vld [vmem:[#allocation5 + $0x8f8] sm:$0xff]
    %v475 = vld [vmem:[#allocation5 + $0x900] sm:$0xff]
    %v476 = vld [vmem:[#allocation5 + $0x908] sm:$0xff]
    %v477 = vld [vmem:[#allocation5 + $0x910] sm:$0xff]
    %v478 = vld [vmem:[#allocation5 + $0x918] sm:$0xff]
    %v479 = vld [vmem:[#allocation5 + $0x920] sm:$0xff]
    %v480 = vld [vmem:[#allocation5 + $0x928] sm:$0xff]
    %v481 = vld [vmem:[#allocation5 + $0x930] sm:$0xff]
    %v482 = vld [vmem:[#allocation5 + $0x938] sm:$0xff]
    %v483 = vld [vmem:[#allocation5 + $0x940] sm:$0xff]
    %v484 = vld [vmem:[#allocation5 + $0x948] sm:$0xff]
    %v485 = vld [vmem:[#allocation5 + $0x950] sm:$0xff]
    %v486 = vld [vmem:[#allocation5 + $0x958] sm:$0xff]
    %v487 = vld [vmem:[#allocation5 + $0x960] sm:$0xff]
    %v488 = vld [vmem:[#allocation5 + $0x968] sm:$0xff]
    %v489 = vld [vmem:[#allocation5 + $0x970] sm:$0xff]
    %v490 = vld [vmem:[#allocation5 + $0x978] sm:$0xff]
    %v491 = vld [vmem:[#allocation5 + $0x980] sm:$0xff]
    %v492 = vld [vmem:[#allocation5 + $0x988] sm:$0xff]
    %v493 = vld [vmem:[#allocation5 + $0x990] sm:$0xff]
    %v494 = vld [vmem:[#allocation5 + $0x998] sm:$0xff]
    %v495 = vld [vmem:[#allocation5 + $0x9a0] sm:$0xff]
    %v496 = vld [vmem:[#allocation5 + $0x9a8] sm:$0xff]
    %v497 = vld [vmem:[#allocation5 + $0x9b0] sm:$0xff]
    %v498 = vld [vmem:[#allocation5 + $0x9b8] sm:$0xff]
    %v499 = vld [vmem:[#allocation5 + $0x9c0] sm:$0xff]
    %v500 = vld [vmem:[#allocation5 + $0x9c8] sm:$0xff]
    %v501 = vld [vmem:[#allocation5 + $0x9d0] sm:$0xff]
    %v502 = vld [vmem:[#allocation5 + $0x9d8] sm:$0xff]
    %v503 = vld [vmem:[#allocation5 + $0x9e0] sm:$0xff]
    %v504 = vld [vmem:[#allocation5 + $0x9e8] sm:$0xff]
    %v505 = vld [vmem:[#allocation5 + $0x9f0] sm:$0xff]
    %v506 = vld [vmem:[#allocation5 + $0x9f8] sm:$0xff]
    %v507 = vld [vmem:[#allocation5 + $0xa00] sm:$0xff]
    %v508 = vld [vmem:[#allocation5 + $0xa08] sm:$0xff]
    %v509 = vld [vmem:[#allocation5 + $0xa10] sm:$0xff]
    %v510 = vld [vmem:[#allocation5 + $0xa18] sm:$0xff]
    %v511 = vld [vmem:[#allocation5 + $0xa20] sm:$0xff]
    %v512 = vld [vmem:[#allocation5 + $0xa28] sm:$0xff]
    %v513 = vld [vmem:[#allocation5 + $0xa30] sm:$0xff]
    %v514 = vld [vmem:[#allocation5 + $0xa38] sm:$0xff]
    %v515 = vld [vmem:[#allocation5 + $0xa40] sm:$0xff]
    %v516 = vld [vmem:[#allocation5 + $0xa48] sm:$0xff]
    %v517 = vld [vmem:[#allocation5 + $0xa50] sm:$0xff]
    %v518 = vld [vmem:[#allocation5 + $0xa58] sm:$0xff]
    %v519 = vld [vmem:[#allocation5 + $0xa60] sm:$0xff]
    %v520 = vld [vmem:[#allocation5 + $0xa68] sm:$0xff]
    %v521 = vld [vmem:[#allocation5 + $0xa70] sm:$0xff]
    %v522 = vld [vmem:[#allocation5 + $0xa78] sm:$0xff]
    %v523 = vld [vmem:[#allocation5 + $0xa80] sm:$0xff]
    %v524 = vld [vmem:[#allocation5 + $0xa88] sm:$0xff]
    %v525 = vld [vmem:[#allocation5 + $0xa90] sm:$0xff]
    %v526 = vld [vmem:[#allocation5 + $0xa98] sm:$0xff]
    %v527 = vld [vmem:[#allocation5 + $0xaa0] sm:$0xff]
    %v528 = vld [vmem:[#allocation5 + $0xaa8] sm:$0xff]
    %v529 = vld [vmem:[#allocation5 + $0xab0] sm:$0xff]
    %v530 = vld [vmem:[#allocation5 + $0xab8] sm:$0xff]
    %v531 = vld [vmem:[#allocation5 + $0xac0] sm:$0xff]
    %v532 = vld [vmem:[#allocation5 + $0xac8] sm:$0xff]
    %v533 = vld [vmem:[#allocation5 + $0xad0] sm:$0xff]
    %v534 = vld [vmem:[#allocation5 + $0xad8] sm:$0xff]
    %v535 = vld [vmem:[#allocation5 + $0xae0] sm:$0xff]
    %v536 = vld [vmem:[#allocation5 + $0xae8] sm:$0xff]
    %v537 = vld [vmem:[#allocation5 + $0xaf0] sm:$0xff]
    %v538 = vld [vmem:[#allocation5 + $0xaf8] sm:$0xff]
    %v539 = vld [vmem:[#allocation5 + $0xb00] sm:$0xff]
    %v540 = vld [vmem:[#allocation5 + $0xb08] sm:$0xff]
    %v541 = vld [vmem:[#allocation5 + $0xb10] sm:$0xff]
    %v542 = vld [vmem:[#allocation5 + $0xb18] sm:$0xff]
    %v543 = vld [vmem:[#allocation5 + $0xb20] sm:$0xff]
    %v544 = vld [vmem:[#allocation5 + $0xb28] sm:$0xff]
    %v545 = vld [vmem:[#allocation5 + $0xb30] sm:$0xff]
    %v546 = vld [vmem:[#allocation5 + $0xb38] sm:$0xff]
    %v547 = vld [vmem:[#allocation5 + $0xb40] sm:$0xff]
    %v548 = vld [vmem:[#allocation5 + $0xb48] sm:$0xff]
    %v549 = vld [vmem:[#allocation5 + $0xb50] sm:$0xff]
    %v550 = vld [vmem:[#allocation5 + $0xb58] sm:$0xff]
    %v551 = vld [vmem:[#allocation5 + $0xb60] sm:$0xff]
    %v552 = vld [vmem:[#allocation5 + $0xb68] sm:$0xff]
    %v553 = vld [vmem:[#allocation5 + $0xb70] sm:$0xff]
    %v554 = vld [vmem:[#allocation5 + $0xb78] sm:$0xff]
    %v555 = vld [vmem:[#allocation5 + $0xb80] sm:$0xff]
    %v556 = vld [vmem:[#allocation5 + $0xb88] sm:$0xff]
    %v557 = vld [vmem:[#allocation5 + $0xb90] sm:$0xff]
    %v558 = vld [vmem:[#allocation5 + $0xb98] sm:$0xff]
    %v559 = vld [vmem:[#allocation5 + $0xba0] sm:$0xff]
    %v560 = vld [vmem:[#allocation5 + $0xba8] sm:$0xff]
    %v561 = vld [vmem:[#allocation5 + $0xbb0] sm:$0xff]
    %v562 = vld [vmem:[#allocation5 + $0xbb8] sm:$0xff]
    %v563 = vld [vmem:[#allocation5 + $0xbc0] sm:$0xff]
    %v564 = vld [vmem:[#allocation5 + $0xbc8] sm:$0xff]
    %v565 = vld [vmem:[#allocation5 + $0xbd0] sm:$0xff]
    %v566 = vld [vmem:[#allocation5 + $0xbd8] sm:$0xff]
    %v567 = vld [vmem:[#allocation5 + $0xbe0] sm:$0xff]
    %v568 = vld [vmem:[#allocation5 + $0xbe8] sm:$0xff]
    %v569 = vld [vmem:[#allocation5 + $0xbf0] sm:$0xff]
    %v570 = vld [vmem:[#allocation5 + $0xbf8] sm:$0xff]
    %v571 = vld [vmem:[#allocation5 + $0xc00] sm:$0xff]
    %v572 = vld [vmem:[#allocation5 + $0xc08] sm:$0xff]
    %v573 = vld [vmem:[#allocation5 + $0xc10] sm:$0xff]
    %v574 = vld [vmem:[#allocation5 + $0xc18] sm:$0xff]
    %v575 = vld [vmem:[#allocation5 + $0xc20] sm:$0xff]
    %v576 = vld [vmem:[#allocation5 + $0xc28] sm:$0xff]
    %v577 = vld [vmem:[#allocation5 + $0xc30] sm:$0xff]
    %v578 = vld [vmem:[#allocation5 + $0xc38] sm:$0xff]
    %v579 = vld [vmem:[#allocation7] sm:$0xff]
    %v581 = vperm.slane %v579, 0
    %v582 = vperm.slane %v579, 1
    %v583 = vperm.slane %v579, 2
    %v584 = vperm.slane %v579, 3
    %v585 = vperm.slane %v579, 4
    %v586 = vperm.slane %v579, 5
    %v587 = vperm.slane %v579, 6
    %v588 = vperm.slane %v579, 7
    %v989 = vunpack.c.l.b16 %v187
    %v990 = vunpack.c.h.b16 %v187
    %v991 = vunpack.c.l.b16 %v188
    %v992 = vunpack.c.h.b16 %v188
    %v993 = vunpack.c.l.b16 %v189
    %v994 = vunpack.c.h.b16 %v189
    %v995 = vunpack.c.l.b16 %v190
    %v996 = vunpack.c.h.b16 %v190
    %v997 = vunpack.c.l.b16 %v191
    %v998 = vunpack.c.h.b16 %v191
    %v999 = vunpack.c.l.b16 %v192
    %v1000 = vunpack.c.h.b16 %v192
    %v1001 = vunpack.c.l.b16 %v193
    %v1002 = vunpack.c.h.b16 %v193
    %v1003 = vunpack.c.l.b16 %v194
    %v1004 = vunpack.c.h.b16 %v194
    %v1005 = vunpack.c.l.b16 %v195
    %v1006 = vunpack.c.h.b16 %v195
    %v1007 = vunpack.c.l.b16 %v196
    %v1008 = vunpack.c.h.b16 %v196
    %v1009 = vunpack.c.l.b16 %v197
    %v1010 = vunpack.c.h.b16 %v197
    %v1011 = vunpack.c.l.b16 %v198
    %v1012 = vunpack.c.h.b16 %v198
    %v1013 = vunpack.c.l.b16 %v199
    %v1014 = vunpack.c.h.b16 %v199
    %v1015 = vunpack.c.l.b16 %v200
    %v1016 = vunpack.c.h.b16 %v200
    %v1017 = vunpack.c.l.b16 %v201
    %v1018 = vunpack.c.h.b16 %v201
    %v1019 = vunpack.c.l.b16 %v202
    %v1020 = vunpack.c.h.b16 %v202
    %v1021 = vunpack.c.l.b16 %v203
    %v1022 = vunpack.c.h.b16 %v203
    %v1023 = vunpack.c.l.b16 %v204
    %v1024 = vunpack.c.h.b16 %v204
    %v1025 = vunpack.c.l.b16 %v205
    %v1026 = vunpack.c.h.b16 %v205
    %v1027 = vunpack.c.l.b16 %v206
    %v1028 = vunpack.c.h.b16 %v206
    %v1029 = vunpack.c.l.b16 %v207
    %v1030 = vunpack.c.h.b16 %v207
    %v1031 = vunpack.c.l.b16 %v208
    %v1032 = vunpack.c.h.b16 %v208
    %v1033 = vunpack.c.l.b16 %v209
    %v1034 = vunpack.c.h.b16 %v209
    %v1035 = vunpack.c.l.b16 %v210
    %v1036 = vunpack.c.h.b16 %v210
    %v1037 = vunpack.c.l.b16 %v211
    %v1038 = vunpack.c.h.b16 %v211
    %v1039 = vunpack.c.l.b16 %v212
    %v1040 = vunpack.c.h.b16 %v212
    %v1041 = vunpack.c.l.b16 %v213
    %v1042 = vunpack.c.h.b16 %v213
    %v1043 = vunpack.c.l.b16 %v214
    %v1044 = vunpack.c.h.b16 %v214
    %v1045 = vunpack.c.l.b16 %v215
    %v1046 = vunpack.c.h.b16 %v215
    %v1047 = vunpack.c.l.b16 %v216
    %v1048 = vunpack.c.h.b16 %v216
    %v1049 = vunpack.c.l.b16 %v217
    %v1050 = vunpack.c.h.b16 %v217
    %v1051 = vunpack.c.l.b16 %v218
    %v1052 = vunpack.c.h.b16 %v218
    %v1053 = vunpack.c.l.b16 %v219
    %v1054 = vunpack.c.h.b16 %v219
    %v1055 = vunpack.c.l.b16 %v220
    %v1056 = vunpack.c.h.b16 %v220
    %v1057 = vunpack.c.l.b16 %v221
    %v1058 = vunpack.c.h.b16 %v221
    %v1059 = vunpack.c.l.b16 %v222
    %v1060 = vunpack.c.h.b16 %v222
    %v1061 = vunpack.c.l.b16 %v223
    %v1062 = vunpack.c.h.b16 %v223
    %v1063 = vunpack.c.l.b16 %v224
    %v1064 = vunpack.c.h.b16 %v224
    %v1065 = vunpack.c.l.b16 %v225
    %v1066 = vunpack.c.h.b16 %v225
    %v1067 = vunpack.c.l.b16 %v226
    %v1068 = vunpack.c.h.b16 %v226
    %v1069 = vunpack.c.l.b16 %v227
    %v1070 = vunpack.c.h.b16 %v227
    %v1071 = vunpack.c.l.b16 %v228
    %v1072 = vunpack.c.h.b16 %v228
    %v1073 = vunpack.c.l.b16 %v229
    %v1074 = vunpack.c.h.b16 %v229
    %v1075 = vunpack.c.l.b16 %v230
    %v1076 = vunpack.c.h.b16 %v230
    %v1077 = vunpack.c.l.b16 %v231
    %v1078 = vunpack.c.h.b16 %v231
    %v1079 = vunpack.c.l.b16 %v232
    %v1080 = vunpack.c.h.b16 %v232
    %v1081 = vunpack.c.l.b16 %v233
    %v1082 = vunpack.c.h.b16 %v233
    %v1083 = vunpack.c.l.b16 %v234
    %v1084 = vunpack.c.h.b16 %v234
    %v1085 = vunpack.c.l.b16 %v235
    %v1086 = vunpack.c.h.b16 %v235
    %v1087 = vunpack.c.l.b16 %v236
    %v1088 = vunpack.c.h.b16 %v236
    %v1089 = vunpack.c.l.b16 %v237
    %v1090 = vunpack.c.h.b16 %v237
    %v1091 = vunpack.c.l.b16 %v238
    %v1092 = vunpack.c.h.b16 %v238
    %v1093 = vunpack.c.l.b16 %v239
    %v1094 = vunpack.c.h.b16 %v239
    %v1095 = vunpack.c.l.b16 %v240
    %v1096 = vunpack.c.h.b16 %v240
    %v1097 = vunpack.c.l.b16 %v241
    %v1098 = vunpack.c.h.b16 %v241
    %v1099 = vunpack.c.l.b16 %v242
    %v1100 = vunpack.c.h.b16 %v242
    %v1101 = vunpack.c.l.b16 %v243
    %v1102 = vunpack.c.h.b16 %v243
    %v1103 = vunpack.c.l.b16 %v244
    %v1104 = vunpack.c.h.b16 %v244
    %v1105 = vunpack.c.l.b16 %v245
    %v1106 = vunpack.c.h.b16 %v245
    %v1107 = vunpack.c.l.b16 %v246
    %v1108 = vunpack.c.h.b16 %v246
    %v1109 = vunpack.c.l.b16 %v247
    %v1110 = vunpack.c.h.b16 %v247
    %v1111 = vunpack.c.l.b16 %v248
    %v1112 = vunpack.c.h.b16 %v248
    %v1113 = vunpack.c.l.b16 %v249
    %v1114 = vunpack.c.h.b16 %v249
    %v1115 = vunpack.c.l.b16 %v250
    %v1116 = vunpack.c.h.b16 %v250
    %v1117 = vunpack.c.l.b16 %v251
    %v1118 = vunpack.c.h.b16 %v251
    %v1119 = vunpack.c.l.b16 %v252
    %v1120 = vunpack.c.h.b16 %v252
    %v1121 = vunpack.c.l.b16 %v253
    %v1122 = vunpack.c.h.b16 %v253
    %v1123 = vunpack.c.l.b16 %v254
    %v1124 = vunpack.c.h.b16 %v254
    %v1125 = vunpack.c.l.b16 %v255
    %v1126 = vunpack.c.h.b16 %v255
    %v1127 = vunpack.c.l.b16 %v256
    %v1128 = vunpack.c.h.b16 %v256
    %v1129 = vunpack.c.l.b16 %v257
    %v1130 = vunpack.c.h.b16 %v257
    %v1131 = vunpack.c.l.b16 %v258
    %v1132 = vunpack.c.h.b16 %v258
    %v1133 = vunpack.c.l.b16 %v259
    %v1134 = vunpack.c.h.b16 %v259
    %v1135 = vunpack.c.l.b16 %v260
    %v1136 = vunpack.c.h.b16 %v260
    %v1137 = vunpack.c.l.b16 %v261
    %v1138 = vunpack.c.h.b16 %v261
    %v1139 = vunpack.c.l.b16 %v262
    %v1140 = vunpack.c.h.b16 %v262
    %v1141 = vunpack.c.l.b16 %v263
    %v1142 = vunpack.c.h.b16 %v263
    %v1143 = vunpack.c.l.b16 %v264
    %v1144 = vunpack.c.h.b16 %v264
    %v1145 = vunpack.c.l.b16 %v265
    %v1146 = vunpack.c.h.b16 %v265
    %v1147 = vunpack.c.l.b16 %v266
    %v1148 = vunpack.c.h.b16 %v266
    %v1149 = vunpack.c.l.b16 %v267
    %v1150 = vunpack.c.h.b16 %v267
    %v1151 = vunpack.c.l.b16 %v268
    %v1152 = vunpack.c.h.b16 %v268
    %v1153 = vunpack.c.l.b16 %v269
    %v1154 = vunpack.c.h.b16 %v269
    %v1155 = vunpack.c.l.b16 %v270
    %v1156 = vunpack.c.h.b16 %v270
    %v1157 = vunpack.c.l.b16 %v271
    %v1158 = vunpack.c.h.b16 %v271
    %v1159 = vunpack.c.l.b16 %v272
    %v1160 = vunpack.c.h.b16 %v272
    %v1161 = vunpack.c.l.b16 %v273
    %v1162 = vunpack.c.h.b16 %v273
    %v1163 = vunpack.c.l.b16 %v274
    %v1164 = vunpack.c.h.b16 %v274
    %v1165 = vunpack.c.l.b16 %v275
    %v1166 = vunpack.c.h.b16 %v275
    %v1167 = vunpack.c.l.b16 %v276
    %v1168 = vunpack.c.h.b16 %v276
    %v1169 = vunpack.c.l.b16 %v277
    %v1170 = vunpack.c.h.b16 %v277
    %v1171 = vunpack.c.l.b16 %v278
    %v1172 = vunpack.c.h.b16 %v278
    %v1173 = vunpack.c.l.b16 %v279
    %v1174 = vunpack.c.h.b16 %v279
    %v1175 = vunpack.c.l.b16 %v280
    %v1176 = vunpack.c.h.b16 %v280
    %v1177 = vunpack.c.l.b16 %v281
    %v1178 = vunpack.c.h.b16 %v281
    %v1179 = vunpack.c.l.b16 %v282
    %v1180 = vunpack.c.h.b16 %v282
    %v1181 = vunpack.c.l.b16 %v283
    %v1182 = vunpack.c.h.b16 %v283
    %v1183 = vunpack.c.l.b16 %v284
    %v1184 = vunpack.c.h.b16 %v284
    %v1185 = vunpack.c.l.b16 %v285
    %v1186 = vunpack.c.h.b16 %v285
    %v1187 = vunpack.c.l.b16 %v286
    %v1188 = vunpack.c.h.b16 %v286
    %v1189 = vunpack.c.l.b16 %v287
    %v1190 = vunpack.c.h.b16 %v287
    %v1191 = vunpack.c.l.b16 %v288
    %v1192 = vunpack.c.h.b16 %v288
    %v1193 = vunpack.c.l.b16 %v289
    %v1194 = vunpack.c.h.b16 %v289
    %v1195 = vunpack.c.l.b16 %v290
    %v1196 = vunpack.c.h.b16 %v290
    %v1197 = vunpack.c.l.b16 %v291
    %v1198 = vunpack.c.h.b16 %v291
    %v1199 = vunpack.c.l.b16 %v292
    %v1200 = vunpack.c.h.b16 %v292
    %v1201 = vunpack.c.l.b16 %v293
    %v1202 = vunpack.c.h.b16 %v293
    %v1203 = vunpack.c.l.b16 %v294
    %v1204 = vunpack.c.h.b16 %v294
    %v1205 = vunpack.c.l.b16 %v295
    %v1206 = vunpack.c.h.b16 %v295
    %v1207 = vunpack.c.l.b16 %v296
    %v1208 = vunpack.c.h.b16 %v296
    %v1209 = vunpack.c.l.b16 %v297
    %v1210 = vunpack.c.h.b16 %v297
    %v1211 = vunpack.c.l.b16 %v298
    %v1212 = vunpack.c.h.b16 %v298
    %v1213 = vunpack.c.l.b16 %v299
    %v1214 = vunpack.c.h.b16 %v299
    %v1215 = vunpack.c.l.b16 %v300
    %v1216 = vunpack.c.h.b16 %v300
    %v1217 = vunpack.c.l.b16 %v301
    %v1218 = vunpack.c.h.b16 %v301
    %v1219 = vunpack.c.l.b16 %v302
    %v1220 = vunpack.c.h.b16 %v302
    %v1221 = vunpack.c.l.b16 %v303
    %v1222 = vunpack.c.h.b16 %v303
    %v1223 = vunpack.c.l.b16 %v304
    %v1224 = vunpack.c.h.b16 %v304
    %v1225 = vunpack.c.l.b16 %v305
    %v1226 = vunpack.c.h.b16 %v305
    %v1227 = vunpack.c.l.b16 %v306
    %v1228 = vunpack.c.h.b16 %v306
    %v1229 = vunpack.c.l.b16 %v307
    %v1230 = vunpack.c.h.b16 %v307
    %v1231 = vunpack.c.l.b16 %v308
    %v1232 = vunpack.c.h.b16 %v308
    %v1233 = vunpack.c.l.b16 %v309
    %v1234 = vunpack.c.h.b16 %v309
    %v1235 = vunpack.c.l.b16 %v310
    %v1236 = vunpack.c.h.b16 %v310
    %v1237 = vunpack.c.l.b16 %v311
    %v1238 = vunpack.c.h.b16 %v311
    %v1239 = vunpack.c.l.b16 %v312
    %v1240 = vunpack.c.h.b16 %v312
    %v1241 = vunpack.c.l.b16 %v313
    %v1242 = vunpack.c.h.b16 %v313
    %v1243 = vunpack.c.l.b16 %v314
    %v1244 = vunpack.c.h.b16 %v314
    %v1245 = vunpack.c.l.b16 %v315
    %v1246 = vunpack.c.h.b16 %v315
    %v1247 = vunpack.c.l.b16 %v316
    %v1248 = vunpack.c.h.b16 %v316
    %v1249 = vunpack.c.l.b16 %v317
    %v1250 = vunpack.c.h.b16 %v317
    %v1251 = vunpack.c.l.b16 %v318
    %v1252 = vunpack.c.h.b16 %v318
    %v1253 = vunpack.c.l.b16 %v319
    %v1254 = vunpack.c.h.b16 %v319
    %v1255 = vunpack.c.l.b16 %v320
    %v1256 = vunpack.c.h.b16 %v320
    %v1257 = vunpack.c.l.b16 %v321
    %v1258 = vunpack.c.h.b16 %v321
    %v1259 = vunpack.c.l.b16 %v322
    %v1260 = vunpack.c.h.b16 %v322
    %v1261 = vunpack.c.l.b16 %v323
    %v1262 = vunpack.c.h.b16 %v323
    %v1263 = vunpack.c.l.b16 %v324
    %v1264 = vunpack.c.h.b16 %v324
    %v1265 = vunpack.c.l.b16 %v325
    %v1266 = vunpack.c.h.b16 %v325
    %v1267 = vunpack.c.l.b16 %v326
    %v1268 = vunpack.c.h.b16 %v326
    %v1269 = vunpack.c.l.b16 %v327
    %v1270 = vunpack.c.h.b16 %v327
    %v1271 = vunpack.c.l.b16 %v328
    %v1272 = vunpack.c.h.b16 %v328
    %v1273 = vunpack.c.l.b16 %v329
    %v1274 = vunpack.c.h.b16 %v329
    %v1275 = vunpack.c.l.b16 %v330
    %v1276 = vunpack.c.h.b16 %v330
    %v1277 = vunpack.c.l.b16 %v331
    %v1278 = vunpack.c.h.b16 %v331
    %v1279 = vunpack.c.l.b16 %v332
    %v1280 = vunpack.c.h.b16 %v332
    %v1281 = vunpack.c.l.b16 %v333
    %v1282 = vunpack.c.h.b16 %v333
    %v1283 = vunpack.c.l.b16 %v334
    %v1284 = vunpack.c.h.b16 %v334
    %v1285 = vunpack.c.l.b16 %v335
    %v1286 = vunpack.c.h.b16 %v335
    %v1287 = vunpack.c.l.b16 %v336
    %v1288 = vunpack.c.h.b16 %v336
    %v1289 = vunpack.c.l.b16 %v337
    %v1290 = vunpack.c.h.b16 %v337
    %v1291 = vunpack.c.l.b16 %v338
    %v1292 = vunpack.c.h.b16 %v338
    %v1293 = vunpack.c.l.b16 %v339
    %v1294 = vunpack.c.h.b16 %v339
    %v1295 = vunpack.c.l.b16 %v340
    %v1296 = vunpack.c.h.b16 %v340
    %v1297 = vunpack.c.l.b16 %v341
    %v1298 = vunpack.c.h.b16 %v341
    %v1299 = vunpack.c.l.b16 %v342
    %v1300 = vunpack.c.h.b16 %v342
    %v1301 = vunpack.c.l.b16 %v343
    %v1302 = vunpack.c.h.b16 %v343
    %v1303 = vunpack.c.l.b16 %v344
    %v1304 = vunpack.c.h.b16 %v344
    %v1305 = vunpack.c.l.b16 %v345
    %v1306 = vunpack.c.h.b16 %v345
    %v1307 = vunpack.c.l.b16 %v346
    %v1308 = vunpack.c.h.b16 %v346
    %v1309 = vunpack.c.l.b16 %v347
    %v1310 = vunpack.c.h.b16 %v347
    %v1311 = vunpack.c.l.b16 %v348
    %v1312 = vunpack.c.h.b16 %v348
    %v1313 = vunpack.c.l.b16 %v349
    %v1314 = vunpack.c.h.b16 %v349
    %v1315 = vunpack.c.l.b16 %v350
    %v1316 = vunpack.c.h.b16 %v350
    %v1317 = vunpack.c.l.b16 %v351
    %v1318 = vunpack.c.h.b16 %v351
    %v1319 = vunpack.c.l.b16 %v352
    %v1320 = vunpack.c.h.b16 %v352
    %v1321 = vunpack.c.l.b16 %v353
    %v1322 = vunpack.c.h.b16 %v353
    %v1323 = vunpack.c.l.b16 %v354
    %v1324 = vunpack.c.h.b16 %v354
    %v1325 = vunpack.c.l.b16 %v355
    %v1326 = vunpack.c.h.b16 %v355
    %v1327 = vunpack.c.l.b16 %v356
    %v1328 = vunpack.c.h.b16 %v356
    %v1329 = vunpack.c.l.b16 %v357
    %v1330 = vunpack.c.h.b16 %v357
    %v1331 = vunpack.c.l.b16 %v358
    %v1332 = vunpack.c.h.b16 %v358
    %v1333 = vunpack.c.l.b16 %v359
    %v1334 = vunpack.c.h.b16 %v359
    %v1335 = vunpack.c.l.b16 %v360
    %v1336 = vunpack.c.h.b16 %v360
    %v1337 = vunpack.c.l.b16 %v361
    %v1338 = vunpack.c.h.b16 %v361
    %v1339 = vunpack.c.l.b16 %v362
    %v1340 = vunpack.c.h.b16 %v362
    %v1341 = vunpack.c.l.b16 %v363
    %v1342 = vunpack.c.h.b16 %v363
    %v1343 = vunpack.c.l.b16 %v364
    %v1344 = vunpack.c.h.b16 %v364
    %v1345 = vunpack.c.l.b16 %v365
    %v1346 = vunpack.c.h.b16 %v365
    %v1347 = vunpack.c.l.b16 %v366
    %v1348 = vunpack.c.h.b16 %v366
    %v1349 = vunpack.c.l.b16 %v367
    %v1350 = vunpack.c.h.b16 %v367
    %v1351 = vunpack.c.l.b16 %v368
    %v1352 = vunpack.c.h.b16 %v368
    %v1353 = vunpack.c.l.b16 %v369
    %v1354 = vunpack.c.h.b16 %v369
    %v1355 = vunpack.c.l.b16 %v370
    %v1356 = vunpack.c.h.b16 %v370
    %v1357 = vunpack.c.l.b16 %v371
    %v1358 = vunpack.c.h.b16 %v371
    %v1359 = vunpack.c.l.b16 %v372
    %v1360 = vunpack.c.h.b16 %v372
    %v1361 = vunpack.c.l.b16 %v373
    %v1362 = vunpack.c.h.b16 %v373
    %v1363 = vunpack.c.l.b16 %v374
    %v1364 = vunpack.c.h.b16 %v374
    %v1365 = vunpack.c.l.b16 %v375
    %v1366 = vunpack.c.h.b16 %v375
    %v1367 = vunpack.c.l.b16 %v376
    %v1368 = vunpack.c.h.b16 %v376
    %v1369 = vunpack.c.l.b16 %v377
    %v1370 = vunpack.c.h.b16 %v377
    %v1371 = vunpack.c.l.b16 %v378
    %v1372 = vunpack.c.h.b16 %v378
    %v1373 = vunpack.c.l.b16 %v379
    %v1374 = vunpack.c.h.b16 %v379
    %v1375 = vunpack.c.l.b16 %v380
    %v1376 = vunpack.c.h.b16 %v380
    %v1377 = vunpack.c.l.b16 %v381
    %v1378 = vunpack.c.h.b16 %v381
    %v1379 = vunpack.c.l.b16 %v382
    %v1380 = vunpack.c.h.b16 %v382
    %v1381 = vunpack.c.l.b16 %v383
    %v1382 = vunpack.c.h.b16 %v383
    %v1383 = vunpack.c.l.b16 %v384
    %v1384 = vunpack.c.h.b16 %v384
    %v1385 = vunpack.c.l.b16 %v385
    %v1386 = vunpack.c.h.b16 %v385
    %v1387 = vunpack.c.l.b16 %v386
    %v1388 = vunpack.c.h.b16 %v386
    %v1389 = vunpack.c.l.b16 %v387
    %v1390 = vunpack.c.h.b16 %v387
    %v1391 = vunpack.c.l.b16 %v388
    %v1392 = vunpack.c.h.b16 %v388
    %v1393 = vunpack.c.l.b16 %v389
    %v1394 = vunpack.c.h.b16 %v389
    %v1395 = vunpack.c.l.b16 %v390
    %v1396 = vunpack.c.h.b16 %v390
    %v1397 = vunpack.c.l.b16 %v391
    %v1398 = vunpack.c.h.b16 %v391
    %v1399 = vunpack.c.l.b16 %v392
    %v1400 = vunpack.c.h.b16 %v392
    %v1401 = vunpack.c.l.b16 %v393
    %v1402 = vunpack.c.h.b16 %v393
    %v1403 = vunpack.c.l.b16 %v394
    %v1404 = vunpack.c.h.b16 %v394
    %v1405 = vunpack.c.l.b16 %v395
    %v1406 = vunpack.c.h.b16 %v395
    %v1407 = vunpack.c.l.b16 %v396
    %v1408 = vunpack.c.h.b16 %v396
    %v1409 = vunpack.c.l.b16 %v397
    %v1410 = vunpack.c.h.b16 %v397
    %v1411 = vunpack.c.l.b16 %v398
    %v1412 = vunpack.c.h.b16 %v398
    %v1413 = vunpack.c.l.b16 %v399
    %v1414 = vunpack.c.h.b16 %v399
    %v1415 = vunpack.c.l.b16 %v400
    %v1416 = vunpack.c.h.b16 %v400
    %v1417 = vunpack.c.l.b16 %v401
    %v1418 = vunpack.c.h.b16 %v401
    %v1419 = vunpack.c.l.b16 %v402
    %v1420 = vunpack.c.h.b16 %v402
    %v1421 = vunpack.c.l.b16 %v403
    %v1422 = vunpack.c.h.b16 %v403
    %v1423 = vunpack.c.l.b16 %v404
    %v1424 = vunpack.c.h.b16 %v404
    %v1425 = vunpack.c.l.b16 %v405
    %v1426 = vunpack.c.h.b16 %v405
    %v1427 = vunpack.c.l.b16 %v406
    %v1428 = vunpack.c.h.b16 %v406
    %v1429 = vunpack.c.l.b16 %v407
    %v1430 = vunpack.c.h.b16 %v407
    %v1431 = vunpack.c.l.b16 %v408
    %v1432 = vunpack.c.h.b16 %v408
    %v1433 = vunpack.c.l.b16 %v409
    %v1434 = vunpack.c.h.b16 %v409
    %v1435 = vunpack.c.l.b16 %v410
    %v1436 = vunpack.c.h.b16 %v410
    %v1437 = vunpack.c.l.b16 %v411
    %v1438 = vunpack.c.h.b16 %v411
    %v1439 = vunpack.c.l.b16 %v412
    %v1440 = vunpack.c.h.b16 %v412
    %v1441 = vunpack.c.l.b16 %v413
    %v1442 = vunpack.c.h.b16 %v413
    %v1443 = vunpack.c.l.b16 %v414
    %v1444 = vunpack.c.h.b16 %v414
    %v1445 = vunpack.c.l.b16 %v415
    %v1446 = vunpack.c.h.b16 %v415
    %v1447 = vunpack.c.l.b16 %v416
    %v1448 = vunpack.c.h.b16 %v416
    %v1449 = vunpack.c.l.b16 %v417
    %v1450 = vunpack.c.h.b16 %v417
    %v1451 = vunpack.c.l.b16 %v418
    %v1452 = vunpack.c.h.b16 %v418
    %v1453 = vunpack.c.l.b16 %v419
    %v1454 = vunpack.c.h.b16 %v419
    %v1455 = vunpack.c.l.b16 %v420
    %v1456 = vunpack.c.h.b16 %v420
    %v1457 = vunpack.c.l.b16 %v421
    %v1458 = vunpack.c.h.b16 %v421
    %v1459 = vunpack.c.l.b16 %v422
    %v1460 = vunpack.c.h.b16 %v422
    %v1461 = vunpack.c.l.b16 %v423
    %v1462 = vunpack.c.h.b16 %v423
    %v1463 = vunpack.c.l.b16 %v424
    %v1464 = vunpack.c.h.b16 %v424
    %v1465 = vunpack.c.l.b16 %v425
    %v1466 = vunpack.c.h.b16 %v425
    %v1467 = vunpack.c.l.b16 %v426
    %v1468 = vunpack.c.h.b16 %v426
    %v1469 = vunpack.c.l.b16 %v427
    %v1470 = vunpack.c.h.b16 %v427
    %v1471 = vunpack.c.l.b16 %v428
    %v1472 = vunpack.c.h.b16 %v428
    %v1473 = vunpack.c.l.b16 %v429
    %v1474 = vunpack.c.h.b16 %v429
    %v1475 = vunpack.c.l.b16 %v430
    %v1476 = vunpack.c.h.b16 %v430
    %v1477 = vunpack.c.l.b16 %v431
    %v1478 = vunpack.c.h.b16 %v431
    %v1479 = vunpack.c.l.b16 %v432
    %v1480 = vunpack.c.h.b16 %v432
    %v1481 = vunpack.c.l.b16 %v433
    %v1482 = vunpack.c.h.b16 %v433
    %v1483 = vunpack.c.l.b16 %v434
    %v1484 = vunpack.c.h.b16 %v434
    %v1485 = vunpack.c.l.b16 %v435
    %v1486 = vunpack.c.h.b16 %v435
    %v1487 = vunpack.c.l.b16 %v436
    %v1488 = vunpack.c.h.b16 %v436
    %v1489 = vunpack.c.l.b16 %v437
    %v1490 = vunpack.c.h.b16 %v437
    %v1491 = vunpack.c.l.b16 %v438
    %v1492 = vunpack.c.h.b16 %v438
    %v1493 = vunpack.c.l.b16 %v439
    %v1494 = vunpack.c.h.b16 %v439
    %v1495 = vunpack.c.l.b16 %v440
    %v1496 = vunpack.c.h.b16 %v440
    %v1497 = vunpack.c.l.b16 %v441
    %v1498 = vunpack.c.h.b16 %v441
    %v1499 = vunpack.c.l.b16 %v442
    %v1500 = vunpack.c.h.b16 %v442
    %v1501 = vunpack.c.l.b16 %v443
    %v1502 = vunpack.c.h.b16 %v443
    %v1503 = vunpack.c.l.b16 %v444
    %v1504 = vunpack.c.h.b16 %v444
    %v1505 = vunpack.c.l.b16 %v445
    %v1506 = vunpack.c.h.b16 %v445
    %v1507 = vunpack.c.l.b16 %v446
    %v1508 = vunpack.c.h.b16 %v446
    %v1509 = vunpack.c.l.b16 %v447
    %v1510 = vunpack.c.h.b16 %v447
    %v1511 = vunpack.c.l.b16 %v448
    %v1512 = vunpack.c.h.b16 %v448
    %v1513 = vunpack.c.l.b16 %v449
    %v1514 = vunpack.c.h.b16 %v449
    %v1515 = vunpack.c.l.b16 %v450
    %v1516 = vunpack.c.h.b16 %v450
    %v1517 = vunpack.c.l.b16 %v451
    %v1518 = vunpack.c.h.b16 %v451
    %v1519 = vunpack.c.l.b16 %v452
    %v1520 = vunpack.c.h.b16 %v452
    %v1521 = vunpack.c.l.b16 %v453
    %v1522 = vunpack.c.h.b16 %v453
    %v1523 = vunpack.c.l.b16 %v454
    %v1524 = vunpack.c.h.b16 %v454
    %v1525 = vunpack.c.l.b16 %v455
    %v1526 = vunpack.c.h.b16 %v455
    %v1527 = vunpack.c.l.b16 %v456
    %v1528 = vunpack.c.h.b16 %v456
    %v1529 = vunpack.c.l.b16 %v457
    %v1530 = vunpack.c.h.b16 %v457
    %v1531 = vunpack.c.l.b16 %v458
    %v1532 = vunpack.c.h.b16 %v458
    %v1533 = vunpack.c.l.b16 %v459
    %v1534 = vunpack.c.h.b16 %v459
    %v1535 = vunpack.c.l.b16 %v460
    %v1536 = vunpack.c.h.b16 %v460
    %v1537 = vunpack.c.l.b16 %v461
    %v1538 = vunpack.c.h.b16 %v461
    %v1539 = vunpack.c.l.b16 %v462
    %v1540 = vunpack.c.h.b16 %v462
    %v1541 = vunpack.c.l.b16 %v463
    %v1542 = vunpack.c.h.b16 %v463
    %v1543 = vunpack.c.l.b16 %v464
    %v1544 = vunpack.c.h.b16 %v464
    %v1545 = vunpack.c.l.b16 %v465
    %v1546 = vunpack.c.h.b16 %v465
    %v1547 = vunpack.c.l.b16 %v466
    %v1548 = vunpack.c.h.b16 %v466
    %v1549 = vunpack.c.l.b16 %v467
    %v1550 = vunpack.c.h.b16 %v467
    %v1551 = vunpack.c.l.b16 %v468
    %v1552 = vunpack.c.h.b16 %v468
    %v1553 = vunpack.c.l.b16 %v469
    %v1554 = vunpack.c.h.b16 %v469
    %v1555 = vunpack.c.l.b16 %v470
    %v1556 = vunpack.c.h.b16 %v470
    %v1557 = vunpack.c.l.b16 %v471
    %v1558 = vunpack.c.h.b16 %v471
    %v1559 = vunpack.c.l.b16 %v472
    %v1560 = vunpack.c.h.b16 %v472
    %v1561 = vunpack.c.l.b16 %v473
    %v1562 = vunpack.c.h.b16 %v473
    %v1563 = vunpack.c.l.b16 %v474
    %v1564 = vunpack.c.h.b16 %v474
    %v1565 = vunpack.c.l.b16 %v475
    %v1566 = vunpack.c.h.b16 %v475
    %v1567 = vunpack.c.l.b16 %v476
    %v1568 = vunpack.c.h.b16 %v476
    %v1569 = vunpack.c.l.b16 %v477
    %v1570 = vunpack.c.h.b16 %v477
    %v1571 = vunpack.c.l.b16 %v478
    %v1572 = vunpack.c.h.b16 %v478
    %v1573 = vunpack.c.l.b16 %v479
    %v1574 = vunpack.c.h.b16 %v479
    %v1575 = vunpack.c.l.b16 %v480
    %v1576 = vunpack.c.h.b16 %v480
    %v1577 = vunpack.c.l.b16 %v481
    %v1578 = vunpack.c.h.b16 %v481
    %v1579 = vunpack.c.l.b16 %v482
    %v1580 = vunpack.c.h.b16 %v482
    %v1581 = vunpack.c.l.b16 %v483
    %v1582 = vunpack.c.h.b16 %v483
    %v1583 = vunpack.c.l.b16 %v484
    %v1584 = vunpack.c.h.b16 %v484
    %v1585 = vunpack.c.l.b16 %v485
    %v1586 = vunpack.c.h.b16 %v485
    %v1587 = vunpack.c.l.b16 %v486
    %v1588 = vunpack.c.h.b16 %v486
    %v1589 = vunpack.c.l.b16 %v487
    %v1590 = vunpack.c.h.b16 %v487
    %v1591 = vunpack.c.l.b16 %v488
    %v1592 = vunpack.c.h.b16 %v488
    %v1593 = vunpack.c.l.b16 %v489
    %v1594 = vunpack.c.h.b16 %v489
    %v1595 = vunpack.c.l.b16 %v490
    %v1596 = vunpack.c.h.b16 %v490
    %v1597 = vunpack.c.l.b16 %v491
    %v1598 = vunpack.c.h.b16 %v491
    %v1599 = vunpack.c.l.b16 %v492
    %v1600 = vunpack.c.h.b16 %v492
    %v1601 = vunpack.c.l.b16 %v493
    %v1602 = vunpack.c.h.b16 %v493
    %v1603 = vunpack.c.l.b16 %v494
    %v1604 = vunpack.c.h.b16 %v494
    %v1605 = vunpack.c.l.b16 %v495
    %v1606 = vunpack.c.h.b16 %v495
    %v1607 = vunpack.c.l.b16 %v496
    %v1608 = vunpack.c.h.b16 %v496
    %v1609 = vunpack.c.l.b16 %v497
    %v1610 = vunpack.c.h.b16 %v497
    %v1611 = vunpack.c.l.b16 %v498
    %v1612 = vunpack.c.h.b16 %v498
    %v1613 = vunpack.c.l.b16 %v499
    %v1614 = vunpack.c.h.b16 %v499
    %v1615 = vunpack.c.l.b16 %v500
    %v1616 = vunpack.c.h.b16 %v500
    %v1617 = vunpack.c.l.b16 %v501
    %v1618 = vunpack.c.h.b16 %v501
    %v1619 = vunpack.c.l.b16 %v502
    %v1620 = vunpack.c.h.b16 %v502
    %v1621 = vunpack.c.l.b16 %v503
    %v1622 = vunpack.c.h.b16 %v503
    %v1623 = vunpack.c.l.b16 %v504
    %v1624 = vunpack.c.h.b16 %v504
    %v1625 = vunpack.c.l.b16 %v505
    %v1626 = vunpack.c.h.b16 %v505
    %v1627 = vunpack.c.l.b16 %v506
    %v1628 = vunpack.c.h.b16 %v506
    %v1629 = vunpack.c.l.b16 %v507
    %v1630 = vunpack.c.h.b16 %v507
    %v1631 = vunpack.c.l.b16 %v508
    %v1632 = vunpack.c.h.b16 %v508
    %v1633 = vunpack.c.l.b16 %v509
    %v1634 = vunpack.c.h.b16 %v509
    %v1635 = vunpack.c.l.b16 %v510
    %v1636 = vunpack.c.h.b16 %v510
    %v1637 = vunpack.c.l.b16 %v511
    %v1638 = vunpack.c.h.b16 %v511
    %v1639 = vunpack.c.l.b16 %v512
    %v1640 = vunpack.c.h.b16 %v512
    %v1641 = vunpack.c.l.b16 %v513
    %v1642 = vunpack.c.h.b16 %v513
    %v1643 = vunpack.c.l.b16 %v514
    %v1644 = vunpack.c.h.b16 %v514
    %v1645 = vunpack.c.l.b16 %v515
    %v1646 = vunpack.c.h.b16 %v515
    %v1647 = vunpack.c.l.b16 %v516
    %v1648 = vunpack.c.h.b16 %v516
    %v1649 = vunpack.c.l.b16 %v517
    %v1650 = vunpack.c.h.b16 %v517
    %v1651 = vunpack.c.l.b16 %v518
    %v1652 = vunpack.c.h.b16 %v518
    %v1653 = vunpack.c.l.b16 %v519
    %v1654 = vunpack.c.h.b16 %v519
    %v1655 = vunpack.c.l.b16 %v520
    %v1656 = vunpack.c.h.b16 %v520
    %v1657 = vunpack.c.l.b16 %v521
    %v1658 = vunpack.c.h.b16 %v521
    %v1659 = vunpack.c.l.b16 %v522
    %v1660 = vunpack.c.h.b16 %v522
    %v1661 = vunpack.c.l.b16 %v523
    %v1662 = vunpack.c.h.b16 %v523
    %v1663 = vunpack.c.l.b16 %v524
    %v1664 = vunpack.c.h.b16 %v524
    %v1665 = vunpack.c.l.b16 %v525
    %v1666 = vunpack.c.h.b16 %v525
    %v1667 = vunpack.c.l.b16 %v526
    %v1668 = vunpack.c.h.b16 %v526
    %v1669 = vunpack.c.l.b16 %v527
    %v1670 = vunpack.c.h.b16 %v527
    %v1671 = vunpack.c.l.b16 %v528
    %v1672 = vunpack.c.h.b16 %v528
    %v1673 = vunpack.c.l.b16 %v529
    %v1674 = vunpack.c.h.b16 %v529
    %v1675 = vunpack.c.l.b16 %v530
    %v1676 = vunpack.c.h.b16 %v530
    %v1677 = vunpack.c.l.b16 %v531
    %v1678 = vunpack.c.h.b16 %v531
    %v1679 = vunpack.c.l.b16 %v532
    %v1680 = vunpack.c.h.b16 %v532
    %v1681 = vunpack.c.l.b16 %v533
    %v1682 = vunpack.c.h.b16 %v533
    %v1683 = vunpack.c.l.b16 %v534
    %v1684 = vunpack.c.h.b16 %v534
    %v1685 = vunpack.c.l.b16 %v535
    %v1686 = vunpack.c.h.b16 %v535
    %v1687 = vunpack.c.l.b16 %v536
    %v1688 = vunpack.c.h.b16 %v536
    %v1689 = vunpack.c.l.b16 %v537
    %v1690 = vunpack.c.h.b16 %v537
    %v1691 = vunpack.c.l.b16 %v538
    %v1692 = vunpack.c.h.b16 %v538
    %v1693 = vunpack.c.l.b16 %v539
    %v1694 = vunpack.c.h.b16 %v539
    %v1695 = vunpack.c.l.b16 %v540
    %v1696 = vunpack.c.h.b16 %v540
    %v1697 = vunpack.c.l.b16 %v541
    %v1698 = vunpack.c.h.b16 %v541
    %v1699 = vunpack.c.l.b16 %v542
    %v1700 = vunpack.c.h.b16 %v542
    %v1701 = vunpack.c.l.b16 %v543
    %v1702 = vunpack.c.h.b16 %v543
    %v1703 = vunpack.c.l.b16 %v544
    %v1704 = vunpack.c.h.b16 %v544
    %v1705 = vunpack.c.l.b16 %v545
    %v1706 = vunpack.c.h.b16 %v545
    %v1707 = vunpack.c.l.b16 %v546
    %v1708 = vunpack.c.h.b16 %v546
    %v1709 = vunpack.c.l.b16 %v547
    %v1710 = vunpack.c.h.b16 %v547
    %v1711 = vunpack.c.l.b16 %v548
    %v1712 = vunpack.c.h.b16 %v548
    %v1713 = vunpack.c.l.b16 %v549
    %v1714 = vunpack.c.h.b16 %v549
    %v1715 = vunpack.c.l.b16 %v550
    %v1716 = vunpack.c.h.b16 %v550
    %v1717 = vunpack.c.l.b16 %v551
    %v1718 = vunpack.c.h.b16 %v551
    %v1719 = vunpack.c.l.b16 %v552
    %v1720 = vunpack.c.h.b16 %v552
    %v1721 = vunpack.c.l.b16 %v553
    %v1722 = vunpack.c.h.b16 %v553
    %v1723 = vunpack.c.l.b16 %v554
    %v1724 = vunpack.c.h.b16 %v554
    %v1725 = vunpack.c.l.b16 %v555
    %v1726 = vunpack.c.h.b16 %v555
    %v1727 = vunpack.c.l.b16 %v556
    %v1728 = vunpack.c.h.b16 %v556
    %v1729 = vunpack.c.l.b16 %v557
    %v1730 = vunpack.c.h.b16 %v557
    %v1731 = vunpack.c.l.b16 %v558
    %v1732 = vunpack.c.h.b16 %v558
    %v1733 = vunpack.c.l.b16 %v559
    %v1734 = vunpack.c.h.b16 %v559
    %v1735 = vunpack.c.l.b16 %v560
    %v1736 = vunpack.c.h.b16 %v560
    %v1737 = vunpack.c.l.b16 %v561
    %v1738 = vunpack.c.h.b16 %v561
    %v1739 = vunpack.c.l.b16 %v562
    %v1740 = vunpack.c.h.b16 %v562
    %v1741 = vunpack.c.l.b16 %v563
    %v1742 = vunpack.c.h.b16 %v563
    %v1743 = vunpack.c.l.b16 %v564
    %v1744 = vunpack.c.h.b16 %v564
    %v1745 = vunpack.c.l.b16 %v565
    %v1746 = vunpack.c.h.b16 %v565
    %v1747 = vunpack.c.l.b16 %v566
    %v1748 = vunpack.c.h.b16 %v566
    %v1749 = vunpack.c.l.b16 %v567
    %v1750 = vunpack.c.h.b16 %v567
    %v1751 = vunpack.c.l.b16 %v568
    %v1752 = vunpack.c.h.b16 %v568
    %v1753 = vunpack.c.l.b16 %v569
    %v1754 = vunpack.c.h.b16 %v569
    %v1755 = vunpack.c.l.b16 %v570
    %v1756 = vunpack.c.h.b16 %v570
    %v1757 = vunpack.c.l.b16 %v571
    %v1758 = vunpack.c.h.b16 %v571
    %v1759 = vunpack.c.l.b16 %v572
    %v1760 = vunpack.c.h.b16 %v572
    %v1761 = vunpack.c.l.b16 %v573
    %v1762 = vunpack.c.h.b16 %v573
    %v1763 = vunpack.c.l.b16 %v574
    %v1764 = vunpack.c.h.b16 %v574
    %v1765 = vunpack.c.l.b16 %v575
    %v1766 = vunpack.c.h.b16 %v575
    %v1767 = vunpack.c.l.b16 %v576
    %v1768 = vunpack.c.h.b16 %v576
    %v1769 = vunpack.c.l.b16 %v577
    %v1770 = vunpack.c.h.b16 %v577
    %v1771 = vunpack.c.l.b16 %v578
    %v1772 = vunpack.c.h.b16 %v578
    %v1773 = vpack.c.b16 %v997, %v989
    %v1774 = vpack.c.b16 %v998, %v990
    %v1775 = vpack.c.b16 %v999, %v991
    %v1776 = vpack.c.b16 %v1000, %v992
    %v1777 = vpack.c.b16 %v1001, %v993
    %v1778 = vpack.c.b16 %v1002, %v994
    %v1779 = vpack.c.b16 %v1003, %v995
    %v1780 = vpack.c.b16 %v1004, %v996
    %v1781 = vpack.c.b16 %v1013, %v1005
    %v1782 = vpack.c.b16 %v1014, %v1006
    %v1783 = vpack.c.b16 %v1015, %v1007
    %v1784 = vpack.c.b16 %v1016, %v1008
    %v1785 = vpack.c.b16 %v1017, %v1009
    %v1786 = vpack.c.b16 %v1018, %v1010
    %v1787 = vpack.c.b16 %v1019, %v1011
    %v1788 = vpack.c.b16 %v1020, %v1012
    %v1789 = vpack.c.b16 %v1029, %v1021
    %v1790 = vpack.c.b16 %v1030, %v1022
    %v1791 = vpack.c.b16 %v1031, %v1023
    %v1792 = vpack.c.b16 %v1032, %v1024
    %v1793 = vpack.c.b16 %v1033, %v1025
    %v1794 = vpack.c.b16 %v1034, %v1026
    %v1795 = vpack.c.b16 %v1035, %v1027
    %v1796 = vpack.c.b16 %v1036, %v1028
    %v1797 = vpack.c.b16 %v1045, %v1037
    %v1798 = vpack.c.b16 %v1046, %v1038
    %v1799 = vpack.c.b16 %v1047, %v1039
    %v1800 = vpack.c.b16 %v1048, %v1040
    %v1801 = vpack.c.b16 %v1049, %v1041
    %v1802 = vpack.c.b16 %v1050, %v1042
    %v1803 = vpack.c.b16 %v1051, %v1043
    %v1804 = vpack.c.b16 %v1052, %v1044
    %v1805 = vpack.c.b16 %v1061, %v1053
    %v1806 = vpack.c.b16 %v1062, %v1054
    %v1807 = vpack.c.b16 %v1063, %v1055
    %v1808 = vpack.c.b16 %v1064, %v1056
    %v1809 = vpack.c.b16 %v1065, %v1057
    %v1810 = vpack.c.b16 %v1066, %v1058
    %v1811 = vpack.c.b16 %v1067, %v1059
    %v1812 = vpack.c.b16 %v1068, %v1060
    %v1813 = vpack.c.b16 %v1077, %v1069
    %v1814 = vpack.c.b16 %v1078, %v1070
    %v1815 = vpack.c.b16 %v1079, %v1071
    %v1816 = vpack.c.b16 %v1080, %v1072
    %v1817 = vpack.c.b16 %v1081, %v1073
    %v1818 = vpack.c.b16 %v1082, %v1074
    %v1819 = vpack.c.b16 %v1083, %v1075
    %v1820 = vpack.c.b16 %v1084, %v1076
    %v1821 = vpack.c.b16 %v1093, %v1085
    %v1822 = vpack.c.b16 %v1094, %v1086
    %v1823 = vpack.c.b16 %v1095, %v1087
    %v1824 = vpack.c.b16 %v1096, %v1088
    %v1825 = vpack.c.b16 %v1097, %v1089
    %v1826 = vpack.c.b16 %v1098, %v1090
    %v1827 = vpack.c.b16 %v1099, %v1091
    %v1828 = vpack.c.b16 %v1100, %v1092
    %v1829 = vpack.c.b16 %v1109, %v1101
    %v1830 = vpack.c.b16 %v1110, %v1102
    %v1831 = vpack.c.b16 %v1111, %v1103
    %v1832 = vpack.c.b16 %v1112, %v1104
    %v1833 = vpack.c.b16 %v1113, %v1105
    %v1834 = vpack.c.b16 %v1114, %v1106
    %v1835 = vpack.c.b16 %v1115, %v1107
    %v1836 = vpack.c.b16 %v1116, %v1108
    %v1837 = vpack.c.b16 %v1125, %v1117
    %v1838 = vpack.c.b16 %v1126, %v1118
    %v1839 = vpack.c.b16 %v1127, %v1119
    %v1840 = vpack.c.b16 %v1128, %v1120
    %v1841 = vpack.c.b16 %v1129, %v1121
    %v1842 = vpack.c.b16 %v1130, %v1122
    %v1843 = vpack.c.b16 %v1131, %v1123
    %v1844 = vpack.c.b16 %v1132, %v1124
    %v1845 = vpack.c.b16 %v1141, %v1133
    %v1846 = vpack.c.b16 %v1142, %v1134
    %v1847 = vpack.c.b16 %v1143, %v1135
    %v1848 = vpack.c.b16 %v1144, %v1136
    %v1849 = vpack.c.b16 %v1145, %v1137
    %v1850 = vpack.c.b16 %v1146, %v1138
    %v1851 = vpack.c.b16 %v1147, %v1139
    %v1852 = vpack.c.b16 %v1148, %v1140
    %v1853 = vpack.c.b16 %v1157, %v1149
    %v1854 = vpack.c.b16 %v1158, %v1150
    %v1855 = vpack.c.b16 %v1159, %v1151
    %v1856 = vpack.c.b16 %v1160, %v1152
    %v1857 = vpack.c.b16 %v1161, %v1153
    %v1858 = vpack.c.b16 %v1162, %v1154
    %v1859 = vpack.c.b16 %v1163, %v1155
    %v1860 = vpack.c.b16 %v1164, %v1156
    %v1861 = vpack.c.b16 %v1173, %v1165
    %v1862 = vpack.c.b16 %v1174, %v1166
    %v1863 = vpack.c.b16 %v1175, %v1167
    %v1864 = vpack.c.b16 %v1176, %v1168
    %v1865 = vpack.c.b16 %v1177, %v1169
    %v1866 = vpack.c.b16 %v1178, %v1170
    %v1867 = vpack.c.b16 %v1179, %v1171
    %v1868 = vpack.c.b16 %v1180, %v1172
    %v1869 = vpack.c.b16 %v1189, %v1181
    %v1870 = vpack.c.b16 %v1190, %v1182
    %v1871 = vpack.c.b16 %v1191, %v1183
    %v1872 = vpack.c.b16 %v1192, %v1184
    %v1873 = vpack.c.b16 %v1193, %v1185
    %v1874 = vpack.c.b16 %v1194, %v1186
    %v1875 = vpack.c.b16 %v1195, %v1187
    %v1876 = vpack.c.b16 %v1196, %v1188
    %v1877 = vpack.c.b16 %v1205, %v1197
    %v1878 = vpack.c.b16 %v1206, %v1198
    %v1879 = vpack.c.b16 %v1207, %v1199
    %v1880 = vpack.c.b16 %v1208, %v1200
    %v1881 = vpack.c.b16 %v1209, %v1201
    %v1882 = vpack.c.b16 %v1210, %v1202
    %v1883 = vpack.c.b16 %v1211, %v1203
    %v1884 = vpack.c.b16 %v1212, %v1204
    %v1885 = vpack.c.b16 %v1221, %v1213
    %v1886 = vpack.c.b16 %v1222, %v1214
    %v1887 = vpack.c.b16 %v1223, %v1215
    %v1888 = vpack.c.b16 %v1224, %v1216
    %v1889 = vpack.c.b16 %v1225, %v1217
    %v1890 = vpack.c.b16 %v1226, %v1218
    %v1891 = vpack.c.b16 %v1227, %v1219
    %v1892 = vpack.c.b16 %v1228, %v1220
    %v1893 = vpack.c.b16 %v1237, %v1229
    %v1894 = vpack.c.b16 %v1238, %v1230
    %v1895 = vpack.c.b16 %v1239, %v1231
    %v1896 = vpack.c.b16 %v1240, %v1232
    %v1897 = vpack.c.b16 %v1241, %v1233
    %v1898 = vpack.c.b16 %v1242, %v1234
    %v1899 = vpack.c.b16 %v1243, %v1235
    %v1900 = vpack.c.b16 %v1244, %v1236
    %v1901 = vpack.c.b16 %v1253, %v1245
    %v1902 = vpack.c.b16 %v1254, %v1246
    %v1903 = vpack.c.b16 %v1255, %v1247
    %v1904 = vpack.c.b16 %v1256, %v1248
    %v1905 = vpack.c.b16 %v1257, %v1249
    %v1906 = vpack.c.b16 %v1258, %v1250
    %v1907 = vpack.c.b16 %v1259, %v1251
    %v1908 = vpack.c.b16 %v1260, %v1252
    %v1909 = vpack.c.b16 %v1269, %v1261
    %v1910 = vpack.c.b16 %v1270, %v1262
    %v1911 = vpack.c.b16 %v1271, %v1263
    %v1912 = vpack.c.b16 %v1272, %v1264
    %v1913 = vpack.c.b16 %v1273, %v1265
    %v1914 = vpack.c.b16 %v1274, %v1266
    %v1915 = vpack.c.b16 %v1275, %v1267
    %v1916 = vpack.c.b16 %v1276, %v1268
    %v1917 = vpack.c.b16 %v1285, %v1277
    %v1918 = vpack.c.b16 %v1286, %v1278
    %v1919 = vpack.c.b16 %v1287, %v1279
    %v1920 = vpack.c.b16 %v1288, %v1280
    %v1921 = vpack.c.b16 %v1289, %v1281
    %v1922 = vpack.c.b16 %v1290, %v1282
    %v1923 = vpack.c.b16 %v1291, %v1283
    %v1924 = vpack.c.b16 %v1292, %v1284
    %v1925 = vpack.c.b16 %v1301, %v1293
    %v1926 = vpack.c.b16 %v1302, %v1294
    %v1927 = vpack.c.b16 %v1303, %v1295
    %v1928 = vpack.c.b16 %v1304, %v1296
    %v1929 = vpack.c.b16 %v1305, %v1297
    %v1930 = vpack.c.b16 %v1306, %v1298
    %v1931 = vpack.c.b16 %v1307, %v1299
    %v1932 = vpack.c.b16 %v1308, %v1300
    %v1933 = vpack.c.b16 %v1317, %v1309
    %v1934 = vpack.c.b16 %v1318, %v1310
    %v1935 = vpack.c.b16 %v1319, %v1311
    %v1936 = vpack.c.b16 %v1320, %v1312
    %v1937 = vpack.c.b16 %v1321, %v1313
    %v1938 = vpack.c.b16 %v1322, %v1314
    %v1939 = vpack.c.b16 %v1323, %v1315
    %v1940 = vpack.c.b16 %v1324, %v1316
    %v1941 = vpack.c.b16 %v1333, %v1325
    %v1942 = vpack.c.b16 %v1334, %v1326
    %v1943 = vpack.c.b16 %v1335, %v1327
    %v1944 = vpack.c.b16 %v1336, %v1328
    %v1945 = vpack.c.b16 %v1337, %v1329
    %v1946 = vpack.c.b16 %v1338, %v1330
    %v1947 = vpack.c.b16 %v1339, %v1331
    %v1948 = vpack.c.b16 %v1340, %v1332
    %v1949 = vpack.c.b16 %v1349, %v1341
    %v1950 = vpack.c.b16 %v1350, %v1342
    %v1951 = vpack.c.b16 %v1351, %v1343
    %v1952 = vpack.c.b16 %v1352, %v1344
    %v1953 = vpack.c.b16 %v1353, %v1345
    %v1954 = vpack.c.b16 %v1354, %v1346
    %v1955 = vpack.c.b16 %v1355, %v1347
    %v1956 = vpack.c.b16 %v1356, %v1348
    %v1957 = vpack.c.b16 %v1365, %v1357
    %v1958 = vpack.c.b16 %v1366, %v1358
    %v1959 = vpack.c.b16 %v1367, %v1359
    %v1960 = vpack.c.b16 %v1368, %v1360
    %v1961 = vpack.c.b16 %v1369, %v1361
    %v1962 = vpack.c.b16 %v1370, %v1362
    %v1963 = vpack.c.b16 %v1371, %v1363
    %v1964 = vpack.c.b16 %v1372, %v1364
    %v1965 = vpack.c.b16 %v1381, %v1373
    %v1966 = vpack.c.b16 %v1382, %v1374
    %v1967 = vpack.c.b16 %v1383, %v1375
    %v1968 = vpack.c.b16 %v1384, %v1376
    %v1969 = vpack.c.b16 %v1385, %v1377
    %v1970 = vpack.c.b16 %v1386, %v1378
    %v1971 = vpack.c.b16 %v1387, %v1379
    %v1972 = vpack.c.b16 %v1388, %v1380
    %v1973 = vpack.c.b16 %v1397, %v1389
    %v1974 = vpack.c.b16 %v1398, %v1390
    %v1975 = vpack.c.b16 %v1399, %v1391
    %v1976 = vpack.c.b16 %v1400, %v1392
    %v1977 = vpack.c.b16 %v1401, %v1393
    %v1978 = vpack.c.b16 %v1402, %v1394
    %v1979 = vpack.c.b16 %v1403, %v1395
    %v1980 = vpack.c.b16 %v1404, %v1396
    %v1981 = vpack.c.b16 %v1413, %v1405
    %v1982 = vpack.c.b16 %v1414, %v1406
    %v1983 = vpack.c.b16 %v1415, %v1407
    %v1984 = vpack.c.b16 %v1416, %v1408
    %v1985 = vpack.c.b16 %v1417, %v1409
    %v1986 = vpack.c.b16 %v1418, %v1410
    %v1987 = vpack.c.b16 %v1419, %v1411
    %v1988 = vpack.c.b16 %v1420, %v1412
    %v1989 = vpack.c.b16 %v1429, %v1421
    %v1990 = vpack.c.b16 %v1430, %v1422
    %v1991 = vpack.c.b16 %v1431, %v1423
    %v1992 = vpack.c.b16 %v1432, %v1424
    %v1993 = vpack.c.b16 %v1433, %v1425
    %v1994 = vpack.c.b16 %v1434, %v1426
    %v1995 = vpack.c.b16 %v1435, %v1427
    %v1996 = vpack.c.b16 %v1436, %v1428
    %v1997 = vpack.c.b16 %v1445, %v1437
    %v1998 = vpack.c.b16 %v1446, %v1438
    %v1999 = vpack.c.b16 %v1447, %v1439
    %v2000 = vpack.c.b16 %v1448, %v1440
    %v2001 = vpack.c.b16 %v1449, %v1441
    %v2002 = vpack.c.b16 %v1450, %v1442
    %v2003 = vpack.c.b16 %v1451, %v1443
    %v2004 = vpack.c.b16 %v1452, %v1444
    %v2005 = vpack.c.b16 %v1461, %v1453
    %v2006 = vpack.c.b16 %v1462, %v1454
    %v2007 = vpack.c.b16 %v1463, %v1455
    %v2008 = vpack.c.b16 %v1464, %v1456
    %v2009 = vpack.c.b16 %v1465, %v1457
    %v2010 = vpack.c.b16 %v1466, %v1458
    %v2011 = vpack.c.b16 %v1467, %v1459
    %v2012 = vpack.c.b16 %v1468, %v1460
    %v2013 = vpack.c.b16 %v1477, %v1469
    %v2014 = vpack.c.b16 %v1478, %v1470
    %v2015 = vpack.c.b16 %v1479, %v1471
    %v2016 = vpack.c.b16 %v1480, %v1472
    %v2017 = vpack.c.b16 %v1481, %v1473
    %v2018 = vpack.c.b16 %v1482, %v1474
    %v2019 = vpack.c.b16 %v1483, %v1475
    %v2020 = vpack.c.b16 %v1484, %v1476
    %v2021 = vpack.c.b16 %v1493, %v1485
    %v2022 = vpack.c.b16 %v1494, %v1486
    %v2023 = vpack.c.b16 %v1495, %v1487
    %v2024 = vpack.c.b16 %v1496, %v1488
    %v2025 = vpack.c.b16 %v1497, %v1489
    %v2026 = vpack.c.b16 %v1498, %v1490
    %v2027 = vpack.c.b16 %v1499, %v1491
    %v2028 = vpack.c.b16 %v1500, %v1492
    %v2029 = vpack.c.b16 %v1509, %v1501
    %v2030 = vpack.c.b16 %v1510, %v1502
    %v2031 = vpack.c.b16 %v1511, %v1503
    %v2032 = vpack.c.b16 %v1512, %v1504
    %v2033 = vpack.c.b16 %v1513, %v1505
    %v2034 = vpack.c.b16 %v1514, %v1506
    %v2035 = vpack.c.b16 %v1515, %v1507
    %v2036 = vpack.c.b16 %v1516, %v1508
    %v2037 = vpack.c.b16 %v1525, %v1517
    %v2038 = vpack.c.b16 %v1526, %v1518
    %v2039 = vpack.c.b16 %v1527, %v1519
    %v2040 = vpack.c.b16 %v1528, %v1520
    %v2041 = vpack.c.b16 %v1529, %v1521
    %v2042 = vpack.c.b16 %v1530, %v1522
    %v2043 = vpack.c.b16 %v1531, %v1523
    %v2044 = vpack.c.b16 %v1532, %v1524
    %v2045 = vpack.c.b16 %v1541, %v1533
    %v2046 = vpack.c.b16 %v1542, %v1534
    %v2047 = vpack.c.b16 %v1543, %v1535
    %v2048 = vpack.c.b16 %v1544, %v1536
    %v2049 = vpack.c.b16 %v1545, %v1537
    %v2050 = vpack.c.b16 %v1546, %v1538
    %v2051 = vpack.c.b16 %v1547, %v1539
    %v2052 = vpack.c.b16 %v1548, %v1540
    %v2053 = vpack.c.b16 %v1557, %v1549
    %v2054 = vpack.c.b16 %v1558, %v1550
    %v2055 = vpack.c.b16 %v1559, %v1551
    %v2056 = vpack.c.b16 %v1560, %v1552
    %v2057 = vpack.c.b16 %v1561, %v1553
    %v2058 = vpack.c.b16 %v1562, %v1554
    %v2059 = vpack.c.b16 %v1563, %v1555
    %v2060 = vpack.c.b16 %v1564, %v1556
    %v2061 = vpack.c.b16 %v1573, %v1565
    %v2062 = vpack.c.b16 %v1574, %v1566
    %v2063 = vpack.c.b16 %v1575, %v1567
    %v2064 = vpack.c.b16 %v1576, %v1568
    %v2065 = vpack.c.b16 %v1577, %v1569
    %v2066 = vpack.c.b16 %v1578, %v1570
    %v2067 = vpack.c.b16 %v1579, %v1571
    %v2068 = vpack.c.b16 %v1580, %v1572
    %v2069 = vpack.c.b16 %v1589, %v1581
    %v2070 = vpack.c.b16 %v1590, %v1582
    %v2071 = vpack.c.b16 %v1591, %v1583
    %v2072 = vpack.c.b16 %v1592, %v1584
    %v2073 = vpack.c.b16 %v1593, %v1585
    %v2074 = vpack.c.b16 %v1594, %v1586
    %v2075 = vpack.c.b16 %v1595, %v1587
    %v2076 = vpack.c.b16 %v1596, %v1588
    %v2077 = vpack.c.b16 %v1605, %v1597
    %v2078 = vpack.c.b16 %v1606, %v1598
    %v2079 = vpack.c.b16 %v1607, %v1599
    %v2080 = vpack.c.b16 %v1608, %v1600
    %v2081 = vpack.c.b16 %v1609, %v1601
    %v2082 = vpack.c.b16 %v1610, %v1602
    %v2083 = vpack.c.b16 %v1611, %v1603
    %v2084 = vpack.c.b16 %v1612, %v1604
    %v2085 = vpack.c.b16 %v1621, %v1613
    %v2086 = vpack.c.b16 %v1622, %v1614
    %v2087 = vpack.c.b16 %v1623, %v1615
    %v2088 = vpack.c.b16 %v1624, %v1616
    %v2089 = vpack.c.b16 %v1625, %v1617
    %v2090 = vpack.c.b16 %v1626, %v1618
    %v2091 = vpack.c.b16 %v1627, %v1619
    %v2092 = vpack.c.b16 %v1628, %v1620
    %v2093 = vpack.c.b16 %v1637, %v1629
    %v2094 = vpack.c.b16 %v1638, %v1630
    %v2095 = vpack.c.b16 %v1639, %v1631
    %v2096 = vpack.c.b16 %v1640, %v1632
    %v2097 = vpack.c.b16 %v1641, %v1633
    %v2098 = vpack.c.b16 %v1642, %v1634
    %v2099 = vpack.c.b16 %v1643, %v1635
    %v2100 = vpack.c.b16 %v1644, %v1636
    %v2101 = vpack.c.b16 %v1653, %v1645
    %v2102 = vpack.c.b16 %v1654, %v1646
    %v2103 = vpack.c.b16 %v1655, %v1647
    %v2104 = vpack.c.b16 %v1656, %v1648
    %v2105 = vpack.c.b16 %v1657, %v1649
    %v2106 = vpack.c.b16 %v1658, %v1650
    %v2107 = vpack.c.b16 %v1659, %v1651
    %v2108 = vpack.c.b16 %v1660, %v1652
    %v2109 = vpack.c.b16 %v1669, %v1661
    %v2110 = vpack.c.b16 %v1670, %v1662
    %v2111 = vpack.c.b16 %v1671, %v1663
    %v2112 = vpack.c.b16 %v1672, %v1664
    %v2113 = vpack.c.b16 %v1673, %v1665
    %v2114 = vpack.c.b16 %v1674, %v1666
    %v2115 = vpack.c.b16 %v1675, %v1667
    %v2116 = vpack.c.b16 %v1676, %v1668
    %v2117 = vpack.c.b16 %v1685, %v1677
    %v2118 = vpack.c.b16 %v1686, %v1678
    %v2119 = vpack.c.b16 %v1687, %v1679
    %v2120 = vpack.c.b16 %v1688, %v1680
    %v2121 = vpack.c.b16 %v1689, %v1681
    %v2122 = vpack.c.b16 %v1690, %v1682
    %v2123 = vpack.c.b16 %v1691, %v1683
    %v2124 = vpack.c.b16 %v1692, %v1684
    %v2125 = vpack.c.b16 %v1701, %v1693
    %v2126 = vpack.c.b16 %v1702, %v1694
    %v2127 = vpack.c.b16 %v1703, %v1695
    %v2128 = vpack.c.b16 %v1704, %v1696
    %v2129 = vpack.c.b16 %v1705, %v1697
    %v2130 = vpack.c.b16 %v1706, %v1698
    %v2131 = vpack.c.b16 %v1707, %v1699
    %v2132 = vpack.c.b16 %v1708, %v1700
    %v2133 = vpack.c.b16 %v1717, %v1709
    %v2134 = vpack.c.b16 %v1718, %v1710
    %v2135 = vpack.c.b16 %v1719, %v1711
    %v2136 = vpack.c.b16 %v1720, %v1712
    %v2137 = vpack.c.b16 %v1721, %v1713
    %v2138 = vpack.c.b16 %v1722, %v1714
    %v2139 = vpack.c.b16 %v1723, %v1715
    %v2140 = vpack.c.b16 %v1724, %v1716
    %v2141 = vpack.c.b16 %v1733, %v1725
    %v2142 = vpack.c.b16 %v1734, %v1726
    %v2143 = vpack.c.b16 %v1735, %v1727
    %v2144 = vpack.c.b16 %v1736, %v1728
    %v2145 = vpack.c.b16 %v1737, %v1729
    %v2146 = vpack.c.b16 %v1738, %v1730
    %v2147 = vpack.c.b16 %v1739, %v1731
    %v2148 = vpack.c.b16 %v1740, %v1732
    %v2149 = vpack.c.b16 %v1749, %v1741
    %v2150 = vpack.c.b16 %v1750, %v1742
    %v2151 = vpack.c.b16 %v1751, %v1743
    %v2152 = vpack.c.b16 %v1752, %v1744
    %v2153 = vpack.c.b16 %v1753, %v1745
    %v2154 = vpack.c.b16 %v1754, %v1746
    %v2155 = vpack.c.b16 %v1755, %v1747
    %v2156 = vpack.c.b16 %v1756, %v1748
    %v2157 = vpack.c.b16 %v1765, %v1757
    %v2158 = vpack.c.b16 %v1766, %v1758
    %v2159 = vpack.c.b16 %v1767, %v1759
    %v2160 = vpack.c.b16 %v1768, %v1760
    %v2161 = vpack.c.b16 %v1769, %v1761
    %v2162 = vpack.c.b16 %v1770, %v1762
    %v2163 = vpack.c.b16 %v1771, %v1763
    %v2164 = vpack.c.b16 %v1772, %v1764
    %vm2557 = vcmask 130048
    %v2559 = vsel %vm2557, %v186, 0
    %2561 = vmatpush.bf16.msra.mxu0 %v1829
    %2562 = vmatpush.bf16.msra.mxu0 %v1821
    %2563 = vmatpush.bf16.msra.mxu0 %v1813
    %2564 = vmatpush.bf16.msra.mxu0 %v1805
    %2565 = vmatpush.bf16.msra.mxu0 %v1797
    %2566 = vmatpush.bf16.msra.mxu0 %v1789
    %2567 = vmatpush.bf16.msra.mxu0 %v1781
    %2568 = vmatpush.bf16.msra.mxu0 %v1773
    %2569 = vmatmul.bf16.gmra.mxu0 %v180
    %v2570 = vpop.f32.mrf.mxu0
    %v2571 = vadd.f32 %v581, %v2570
    %v2572 = vpop.f32.mrf.mxu0
    %v2573 = vadd.f32 %v581, %v2572
    %2574 = vdwg.mxu0
    %2575 = vmatpush.bf16.msra.mxu0 %v1893
    %2576 = vmatpush.bf16.msra.mxu0 %v1885
    %2577 = vmatpush.bf16.msra.mxu0 %v1877
    %2578 = vmatpush.bf16.msra.mxu0 %v1869
    %2579 = vmatpush.bf16.msra.mxu0 %v1861
    %2580 = vmatpush.bf16.msra.mxu0 %v1853
    %2581 = vmatpush.bf16.msra.mxu0 %v1845
    %2582 = vmatpush.bf16.msra.mxu0 %v1837
    %2583 = vmatmul.bf16.gmra.mxu0 %v181
    %v2584 = vpop.f32.mrf.mxu0
    %v2585 = vadd.f32 %v2571, %v2584
    %v2586 = vpop.f32.mrf.mxu0
    %v2587 = vadd.f32 %v2573, %v2586
    %2588 = vdwg.mxu0
    %2589 = vmatpush.bf16.msra.mxu0 %v1957
    %2590 = vmatpush.bf16.msra.mxu0 %v1949
    %2591 = vmatpush.bf16.msra.mxu0 %v1941
    %2592 = vmatpush.bf16.msra.mxu0 %v1933
    %2593 = vmatpush.bf16.msra.mxu0 %v1925
    %2594 = vmatpush.bf16.msra.mxu0 %v1917
    %2595 = vmatpush.bf16.msra.mxu0 %v1909
    %2596 = vmatpush.bf16.msra.mxu0 %v1901
    %2597 = vmatmul.bf16.gmra.mxu0 %v182
    %v2598 = vpop.f32.mrf.mxu0
    %v2599 = vadd.f32 %v2585, %v2598
    %v2600 = vpop.f32.mrf.mxu0
    %v2601 = vadd.f32 %v2587, %v2600
    %2602 = vdwg.mxu0
    %2603 = vmatpush.bf16.msra.mxu0 %v2021
    %2604 = vmatpush.bf16.msra.mxu0 %v2013
    %2605 = vmatpush.bf16.msra.mxu0 %v2005
    %2606 = vmatpush.bf16.msra.mxu0 %v1997
    %2607 = vmatpush.bf16.msra.mxu0 %v1989
    %2608 = vmatpush.bf16.msra.mxu0 %v1981
    %2609 = vmatpush.bf16.msra.mxu0 %v1973
    %2610 = vmatpush.bf16.msra.mxu0 %v1965
    %2611 = vmatmul.bf16.gmra.mxu0 %v183
    %v2612 = vpop.f32.mrf.mxu0
    %v2613 = vadd.f32 %v2599, %v2612
    %v2614 = vpop.f32.mrf.mxu0
    %v2615 = vadd.f32 %v2601, %v2614
    %2616 = vdwg.mxu0
    %2617 = vmatpush.bf16.msra.mxu0 %v2085
    %2618 = vmatpush.bf16.msra.mxu0 %v2077
    %2619 = vmatpush.bf16.msra.mxu0 %v2069
    %2620 = vmatpush.bf16.msra.mxu0 %v2061
    %2621 = vmatpush.bf16.msra.mxu0 %v2053
    %2622 = vmatpush.bf16.msra.mxu0 %v2045
    %2623 = vmatpush.bf16.msra.mxu0 %v2037
    %2624 = vmatpush.bf16.msra.mxu0 %v2029
    %2625 = vmatmul.bf16.gmra.mxu0 %v184
    %v2626 = vpop.f32.mrf.mxu0
    %v2627 = vadd.f32 %v2613, %v2626
    %v2628 = vpop.f32.mrf.mxu0
    %v2629 = vadd.f32 %v2615, %v2628
    %2630 = vdwg.mxu0
    %2631 = vmatpush.bf16.msra.mxu0 %v2149
    %2632 = vmatpush.bf16.msra.mxu0 %v2141
    %2633 = vmatpush.bf16.msra.mxu0 %v2133
    %2634 = vmatpush.bf16.msra.mxu0 %v2125
    %2635 = vmatpush.bf16.msra.mxu0 %v2117
    %2636 = vmatpush.bf16.msra.mxu0 %v2109
    %2637 = vmatpush.bf16.msra.mxu0 %v2101
    %2638 = vmatpush.bf16.msra.mxu0 %v2093
    %2639 = vmatmul.bf16.gmra.mxu0 %v185
    %v2640 = vpop.f32.mrf.mxu0
    %v2641 = vadd.f32 %v2627, %v2640
    %v2642 = vpop.f32.mrf.mxu0
    %v2643 = vadd.f32 %v2629, %v2642
    %2644 = vdwg.mxu0
    %2645 = vmatpush.bf16.msra.mxu0 0
    %2646 = vmatpush.bf16.msra.mxu0 0
    %2647 = vmatpush.bf16.msra.mxu0 0
    %2648 = vmatpush.bf16.msra.mxu0 0
    %2649 = vmatpush.bf16.msra.mxu0 0
    %2650 = vmatpush.bf16.msra.mxu0 0
    %2651 = vmatpush.bf16.msra.mxu0 0
    %2652 = vmatpush.bf16.msra.mxu0 %v2157
    %2653 = vmatmul.bf16.gmra.mxu0 %v2559
    %v2654 = vpop.f32.mrf.mxu0
    %v2655 = vadd.f32 %v2641, %v2654
    %v2656 = vpop.f32.mrf.mxu0
    %v2657 = vadd.f32 %v2643, %v2656
    %2658 = vdwg.mxu0
    %2659 = vmatpush.bf16.msra.mxu0 %v1830
    %2660 = vmatpush.bf16.msra.mxu0 %v1822
    %2661 = vmatpush.bf16.msra.mxu0 %v1814
    %2662 = vmatpush.bf16.msra.mxu0 %v1806
    %2663 = vmatpush.bf16.msra.mxu0 %v1798
    %2664 = vmatpush.bf16.msra.mxu0 %v1790
    %2665 = vmatpush.bf16.msra.mxu0 %v1782
    %2666 = vmatpush.bf16.msra.mxu0 %v1774
    %2667 = vmatmul.bf16.gmra.mxu0 %v180
    %v2668 = vpop.f32.mrf.mxu0
    %v2669 = vadd.f32 %v582, %v2668
    %v2670 = vpop.f32.mrf.mxu0
    %v2671 = vadd.f32 %v582, %v2670
    %2672 = vdwg.mxu0
    %2673 = vmatpush.bf16.msra.mxu0 %v1894
    %2674 = vmatpush.bf16.msra.mxu0 %v1886
    %2675 = vmatpush.bf16.msra.mxu0 %v1878
    %2676 = vmatpush.bf16.msra.mxu0 %v1870
    %2677 = vmatpush.bf16.msra.mxu0 %v1862
    %2678 = vmatpush.bf16.msra.mxu0 %v1854
    %2679 = vmatpush.bf16.msra.mxu0 %v1846
    %2680 = vmatpush.bf16.msra.mxu0 %v1838
    %2681 = vmatmul.bf16.gmra.mxu0 %v181
    %v2682 = vpop.f32.mrf.mxu0
    %v2683 = vadd.f32 %v2669, %v2682
    %v2684 = vpop.f32.mrf.mxu0
    %v2685 = vadd.f32 %v2671, %v2684
    %2686 = vdwg.mxu0
    %2687 = vmatpush.bf16.msra.mxu0 %v1958
    %2688 = vmatpush.bf16.msra.mxu0 %v1950
    %2689 = vmatpush.bf16.msra.mxu0 %v1942
    %2690 = vmatpush.bf16.msra.mxu0 %v1934
    %2691 = vmatpush.bf16.msra.mxu0 %v1926
    %2692 = vmatpush.bf16.msra.mxu0 %v1918
    %2693 = vmatpush.bf16.msra.mxu0 %v1910
    %2694 = vmatpush.bf16.msra.mxu0 %v1902
    %2695 = vmatmul.bf16.gmra.mxu0 %v182
    %v2696 = vpop.f32.mrf.mxu0
    %v2697 = vadd.f32 %v2683, %v2696
    %v2698 = vpop.f32.mrf.mxu0
    %v2699 = vadd.f32 %v2685, %v2698
    %2700 = vdwg.mxu0
    %2701 = vmatpush.bf16.msra.mxu0 %v2022
    %2702 = vmatpush.bf16.msra.mxu0 %v2014
    %2703 = vmatpush.bf16.msra.mxu0 %v2006
    %2704 = vmatpush.bf16.msra.mxu0 %v1998
    %2705 = vmatpush.bf16.msra.mxu0 %v1990
    %2706 = vmatpush.bf16.msra.mxu0 %v1982
    %2707 = vmatpush.bf16.msra.mxu0 %v1974
    %2708 = vmatpush.bf16.msra.mxu0 %v1966
    %2709 = vmatmul.bf16.gmra.mxu0 %v183
    %v2710 = vpop.f32.mrf.mxu0
    %v2711 = vadd.f32 %v2697, %v2710
    %v2712 = vpop.f32.mrf.mxu0
    %v2713 = vadd.f32 %v2699, %v2712
    %2714 = vdwg.mxu0
    %2715 = vmatpush.bf16.msra.mxu0 %v2086
    %2716 = vmatpush.bf16.msra.mxu0 %v2078
    %2717 = vmatpush.bf16.msra.mxu0 %v2070
    %2718 = vmatpush.bf16.msra.mxu0 %v2062
    %2719 = vmatpush.bf16.msra.mxu0 %v2054
    %2720 = vmatpush.bf16.msra.mxu0 %v2046
    %2721 = vmatpush.bf16.msra.mxu0 %v2038
    %2722 = vmatpush.bf16.msra.mxu0 %v2030
    %2723 = vmatmul.bf16.gmra.mxu0 %v184
    %v2724 = vpop.f32.mrf.mxu0
    %v2725 = vadd.f32 %v2711, %v2724
    %v2726 = vpop.f32.mrf.mxu0
    %v2727 = vadd.f32 %v2713, %v2726
    %2728 = vdwg.mxu0
    %2729 = vmatpush.bf16.msra.mxu0 %v2150
    %2730 = vmatpush.bf16.msra.mxu0 %v2142
    %2731 = vmatpush.bf16.msra.mxu0 %v2134
    %2732 = vmatpush.bf16.msra.mxu0 %v2126
    %2733 = vmatpush.bf16.msra.mxu0 %v2118
    %2734 = vmatpush.bf16.msra.mxu0 %v2110
    %2735 = vmatpush.bf16.msra.mxu0 %v2102
    %2736 = vmatpush.bf16.msra.mxu0 %v2094
    %2737 = vmatmul.bf16.gmra.mxu0 %v185
    %v2738 = vpop.f32.mrf.mxu0
    %v2739 = vadd.f32 %v2725, %v2738
    %v2740 = vpop.f32.mrf.mxu0
    %v2741 = vadd.f32 %v2727, %v2740
    %2742 = vdwg.mxu0
    %2743 = vmatpush.bf16.msra.mxu0 0
    %2744 = vmatpush.bf16.msra.mxu0 0
    %2745 = vmatpush.bf16.msra.mxu0 0
    %2746 = vmatpush.bf16.msra.mxu0 0
    %2747 = vmatpush.bf16.msra.mxu0 0
    %2748 = vmatpush.bf16.msra.mxu0 0
    %2749 = vmatpush.bf16.msra.mxu0 0
    %2750 = vmatpush.bf16.msra.mxu0 %v2158
    %2751 = vmatmul.bf16.gmra.mxu0 %v2559
    %v2752 = vpop.f32.mrf.mxu0
    %v2753 = vadd.f32 %v2739, %v2752
    %v2754 = vpop.f32.mrf.mxu0
    %v2755 = vadd.f32 %v2741, %v2754
    %2756 = vdwg.mxu0
    %2757 = vmatpush.bf16.msra.mxu0 %v1831
    %2758 = vmatpush.bf16.msra.mxu0 %v1823
    %2759 = vmatpush.bf16.msra.mxu0 %v1815
    %2760 = vmatpush.bf16.msra.mxu0 %v1807
    %2761 = vmatpush.bf16.msra.mxu0 %v1799
    %2762 = vmatpush.bf16.msra.mxu0 %v1791
    %2763 = vmatpush.bf16.msra.mxu0 %v1783
    %2764 = vmatpush.bf16.msra.mxu0 %v1775
    %2765 = vmatmul.bf16.gmra.mxu0 %v180
    %v2766 = vpop.f32.mrf.mxu0
    %v2767 = vadd.f32 %v583, %v2766
    %v2768 = vpop.f32.mrf.mxu0
    %v2769 = vadd.f32 %v583, %v2768
    %2770 = vdwg.mxu0
    %2771 = vmatpush.bf16.msra.mxu0 %v1895
    %2772 = vmatpush.bf16.msra.mxu0 %v1887
    %2773 = vmatpush.bf16.msra.mxu0 %v1879
    %2774 = vmatpush.bf16.msra.mxu0 %v1871
    %2775 = vmatpush.bf16.msra.mxu0 %v1863
    %2776 = vmatpush.bf16.msra.mxu0 %v1855
    %2777 = vmatpush.bf16.msra.mxu0 %v1847
    %2778 = vmatpush.bf16.msra.mxu0 %v1839
    %2779 = vmatmul.bf16.gmra.mxu0 %v181
    %v2780 = vpop.f32.mrf.mxu0
    %v2781 = vadd.f32 %v2767, %v2780
    %v2782 = vpop.f32.mrf.mxu0
    %v2783 = vadd.f32 %v2769, %v2782
    %2784 = vdwg.mxu0
    %2785 = vmatpush.bf16.msra.mxu0 %v1959
    %2786 = vmatpush.bf16.msra.mxu0 %v1951
    %2787 = vmatpush.bf16.msra.mxu0 %v1943
    %2788 = vmatpush.bf16.msra.mxu0 %v1935
    %2789 = vmatpush.bf16.msra.mxu0 %v1927
    %2790 = vmatpush.bf16.msra.mxu0 %v1919
    %2791 = vmatpush.bf16.msra.mxu0 %v1911
    %2792 = vmatpush.bf16.msra.mxu0 %v1903
    %2793 = vmatmul.bf16.gmra.mxu0 %v182
    %v2794 = vpop.f32.mrf.mxu0
    %v2795 = vadd.f32 %v2781, %v2794
    %v2796 = vpop.f32.mrf.mxu0
    %v2797 = vadd.f32 %v2783, %v2796
    %2798 = vdwg.mxu0
    %2799 = vmatpush.bf16.msra.mxu0 %v2023
    %2800 = vmatpush.bf16.msra.mxu0 %v2015
    %2801 = vmatpush.bf16.msra.mxu0 %v2007
    %2802 = vmatpush.bf16.msra.mxu0 %v1999
    %2803 = vmatpush.bf16.msra.mxu0 %v1991
    %2804 = vmatpush.bf16.msra.mxu0 %v1983
    %2805 = vmatpush.bf16.msra.mxu0 %v1975
    %2806 = vmatpush.bf16.msra.mxu0 %v1967
    %2807 = vmatmul.bf16.gmra.mxu0 %v183
    %v2808 = vpop.f32.mrf.mxu0
    %v2809 = vadd.f32 %v2795, %v2808
    %v2810 = vpop.f32.mrf.mxu0
    %v2811 = vadd.f32 %v2797, %v2810
    %2812 = vdwg.mxu0
    %2813 = vmatpush.bf16.msra.mxu0 %v2087
    %2814 = vmatpush.bf16.msra.mxu0 %v2079
    %2815 = vmatpush.bf16.msra.mxu0 %v2071
    %2816 = vmatpush.bf16.msra.mxu0 %v2063
    %2817 = vmatpush.bf16.msra.mxu0 %v2055
    %2818 = vmatpush.bf16.msra.mxu0 %v2047
    %2819 = vmatpush.bf16.msra.mxu0 %v2039
    %2820 = vmatpush.bf16.msra.mxu0 %v2031
    %2821 = vmatmul.bf16.gmra.mxu0 %v184
    %v2822 = vpop.f32.mrf.mxu0
    %v2823 = vadd.f32 %v2809, %v2822
    %v2824 = vpop.f32.mrf.mxu0
    %v2825 = vadd.f32 %v2811, %v2824
    %2826 = vdwg.mxu0
    %2827 = vmatpush.bf16.msra.mxu0 %v2151
    %2828 = vmatpush.bf16.msra.mxu0 %v2143
    %2829 = vmatpush.bf16.msra.mxu0 %v2135
    %2830 = vmatpush.bf16.msra.mxu0 %v2127
    %2831 = vmatpush.bf16.msra.mxu0 %v2119
    %2832 = vmatpush.bf16.msra.mxu0 %v2111
    %2833 = vmatpush.bf16.msra.mxu0 %v2103
    %2834 = vmatpush.bf16.msra.mxu0 %v2095
    %2835 = vmatmul.bf16.gmra.mxu0 %v185
    %v2836 = vpop.f32.mrf.mxu0
    %v2837 = vadd.f32 %v2823, %v2836
    %v2838 = vpop.f32.mrf.mxu0
    %v2839 = vadd.f32 %v2825, %v2838
    %2840 = vdwg.mxu0
    %2841 = vmatpush.bf16.msra.mxu0 0
    %2842 = vmatpush.bf16.msra.mxu0 0
    %2843 = vmatpush.bf16.msra.mxu0 0
    %2844 = vmatpush.bf16.msra.mxu0 0
    %2845 = vmatpush.bf16.msra.mxu0 0
    %2846 = vmatpush.bf16.msra.mxu0 0
    %2847 = vmatpush.bf16.msra.mxu0 0
    %2848 = vmatpush.bf16.msra.mxu0 %v2159
    %2849 = vmatmul.bf16.gmra.mxu0 %v2559
    %v2850 = vpop.f32.mrf.mxu0
    %v2851 = vadd.f32 %v2837, %v2850
    %v2852 = vpop.f32.mrf.mxu0
    %v2853 = vadd.f32 %v2839, %v2852
    %2854 = vdwg.mxu0
    %2855 = vmatpush.bf16.msra.mxu0 %v1832
    %2856 = vmatpush.bf16.msra.mxu0 %v1824
    %2857 = vmatpush.bf16.msra.mxu0 %v1816
    %2858 = vmatpush.bf16.msra.mxu0 %v1808
    %2859 = vmatpush.bf16.msra.mxu0 %v1800
    %2860 = vmatpush.bf16.msra.mxu0 %v1792
    %2861 = vmatpush.bf16.msra.mxu0 %v1784
    %2862 = vmatpush.bf16.msra.mxu0 %v1776
    %2863 = vmatmul.bf16.gmra.mxu0 %v180
    %v2864 = vpop.f32.mrf.mxu0
    %v2865 = vadd.f32 %v584, %v2864
    %v2866 = vpop.f32.mrf.mxu0
    %v2867 = vadd.f32 %v584, %v2866
    %2868 = vdwg.mxu0
    %2869 = vmatpush.bf16.msra.mxu0 %v1896
    %2870 = vmatpush.bf16.msra.mxu0 %v1888
    %2871 = vmatpush.bf16.msra.mxu0 %v1880
    %2872 = vmatpush.bf16.msra.mxu0 %v1872
    %2873 = vmatpush.bf16.msra.mxu0 %v1864
    %2874 = vmatpush.bf16.msra.mxu0 %v1856
    %2875 = vmatpush.bf16.msra.mxu0 %v1848
    %2876 = vmatpush.bf16.msra.mxu0 %v1840
    %2877 = vmatmul.bf16.gmra.mxu0 %v181
    %v2878 = vpop.f32.mrf.mxu0
    %v2879 = vadd.f32 %v2865, %v2878
    %v2880 = vpop.f32.mrf.mxu0
    %v2881 = vadd.f32 %v2867, %v2880
    %2882 = vdwg.mxu0
    %2883 = vmatpush.bf16.msra.mxu0 %v1960
    %2884 = vmatpush.bf16.msra.mxu0 %v1952
    %2885 = vmatpush.bf16.msra.mxu0 %v1944
    %2886 = vmatpush.bf16.msra.mxu0 %v1936
    %2887 = vmatpush.bf16.msra.mxu0 %v1928
    %2888 = vmatpush.bf16.msra.mxu0 %v1920
    %2889 = vmatpush.bf16.msra.mxu0 %v1912
    %2890 = vmatpush.bf16.msra.mxu0 %v1904
    %2891 = vmatmul.bf16.gmra.mxu0 %v182
    %v2892 = vpop.f32.mrf.mxu0
    %v2893 = vadd.f32 %v2879, %v2892
    %v2894 = vpop.f32.mrf.mxu0
    %v2895 = vadd.f32 %v2881, %v2894
    %2896 = vdwg.mxu0
    %2897 = vmatpush.bf16.msra.mxu0 %v2024
    %2898 = vmatpush.bf16.msra.mxu0 %v2016
    %2899 = vmatpush.bf16.msra.mxu0 %v2008
    %2900 = vmatpush.bf16.msra.mxu0 %v2000
    %2901 = vmatpush.bf16.msra.mxu0 %v1992
    %2902 = vmatpush.bf16.msra.mxu0 %v1984
    %2903 = vmatpush.bf16.msra.mxu0 %v1976
    %2904 = vmatpush.bf16.msra.mxu0 %v1968
    %2905 = vmatmul.bf16.gmra.mxu0 %v183
    %v2906 = vpop.f32.mrf.mxu0
    %v2907 = vadd.f32 %v2893, %v2906
    %v2908 = vpop.f32.mrf.mxu0
    %v2909 = vadd.f32 %v2895, %v2908
    %2910 = vdwg.mxu0
    %2911 = vmatpush.bf16.msra.mxu0 %v2088
    %2912 = vmatpush.bf16.msra.mxu0 %v2080
    %2913 = vmatpush.bf16.msra.mxu0 %v2072
    %2914 = vmatpush.bf16.msra.mxu0 %v2064
    %2915 = vmatpush.bf16.msra.mxu0 %v2056
    %2916 = vmatpush.bf16.msra.mxu0 %v2048
    %2917 = vmatpush.bf16.msra.mxu0 %v2040
    %2918 = vmatpush.bf16.msra.mxu0 %v2032
    %2919 = vmatmul.bf16.gmra.mxu0 %v184
    %v2920 = vpop.f32.mrf.mxu0
    %v2921 = vadd.f32 %v2907, %v2920
    %v2922 = vpop.f32.mrf.mxu0
    %v2923 = vadd.f32 %v2909, %v2922
    %2924 = vdwg.mxu0
    %2925 = vmatpush.bf16.msra.mxu0 %v2152
    %2926 = vmatpush.bf16.msra.mxu0 %v2144
    %2927 = vmatpush.bf16.msra.mxu0 %v2136
    %2928 = vmatpush.bf16.msra.mxu0 %v2128
    %2929 = vmatpush.bf16.msra.mxu0 %v2120
    %2930 = vmatpush.bf16.msra.mxu0 %v2112
    %2931 = vmatpush.bf16.msra.mxu0 %v2104
    %2932 = vmatpush.bf16.msra.mxu0 %v2096
    %2933 = vmatmul.bf16.gmra.mxu0 %v185
    %v2934 = vpop.f32.mrf.mxu0
    %v2935 = vadd.f32 %v2921, %v2934
    %v2936 = vpop.f32.mrf.mxu0
    %v2937 = vadd.f32 %v2923, %v2936
    %2938 = vdwg.mxu0
    %2939 = vmatpush.bf16.msra.mxu0 0
    %2940 = vmatpush.bf16.msra.mxu0 0
    %2941 = vmatpush.bf16.msra.mxu0 0
    %2942 = vmatpush.bf16.msra.mxu0 0
    %2943 = vmatpush.bf16.msra.mxu0 0
    %2944 = vmatpush.bf16.msra.mxu0 0
    %2945 = vmatpush.bf16.msra.mxu0 0
    %2946 = vmatpush.bf16.msra.mxu0 %v2160
    %2947 = vmatmul.bf16.gmra.mxu0 %v2559
    %v2948 = vpop.f32.mrf.mxu0
    %v2949 = vadd.f32 %v2935, %v2948
    %v2950 = vpop.f32.mrf.mxu0
    %v2951 = vadd.f32 %v2937, %v2950
    %2952 = vdwg.mxu0
    %2953 = vmatpush.bf16.msra.mxu0 %v1833
    %2954 = vmatpush.bf16.msra.mxu0 %v1825
    %2955 = vmatpush.bf16.msra.mxu0 %v1817
    %2956 = vmatpush.bf16.msra.mxu0 %v1809
    %2957 = vmatpush.bf16.msra.mxu0 %v1801
    %2958 = vmatpush.bf16.msra.mxu0 %v1793
    %2959 = vmatpush.bf16.msra.mxu0 %v1785
    %2960 = vmatpush.bf16.msra.mxu0 %v1777
    %2961 = vmatmul.bf16.gmra.mxu0 %v180
    %v2962 = vpop.f32.mrf.mxu0
    %v2963 = vadd.f32 %v585, %v2962
    %v2964 = vpop.f32.mrf.mxu0
    %v2965 = vadd.f32 %v585, %v2964
    %2966 = vdwg.mxu0
    %2967 = vmatpush.bf16.msra.mxu0 %v1897
    %2968 = vmatpush.bf16.msra.mxu0 %v1889
    %2969 = vmatpush.bf16.msra.mxu0 %v1881
    %2970 = vmatpush.bf16.msra.mxu0 %v1873
    %2971 = vmatpush.bf16.msra.mxu0 %v1865
    %2972 = vmatpush.bf16.msra.mxu0 %v1857
    %2973 = vmatpush.bf16.msra.mxu0 %v1849
    %2974 = vmatpush.bf16.msra.mxu0 %v1841
    %2975 = vmatmul.bf16.gmra.mxu0 %v181
    %v2976 = vpop.f32.mrf.mxu0
    %v2977 = vadd.f32 %v2963, %v2976
    %v2978 = vpop.f32.mrf.mxu0
    %v2979 = vadd.f32 %v2965, %v2978
    %2980 = vdwg.mxu0
    %2981 = vmatpush.bf16.msra.mxu0 %v1961
    %2982 = vmatpush.bf16.msra.mxu0 %v1953
    %2983 = vmatpush.bf16.msra.mxu0 %v1945
    %2984 = vmatpush.bf16.msra.mxu0 %v1937
    %2985 = vmatpush.bf16.msra.mxu0 %v1929
    %2986 = vmatpush.bf16.msra.mxu0 %v1921
    %2987 = vmatpush.bf16.msra.mxu0 %v1913
    %2988 = vmatpush.bf16.msra.mxu0 %v1905
    %2989 = vmatmul.bf16.gmra.mxu0 %v182
    %v2990 = vpop.f32.mrf.mxu0
    %v2991 = vadd.f32 %v2977, %v2990
    %v2992 = vpop.f32.mrf.mxu0
    %v2993 = vadd.f32 %v2979, %v2992
    %2994 = vdwg.mxu0
    %2995 = vmatpush.bf16.msra.mxu0 %v2025
    %2996 = vmatpush.bf16.msra.mxu0 %v2017
    %2997 = vmatpush.bf16.msra.mxu0 %v2009
    %2998 = vmatpush.bf16.msra.mxu0 %v2001
    %2999 = vmatpush.bf16.msra.mxu0 %v1993
    %3000 = vmatpush.bf16.msra.mxu0 %v1985
    %3001 = vmatpush.bf16.msra.mxu0 %v1977
    %3002 = vmatpush.bf16.msra.mxu0 %v1969
    %3003 = vmatmul.bf16.gmra.mxu0 %v183
    %v3004 = vpop.f32.mrf.mxu0
    %v3005 = vadd.f32 %v2991, %v3004
    %v3006 = vpop.f32.mrf.mxu0
    %v3007 = vadd.f32 %v2993, %v3006
    %3008 = vdwg.mxu0
    %3009 = vmatpush.bf16.msra.mxu0 %v2089
    %3010 = vmatpush.bf16.msra.mxu0 %v2081
    %3011 = vmatpush.bf16.msra.mxu0 %v2073
    %3012 = vmatpush.bf16.msra.mxu0 %v2065
    %3013 = vmatpush.bf16.msra.mxu0 %v2057
    %3014 = vmatpush.bf16.msra.mxu0 %v2049
    %3015 = vmatpush.bf16.msra.mxu0 %v2041
    %3016 = vmatpush.bf16.msra.mxu0 %v2033
    %3017 = vmatmul.bf16.gmra.mxu0 %v184
    %v3018 = vpop.f32.mrf.mxu0
    %v3019 = vadd.f32 %v3005, %v3018
    %v3020 = vpop.f32.mrf.mxu0
    %v3021 = vadd.f32 %v3007, %v3020
    %3022 = vdwg.mxu0
    %3023 = vmatpush.bf16.msra.mxu0 %v2153
    %3024 = vmatpush.bf16.msra.mxu0 %v2145
    %3025 = vmatpush.bf16.msra.mxu0 %v2137
    %3026 = vmatpush.bf16.msra.mxu0 %v2129
    %3027 = vmatpush.bf16.msra.mxu0 %v2121
    %3028 = vmatpush.bf16.msra.mxu0 %v2113
    %3029 = vmatpush.bf16.msra.mxu0 %v2105
    %3030 = vmatpush.bf16.msra.mxu0 %v2097
    %3031 = vmatmul.bf16.gmra.mxu0 %v185
    %v3032 = vpop.f32.mrf.mxu0
    %v3033 = vadd.f32 %v3019, %v3032
    %v3034 = vpop.f32.mrf.mxu0
    %v3035 = vadd.f32 %v3021, %v3034
    %3036 = vdwg.mxu0
    %3037 = vmatpush.bf16.msra.mxu0 0
    %3038 = vmatpush.bf16.msra.mxu0 0
    %3039 = vmatpush.bf16.msra.mxu0 0
    %3040 = vmatpush.bf16.msra.mxu0 0
    %3041 = vmatpush.bf16.msra.mxu0 0
    %3042 = vmatpush.bf16.msra.mxu0 0
    %3043 = vmatpush.bf16.msra.mxu0 0
    %3044 = vmatpush.bf16.msra.mxu0 %v2161
    %3045 = vmatmul.bf16.gmra.mxu0 %v2559
    %v3046 = vpop.f32.mrf.mxu0
    %v3047 = vadd.f32 %v3033, %v3046
    %v3048 = vpop.f32.mrf.mxu0
    %v3049 = vadd.f32 %v3035, %v3048
    %3050 = vdwg.mxu0
    %3051 = vmatpush.bf16.msra.mxu0 %v1834
    %3052 = vmatpush.bf16.msra.mxu0 %v1826
    %3053 = vmatpush.bf16.msra.mxu0 %v1818
    %3054 = vmatpush.bf16.msra.mxu0 %v1810
    %3055 = vmatpush.bf16.msra.mxu0 %v1802
    %3056 = vmatpush.bf16.msra.mxu0 %v1794
    %3057 = vmatpush.bf16.msra.mxu0 %v1786
    %3058 = vmatpush.bf16.msra.mxu0 %v1778
    %3059 = vmatmul.bf16.gmra.mxu0 %v180
    %v3060 = vpop.f32.mrf.mxu0
    %v3061 = vadd.f32 %v586, %v3060
    %v3062 = vpop.f32.mrf.mxu0
    %v3063 = vadd.f32 %v586, %v3062
    %3064 = vdwg.mxu0
    %3065 = vmatpush.bf16.msra.mxu0 %v1898
    %3066 = vmatpush.bf16.msra.mxu0 %v1890
    %3067 = vmatpush.bf16.msra.mxu0 %v1882
    %3068 = vmatpush.bf16.msra.mxu0 %v1874
    %3069 = vmatpush.bf16.msra.mxu0 %v1866
    %3070 = vmatpush.bf16.msra.mxu0 %v1858
    %3071 = vmatpush.bf16.msra.mxu0 %v1850
    %3072 = vmatpush.bf16.msra.mxu0 %v1842
    %3073 = vmatmul.bf16.gmra.mxu0 %v181
    %v3074 = vpop.f32.mrf.mxu0
    %v3075 = vadd.f32 %v3061, %v3074
    %v3076 = vpop.f32.mrf.mxu0
    %v3077 = vadd.f32 %v3063, %v3076
    %3078 = vdwg.mxu0
    %3079 = vmatpush.bf16.msra.mxu0 %v1962
    %3080 = vmatpush.bf16.msra.mxu0 %v1954
    %3081 = vmatpush.bf16.msra.mxu0 %v1946
    %3082 = vmatpush.bf16.msra.mxu0 %v1938
    %3083 = vmatpush.bf16.msra.mxu0 %v1930
    %3084 = vmatpush.bf16.msra.mxu0 %v1922
    %3085 = vmatpush.bf16.msra.mxu0 %v1914
    %3086 = vmatpush.bf16.msra.mxu0 %v1906
    %3087 = vmatmul.bf16.gmra.mxu0 %v182
    %v3088 = vpop.f32.mrf.mxu0
    %v3089 = vadd.f32 %v3075, %v3088
    %v3090 = vpop.f32.mrf.mxu0
    %v3091 = vadd.f32 %v3077, %v3090
    %3092 = vdwg.mxu0
    %3093 = vmatpush.bf16.msra.mxu0 %v2026
    %3094 = vmatpush.bf16.msra.mxu0 %v2018
    %3095 = vmatpush.bf16.msra.mxu0 %v2010
    %3096 = vmatpush.bf16.msra.mxu0 %v2002
    %3097 = vmatpush.bf16.msra.mxu0 %v1994
    %3098 = vmatpush.bf16.msra.mxu0 %v1986
    %3099 = vmatpush.bf16.msra.mxu0 %v1978
    %3100 = vmatpush.bf16.msra.mxu0 %v1970
    %3101 = vmatmul.bf16.gmra.mxu0 %v183
    %v3102 = vpop.f32.mrf.mxu0
    %v3103 = vadd.f32 %v3089, %v3102
    %v3104 = vpop.f32.mrf.mxu0
    %v3105 = vadd.f32 %v3091, %v3104
    %3106 = vdwg.mxu0
    %3107 = vmatpush.bf16.msra.mxu0 %v2090
    %3108 = vmatpush.bf16.msra.mxu0 %v2082
    %3109 = vmatpush.bf16.msra.mxu0 %v2074
    %3110 = vmatpush.bf16.msra.mxu0 %v2066
    %3111 = vmatpush.bf16.msra.mxu0 %v2058
    %3112 = vmatpush.bf16.msra.mxu0 %v2050
    %3113 = vmatpush.bf16.msra.mxu0 %v2042
    %3114 = vmatpush.bf16.msra.mxu0 %v2034
    %3115 = vmatmul.bf16.gmra.mxu0 %v184
    %v3116 = vpop.f32.mrf.mxu0
    %v3117 = vadd.f32 %v3103, %v3116
    %v3118 = vpop.f32.mrf.mxu0
    %v3119 = vadd.f32 %v3105, %v3118
    %3120 = vdwg.mxu0
    %3121 = vmatpush.bf16.msra.mxu0 %v2154
    %3122 = vmatpush.bf16.msra.mxu0 %v2146
    %3123 = vmatpush.bf16.msra.mxu0 %v2138
    %3124 = vmatpush.bf16.msra.mxu0 %v2130
    %3125 = vmatpush.bf16.msra.mxu0 %v2122
    %3126 = vmatpush.bf16.msra.mxu0 %v2114
    %3127 = vmatpush.bf16.msra.mxu0 %v2106
    %3128 = vmatpush.bf16.msra.mxu0 %v2098
    %3129 = vmatmul.bf16.gmra.mxu0 %v185
    %v3130 = vpop.f32.mrf.mxu0
    %v3131 = vadd.f32 %v3117, %v3130
    %v3132 = vpop.f32.mrf.mxu0
    %v3133 = vadd.f32 %v3119, %v3132
    %3134 = vdwg.mxu0
    %3135 = vmatpush.bf16.msra.mxu0 0
    %3136 = vmatpush.bf16.msra.mxu0 0
    %3137 = vmatpush.bf16.msra.mxu0 0
    %3138 = vmatpush.bf16.msra.mxu0 0
    %3139 = vmatpush.bf16.msra.mxu0 0
    %3140 = vmatpush.bf16.msra.mxu0 0
    %3141 = vmatpush.bf16.msra.mxu0 0
    %3142 = vmatpush.bf16.msra.mxu0 %v2162
    %3143 = vmatmul.bf16.gmra.mxu0 %v2559
    %v3144 = vpop.f32.mrf.mxu0
    %v3145 = vadd.f32 %v3131, %v3144
    %v3146 = vpop.f32.mrf.mxu0
    %v3147 = vadd.f32 %v3133, %v3146
    %3148 = vdwg.mxu0
    %3149 = vmatpush.bf16.msra.mxu0 %v1835
    %3150 = vmatpush.bf16.msra.mxu0 %v1827
    %3151 = vmatpush.bf16.msra.mxu0 %v1819
    %3152 = vmatpush.bf16.msra.mxu0 %v1811
    %3153 = vmatpush.bf16.msra.mxu0 %v1803
    %3154 = vmatpush.bf16.msra.mxu0 %v1795
    %3155 = vmatpush.bf16.msra.mxu0 %v1787
    %3156 = vmatpush.bf16.msra.mxu0 %v1779
    %3157 = vmatmul.bf16.gmra.mxu0 %v180
    %v3158 = vpop.f32.mrf.mxu0
    %v3159 = vadd.f32 %v587, %v3158
    %v3160 = vpop.f32.mrf.mxu0
    %v3161 = vadd.f32 %v587, %v3160
    %3162 = vdwg.mxu0
    %3163 = vmatpush.bf16.msra.mxu0 %v1899
    %3164 = vmatpush.bf16.msra.mxu0 %v1891
    %3165 = vmatpush.bf16.msra.mxu0 %v1883
    %3166 = vmatpush.bf16.msra.mxu0 %v1875
    %3167 = vmatpush.bf16.msra.mxu0 %v1867
    %3168 = vmatpush.bf16.msra.mxu0 %v1859
    %3169 = vmatpush.bf16.msra.mxu0 %v1851
    %3170 = vmatpush.bf16.msra.mxu0 %v1843
    %3171 = vmatmul.bf16.gmra.mxu0 %v181
    %v3172 = vpop.f32.mrf.mxu0
    %v3173 = vadd.f32 %v3159, %v3172
    %v3174 = vpop.f32.mrf.mxu0
    %v3175 = vadd.f32 %v3161, %v3174
    %3176 = vdwg.mxu0
    %3177 = vmatpush.bf16.msra.mxu0 %v1963
    %3178 = vmatpush.bf16.msra.mxu0 %v1955
    %3179 = vmatpush.bf16.msra.mxu0 %v1947
    %3180 = vmatpush.bf16.msra.mxu0 %v1939
    %3181 = vmatpush.bf16.msra.mxu0 %v1931
    %3182 = vmatpush.bf16.msra.mxu0 %v1923
    %3183 = vmatpush.bf16.msra.mxu0 %v1915
    %3184 = vmatpush.bf16.msra.mxu0 %v1907
    %3185 = vmatmul.bf16.gmra.mxu0 %v182
    %v3186 = vpop.f32.mrf.mxu0
    %v3187 = vadd.f32 %v3173, %v3186
    %v3188 = vpop.f32.mrf.mxu0
    %v3189 = vadd.f32 %v3175, %v3188
    %3190 = vdwg.mxu0
    %3191 = vmatpush.bf16.msra.mxu0 %v2027
    %3192 = vmatpush.bf16.msra.mxu0 %v2019
    %3193 = vmatpush.bf16.msra.mxu0 %v2011
    %3194 = vmatpush.bf16.msra.mxu0 %v2003
    %3195 = vmatpush.bf16.msra.mxu0 %v1995
    %3196 = vmatpush.bf16.msra.mxu0 %v1987
    %3197 = vmatpush.bf16.msra.mxu0 %v1979
    %3198 = vmatpush.bf16.msra.mxu0 %v1971
    %3199 = vmatmul.bf16.gmra.mxu0 %v183
    %v3200 = vpop.f32.mrf.mxu0
    %v3201 = vadd.f32 %v3187, %v3200
    %v3202 = vpop.f32.mrf.mxu0
    %v3203 = vadd.f32 %v3189, %v3202
    %3204 = vdwg.mxu0
    %3205 = vmatpush.bf16.msra.mxu0 %v2091
    %3206 = vmatpush.bf16.msra.mxu0 %v2083
    %3207 = vmatpush.bf16.msra.mxu0 %v2075
    %3208 = vmatpush.bf16.msra.mxu0 %v2067
    %3209 = vmatpush.bf16.msra.mxu0 %v2059
    %3210 = vmatpush.bf16.msra.mxu0 %v2051
    %3211 = vmatpush.bf16.msra.mxu0 %v2043
    %3212 = vmatpush.bf16.msra.mxu0 %v2035
    %3213 = vmatmul.bf16.gmra.mxu0 %v184
    %v3214 = vpop.f32.mrf.mxu0
    %v3215 = vadd.f32 %v3201, %v3214
    %v3216 = vpop.f32.mrf.mxu0
    %v3217 = vadd.f32 %v3203, %v3216
    %3218 = vdwg.mxu0
    %3219 = vmatpush.bf16.msra.mxu0 %v2155
    %3220 = vmatpush.bf16.msra.mxu0 %v2147
    %3221 = vmatpush.bf16.msra.mxu0 %v2139
    %3222 = vmatpush.bf16.msra.mxu0 %v2131
    %3223 = vmatpush.bf16.msra.mxu0 %v2123
    %3224 = vmatpush.bf16.msra.mxu0 %v2115
    %3225 = vmatpush.bf16.msra.mxu0 %v2107
    %3226 = vmatpush.bf16.msra.mxu0 %v2099
    %3227 = vmatmul.bf16.gmra.mxu0 %v185
    %v3228 = vpop.f32.mrf.mxu0
    %v3229 = vadd.f32 %v3215, %v3228
    %v3230 = vpop.f32.mrf.mxu0
    %v3231 = vadd.f32 %v3217, %v3230
    %3232 = vdwg.mxu0
    %3233 = vmatpush.bf16.msra.mxu0 0
    %3234 = vmatpush.bf16.msra.mxu0 0
    %3235 = vmatpush.bf16.msra.mxu0 0
    %3236 = vmatpush.bf16.msra.mxu0 0
    %3237 = vmatpush.bf16.msra.mxu0 0
    %3238 = vmatpush.bf16.msra.mxu0 0
    %3239 = vmatpush.bf16.msra.mxu0 0
    %3240 = vmatpush.bf16.msra.mxu0 %v2163
    %3241 = vmatmul.bf16.gmra.mxu0 %v2559
    %v3242 = vpop.f32.mrf.mxu0
    %v3243 = vadd.f32 %v3229, %v3242
    %v3244 = vpop.f32.mrf.mxu0
    %v3245 = vadd.f32 %v3231, %v3244
    %3246 = vdwg.mxu0
    %3247 = vmatpush.bf16.msra.mxu0 %v1836
    %3248 = vmatpush.bf16.msra.mxu0 %v1828
    %3249 = vmatpush.bf16.msra.mxu0 %v1820
    %3250 = vmatpush.bf16.msra.mxu0 %v1812
    %3251 = vmatpush.bf16.msra.mxu0 %v1804
    %3252 = vmatpush.bf16.msra.mxu0 %v1796
    %3253 = vmatpush.bf16.msra.mxu0 %v1788
    %3254 = vmatpush.bf16.msra.mxu0 %v1780
    %3255 = vmatmul.bf16.gmra.mxu0 %v180
    %v3256 = vpop.f32.mrf.mxu0
    %v3257 = vadd.f32 %v588, %v3256
    %v3258 = vpop.f32.mrf.mxu0
    %v3259 = vadd.f32 %v588, %v3258
    %3260 = vdwg.mxu0
    %3261 = vmatpush.bf16.msra.mxu0 %v1900
    %3262 = vmatpush.bf16.msra.mxu0 %v1892
    %3263 = vmatpush.bf16.msra.mxu0 %v1884
    %3264 = vmatpush.bf16.msra.mxu0 %v1876
    %3265 = vmatpush.bf16.msra.mxu0 %v1868
    %3266 = vmatpush.bf16.msra.mxu0 %v1860
    %3267 = vmatpush.bf16.msra.mxu0 %v1852
    %3268 = vmatpush.bf16.msra.mxu0 %v1844
    %3269 = vmatmul.bf16.gmra.mxu0 %v181
    %v3270 = vpop.f32.mrf.mxu0
    %v3271 = vadd.f32 %v3257, %v3270
    %v3272 = vpop.f32.mrf.mxu0
    %v3273 = vadd.f32 %v3259, %v3272
    %3274 = vdwg.mxu0
    %3275 = vmatpush.bf16.msra.mxu0 %v1964
    %3276 = vmatpush.bf16.msra.mxu0 %v1956
    %3277 = vmatpush.bf16.msra.mxu0 %v1948
    %3278 = vmatpush.bf16.msra.mxu0 %v1940
    %3279 = vmatpush.bf16.msra.mxu0 %v1932
    %3280 = vmatpush.bf16.msra.mxu0 %v1924
    %3281 = vmatpush.bf16.msra.mxu0 %v1916
    %3282 = vmatpush.bf16.msra.mxu0 %v1908
    %3283 = vmatmul.bf16.gmra.mxu0 %v182
    %v3284 = vpop.f32.mrf.mxu0
    %v3285 = vadd.f32 %v3271, %v3284
    %v3286 = vpop.f32.mrf.mxu0
    %v3287 = vadd.f32 %v3273, %v3286
    %3288 = vdwg.mxu0
    %3289 = vmatpush.bf16.msra.mxu0 %v2028
    %3290 = vmatpush.bf16.msra.mxu0 %v2020
    %3291 = vmatpush.bf16.msra.mxu0 %v2012
    %3292 = vmatpush.bf16.msra.mxu0 %v2004
    %3293 = vmatpush.bf16.msra.mxu0 %v1996
    %3294 = vmatpush.bf16.msra.mxu0 %v1988
    %3295 = vmatpush.bf16.msra.mxu0 %v1980
    %3296 = vmatpush.bf16.msra.mxu0 %v1972
    %3297 = vmatmul.bf16.gmra.mxu0 %v183
    %v3298 = vpop.f32.mrf.mxu0
    %v3299 = vadd.f32 %v3285, %v3298
    %v3300 = vpop.f32.mrf.mxu0
    %v3301 = vadd.f32 %v3287, %v3300
    %3302 = vdwg.mxu0
    %3303 = vmatpush.bf16.msra.mxu0 %v2092
    %3304 = vmatpush.bf16.msra.mxu0 %v2084
    %3305 = vmatpush.bf16.msra.mxu0 %v2076
    %3306 = vmatpush.bf16.msra.mxu0 %v2068
    %3307 = vmatpush.bf16.msra.mxu0 %v2060
    %3308 = vmatpush.bf16.msra.mxu0 %v2052
    %3309 = vmatpush.bf16.msra.mxu0 %v2044
    %3310 = vmatpush.bf16.msra.mxu0 %v2036
    %3311 = vmatmul.bf16.gmra.mxu0 %v184
    %v3312 = vpop.f32.mrf.mxu0
    %v3313 = vadd.f32 %v3299, %v3312
    %v3314 = vpop.f32.mrf.mxu0
    %v3315 = vadd.f32 %v3301, %v3314
    %3316 = vdwg.mxu0
    %3317 = vmatpush.bf16.msra.mxu0 %v2156
    %3318 = vmatpush.bf16.msra.mxu0 %v2148
    %3319 = vmatpush.bf16.msra.mxu0 %v2140
    %3320 = vmatpush.bf16.msra.mxu0 %v2132
    %3321 = vmatpush.bf16.msra.mxu0 %v2124
    %3322 = vmatpush.bf16.msra.mxu0 %v2116
    %3323 = vmatpush.bf16.msra.mxu0 %v2108
    %3324 = vmatpush.bf16.msra.mxu0 %v2100
    %3325 = vmatmul.bf16.gmra.mxu0 %v185
    %v3326 = vpop.f32.mrf.mxu0
    %v3327 = vadd.f32 %v3313, %v3326
    %v3328 = vpop.f32.mrf.mxu0
    %v3329 = vadd.f32 %v3315, %v3328
    %3330 = vdwg.mxu0
    %3331 = vmatpush.bf16.msra.mxu0 0
    %3332 = vmatpush.bf16.msra.mxu0 0
    %3333 = vmatpush.bf16.msra.mxu0 0
    %3334 = vmatpush.bf16.msra.mxu0 0
    %3335 = vmatpush.bf16.msra.mxu0 0
    %3336 = vmatpush.bf16.msra.mxu0 0
    %3337 = vmatpush.bf16.msra.mxu0 0
    %3338 = vmatpush.bf16.msra.mxu0 %v2164
    %3339 = vmatmul.bf16.gmra.mxu0 %v2559
    %v3340 = vpop.f32.mrf.mxu0
    %v3341 = vadd.f32 %v3327, %v3340
    %v3342 = vpop.f32.mrf.mxu0
    %v3343 = vadd.f32 %v3329, %v3342
    %3344 = vdwg.mxu0
    %vm3345 = vcmp.gt.f32.partialorder %v2655, 0.0
    %vm3346 = vcmp.gt.f32.partialorder %v2753, 0.0
    %vm3347 = vcmp.gt.f32.partialorder %v2851, 0.0
    %vm3348 = vcmp.gt.f32.partialorder %v2949, 0.0
    %vm3349 = vcmp.gt.f32.partialorder %v3047, 0.0
    %vm3350 = vcmp.gt.f32.partialorder %v3145, 0.0
    %vm3351 = vcmp.gt.f32.partialorder %v3243, 0.0
    %vm3352 = vcmp.gt.f32.partialorder %v3341, 0.0
    %vm3353 = vcmp.gt.f32.partialorder %v2657, 0.0
    %vm3354 = vcmp.gt.f32.partialorder %v2755, 0.0
    %vm3355 = vcmp.gt.f32.partialorder %v2853, 0.0
    %vm3356 = vcmp.gt.f32.partialorder %v2951, 0.0
    %vm3357 = vcmp.gt.f32.partialorder %v3049, 0.0
    %vm3358 = vcmp.gt.f32.partialorder %v3147, 0.0
    %vm3359 = vcmp.gt.f32.partialorder %v3245, 0.0
    %vm3360 = vcmp.gt.f32.partialorder %v3343, 0.0
    %v3361 = vmul.f32 %v2655, 0.2
    %v3362 = vmul.f32 %v2753, 0.2
    %v3363 = vmul.f32 %v2851, 0.2
    %v3364 = vmul.f32 %v2949, 0.2
    %v3365 = vmul.f32 %v3047, 0.2
    %v3366 = vmul.f32 %v3145, 0.2
    %v3367 = vmul.f32 %v3243, 0.2
    %v3368 = vmul.f32 %v3341, 0.2
    %v3369 = vmul.f32 %v2657, 0.2
    %v3370 = vmul.f32 %v2755, 0.2
    %v3371 = vmul.f32 %v2853, 0.2
    %v3372 = vmul.f32 %v2951, 0.2
    %v3373 = vmul.f32 %v3049, 0.2
    %v3374 = vmul.f32 %v3147, 0.2
    %v3375 = vmul.f32 %v3245, 0.2
    %v3376 = vmul.f32 %v3343, 0.2
    %v3377 = vsel %vm3345, %v2655, %v3361
    %v3378 = vsel %vm3346, %v2753, %v3362
    %v3379 = vsel %vm3347, %v2851, %v3363
    %v3380 = vsel %vm3348, %v2949, %v3364
    %v3381 = vsel %vm3349, %v3047, %v3365
    %v3382 = vsel %vm3350, %v3145, %v3366
    %v3383 = vsel %vm3351, %v3243, %v3367
    %v3384 = vsel %vm3352, %v3341, %v3368
    %v3385 = vsel %vm3353, %v2657, %v3369
    %v3386 = vsel %vm3354, %v2755, %v3370
    %v3387 = vsel %vm3355, %v2853, %v3371
    %v3388 = vsel %vm3356, %v2951, %v3372
    %v3389 = vsel %vm3357, %v3049, %v3373
    %v3390 = vsel %vm3358, %v3147, %v3374
    %v3391 = vsel %vm3359, %v3245, %v3375
    %v3392 = vsel %vm3360, %v3343, %v3376
    %v3393 = vpack.c.bf16 %v3385, %v3377
    %v3394 = vpack.c.bf16 %v3386, %v3378
    %v3395 = vpack.c.bf16 %v3387, %v3379
    %v3396 = vpack.c.bf16 %v3388, %v3380
    %v3397 = vpack.c.bf16 %v3389, %v3381
    %v3398 = vpack.c.bf16 %v3390, %v3382
    %v3399 = vpack.c.bf16 %v3391, %v3383
    %v3400 = vpack.c.bf16 %v3392, %v3384
    %v3401 = vld [vmem:[#allocation8] sm:$0xff]
    %v3402 = vld [vmem:[#allocation8 + $0x8] sm:$0xff]
    %v3403 = vld [vmem:[#allocation8 + $0x10] sm:$0xff]
    %v3404 = vld [vmem:[#allocation8 + $0x18] sm:$0xff]
    %v3405 = vld [vmem:[#allocation8 + $0x20] sm:$0xff]
    %v3406 = vld [vmem:[#allocation8 + $0x28] sm:$0xff]
    %v3407 = vld [vmem:[#allocation8 + $0x30] sm:$0xff]
    %v3408 = vld [vmem:[#allocation8 + $0x38] sm:$0xff]
    %v3409 = vld [vmem:[#allocation8 + $0x40] sm:$0xff]
    %v3410 = vld [vmem:[#allocation8 + $0x48] sm:$0xff]
    %v3411 = vld [vmem:[#allocation8 + $0x50] sm:$0xff]
    %v3412 = vld [vmem:[#allocation8 + $0x58] sm:$0xff]
    %v3413 = vld [vmem:[#allocation8 + $0x60] sm:$0xff]
    %v3414 = vld [vmem:[#allocation8 + $0x68] sm:$0xff]
    %v3415 = vld [vmem:[#allocation8 + $0x70] sm:$0xff]
    %v3416 = vld [vmem:[#allocation8 + $0x78] sm:$0xff]
    %v3417 = vld [vmem:[#allocation8 + $0x80] sm:$0xff]
    %v3418 = vld [vmem:[#allocation8 + $0x88] sm:$0xff]
    %v3419 = vld [vmem:[#allocation8 + $0x90] sm:$0xff]
    %v3420 = vld [vmem:[#allocation8 + $0x98] sm:$0xff]
    %v3421 = vld [vmem:[#allocation8 + $0xa0] sm:$0xff]
    %v3422 = vld [vmem:[#allocation8 + $0xa8] sm:$0xff]
    %v3423 = vld [vmem:[#allocation8 + $0xb0] sm:$0xff]
    %v3424 = vld [vmem:[#allocation8 + $0xb8] sm:$0xff]
    %v3425 = vld [vmem:[#allocation8 + $0xc0] sm:$0xff]
    %v3426 = vld [vmem:[#allocation8 + $0xc8] sm:$0xff]
    %v3427 = vld [vmem:[#allocation8 + $0xd0] sm:$0xff]
    %v3428 = vld [vmem:[#allocation8 + $0xd8] sm:$0xff]
    %v3429 = vld [vmem:[#allocation8 + $0xe0] sm:$0xff]
    %v3430 = vld [vmem:[#allocation8 + $0xe8] sm:$0xff]
    %v3431 = vld [vmem:[#allocation8 + $0xf0] sm:$0xff]
    %v3432 = vld [vmem:[#allocation8 + $0xf8] sm:$0xff]
    %v3433 = vld [vmem:[#allocation8 + $0x100] sm:$0xff]
    %v3434 = vld [vmem:[#allocation8 + $0x108] sm:$0xff]
    %v3435 = vld [vmem:[#allocation8 + $0x110] sm:$0xff]
    %v3436 = vld [vmem:[#allocation8 + $0x118] sm:$0xff]
    %v3437 = vld [vmem:[#allocation8 + $0x120] sm:$0xff]
    %v3438 = vld [vmem:[#allocation8 + $0x128] sm:$0xff]
    %v3439 = vld [vmem:[#allocation8 + $0x130] sm:$0xff]
    %v3440 = vld [vmem:[#allocation8 + $0x138] sm:$0xff]
    %v3441 = vld [vmem:[#allocation8 + $0x140] sm:$0xff]
    %v3442 = vld [vmem:[#allocation8 + $0x148] sm:$0xff]
    %v3443 = vld [vmem:[#allocation8 + $0x150] sm:$0xff]
    %v3444 = vld [vmem:[#allocation8 + $0x158] sm:$0xff]
    %v3445 = vld [vmem:[#allocation8 + $0x160] sm:$0xff]
    %v3446 = vld [vmem:[#allocation8 + $0x168] sm:$0xff]
    %v3447 = vld [vmem:[#allocation8 + $0x170] sm:$0xff]
    %v3448 = vld [vmem:[#allocation8 + $0x178] sm:$0xff]
    %v3449 = vld [vmem:[#allocation8 + $0x180] sm:$0xff]
    %v3450 = vld [vmem:[#allocation8 + $0x188] sm:$0xff]
    %v3451 = vld [vmem:[#allocation8 + $0x190] sm:$0xff]
    %v3452 = vld [vmem:[#allocation8 + $0x198] sm:$0xff]
    %v3453 = vld [vmem:[#allocation8 + $0x1a0] sm:$0xff]
    %v3454 = vld [vmem:[#allocation8 + $0x1a8] sm:$0xff]
    %v3455 = vld [vmem:[#allocation8 + $0x1b0] sm:$0xff]
    %v3456 = vld [vmem:[#allocation8 + $0x1b8] sm:$0xff]
    %v3457 = vld [vmem:[#allocation8 + $0x1c0] sm:$0xff]
    %v3458 = vld [vmem:[#allocation8 + $0x1c8] sm:$0xff]
    %v3459 = vld [vmem:[#allocation8 + $0x1d0] sm:$0xff]
    %v3460 = vld [vmem:[#allocation8 + $0x1d8] sm:$0xff]
    %v3461 = vld [vmem:[#allocation8 + $0x1e0] sm:$0xff]
    %v3462 = vld [vmem:[#allocation8 + $0x1e8] sm:$0xff]
    %v3463 = vld [vmem:[#allocation8 + $0x1f0] sm:$0xff]
    %v3464 = vld [vmem:[#allocation8 + $0x1f8] sm:$0xff]
    %v3465 = vld [vmem:[#allocation8 + $0x200] sm:$0xff]
    %v3466 = vld [vmem:[#allocation8 + $0x208] sm:$0xff]
    %v3467 = vld [vmem:[#allocation8 + $0x210] sm:$0xff]
    %v3468 = vld [vmem:[#allocation8 + $0x218] sm:$0xff]
    %v3469 = vld [vmem:[#allocation8 + $0x220] sm:$0xff]
    %v3470 = vld [vmem:[#allocation8 + $0x228] sm:$0xff]
    %v3471 = vld [vmem:[#allocation8 + $0x230] sm:$0xff]
    %v3472 = vld [vmem:[#allocation8 + $0x238] sm:$0xff]
    %v3473 = vld [vmem:[#allocation8 + $0x240] sm:$0xff]
    %v3474 = vld [vmem:[#allocation8 + $0x248] sm:$0xff]
    %v3475 = vld [vmem:[#allocation8 + $0x250] sm:$0xff]
    %v3476 = vld [vmem:[#allocation8 + $0x258] sm:$0xff]
    %v3477 = vld [vmem:[#allocation8 + $0x260] sm:$0xff]
    %v3478 = vld [vmem:[#allocation8 + $0x268] sm:$0xff]
    %v3479 = vld [vmem:[#allocation8 + $0x270] sm:$0xff]
    %v3480 = vld [vmem:[#allocation8 + $0x278] sm:$0xff]
    %v3481 = vld [vmem:[#allocation8 + $0x280] sm:$0xff]
    %v3482 = vld [vmem:[#allocation8 + $0x288] sm:$0xff]
    %v3483 = vld [vmem:[#allocation8 + $0x290] sm:$0xff]
    %v3484 = vld [vmem:[#allocation8 + $0x298] sm:$0xff]
    %v3485 = vld [vmem:[#allocation8 + $0x2a0] sm:$0xff]
    %v3486 = vld [vmem:[#allocation8 + $0x2a8] sm:$0xff]
    %v3487 = vld [vmem:[#allocation8 + $0x2b0] sm:$0xff]
    %v3488 = vld [vmem:[#allocation8 + $0x2b8] sm:$0xff]
    %v3489 = vld [vmem:[#allocation8 + $0x2c0] sm:$0xff]
    %v3490 = vld [vmem:[#allocation8 + $0x2c8] sm:$0xff]
    %v3491 = vld [vmem:[#allocation8 + $0x2d0] sm:$0xff]
    %v3492 = vld [vmem:[#allocation8 + $0x2d8] sm:$0xff]
    %v3493 = vld [vmem:[#allocation8 + $0x2e0] sm:$0xff]
    %v3494 = vld [vmem:[#allocation8 + $0x2e8] sm:$0xff]
    %v3495 = vld [vmem:[#allocation8 + $0x2f0] sm:$0xff]
    %v3496 = vld [vmem:[#allocation8 + $0x2f8] sm:$0xff]
    %v3497 = vld [vmem:[#allocation8 + $0x300] sm:$0xff]
    %v3498 = vld [vmem:[#allocation8 + $0x308] sm:$0xff]
    %v3499 = vld [vmem:[#allocation8 + $0x310] sm:$0xff]
    %v3500 = vld [vmem:[#allocation8 + $0x318] sm:$0xff]
    %v3501 = vld [vmem:[#allocation8 + $0x320] sm:$0xff]
    %v3502 = vld [vmem:[#allocation8 + $0x328] sm:$0xff]
    %v3503 = vld [vmem:[#allocation8 + $0x330] sm:$0xff]
    %v3504 = vld [vmem:[#allocation8 + $0x338] sm:$0xff]
    %v3505 = vld [vmem:[#allocation8 + $0x340] sm:$0xff]
    %v3506 = vld [vmem:[#allocation8 + $0x348] sm:$0xff]
    %v3507 = vld [vmem:[#allocation8 + $0x350] sm:$0xff]
    %v3508 = vld [vmem:[#allocation8 + $0x358] sm:$0xff]
    %v3509 = vld [vmem:[#allocation8 + $0x360] sm:$0xff]
    %v3510 = vld [vmem:[#allocation8 + $0x368] sm:$0xff]
    %v3511 = vld [vmem:[#allocation8 + $0x370] sm:$0xff]
    %v3512 = vld [vmem:[#allocation8 + $0x378] sm:$0xff]
    %v3513 = vld [vmem:[#allocation8 + $0x380] sm:$0xff]
    %v3514 = vld [vmem:[#allocation8 + $0x388] sm:$0xff]
    %v3515 = vld [vmem:[#allocation8 + $0x390] sm:$0xff]
    %v3516 = vld [vmem:[#allocation8 + $0x398] sm:$0xff]
    %v3517 = vld [vmem:[#allocation8 + $0x3a0] sm:$0xff]
    %v3518 = vld [vmem:[#allocation8 + $0x3a8] sm:$0xff]
    %v3519 = vld [vmem:[#allocation8 + $0x3b0] sm:$0xff]
    %v3520 = vld [vmem:[#allocation8 + $0x3b8] sm:$0xff]
    %v3521 = vld [vmem:[#allocation8 + $0x3c0] sm:$0xff]
    %v3522 = vld [vmem:[#allocation8 + $0x3c8] sm:$0xff]
    %v3523 = vld [vmem:[#allocation8 + $0x3d0] sm:$0xff]
    %v3524 = vld [vmem:[#allocation8 + $0x3d8] sm:$0xff]
    %v3525 = vld [vmem:[#allocation8 + $0x3e0] sm:$0xff]
    %v3526 = vld [vmem:[#allocation8 + $0x3e8] sm:$0xff]
    %v3527 = vld [vmem:[#allocation8 + $0x3f0] sm:$0xff]
    %v3528 = vld [vmem:[#allocation8 + $0x3f8] sm:$0xff]
    %v3529 = vld [vmem:[#allocation8 + $0x400] sm:$0xff]
    %v3530 = vld [vmem:[#allocation8 + $0x408] sm:$0xff]
    %v3531 = vld [vmem:[#allocation8 + $0x410] sm:$0xff]
    %v3532 = vld [vmem:[#allocation8 + $0x418] sm:$0xff]
    %v3533 = vld [vmem:[#allocation8 + $0x420] sm:$0xff]
    %v3534 = vld [vmem:[#allocation8 + $0x428] sm:$0xff]
    %v3535 = vld [vmem:[#allocation8 + $0x430] sm:$0xff]
    %v3536 = vld [vmem:[#allocation8 + $0x438] sm:$0xff]
    %v3537 = vld [vmem:[#allocation8 + $0x440] sm:$0xff]
    %v3538 = vld [vmem:[#allocation8 + $0x448] sm:$0xff]
    %v3539 = vld [vmem:[#allocation8 + $0x450] sm:$0xff]
    %v3540 = vld [vmem:[#allocation8 + $0x458] sm:$0xff]
    %v3541 = vld [vmem:[#allocation8 + $0x460] sm:$0xff]
    %v3542 = vld [vmem:[#allocation8 + $0x468] sm:$0xff]
    %v3543 = vld [vmem:[#allocation8 + $0x470] sm:$0xff]
    %v3544 = vld [vmem:[#allocation8 + $0x478] sm:$0xff]
    %v3545 = vld [vmem:[#allocation8 + $0x480] sm:$0xff]
    %v3546 = vld [vmem:[#allocation8 + $0x488] sm:$0xff]
    %v3547 = vld [vmem:[#allocation8 + $0x490] sm:$0xff]
    %v3548 = vld [vmem:[#allocation8 + $0x498] sm:$0xff]
    %v3549 = vld [vmem:[#allocation8 + $0x4a0] sm:$0xff]
    %v3550 = vld [vmem:[#allocation8 + $0x4a8] sm:$0xff]
    %v3551 = vld [vmem:[#allocation8 + $0x4b0] sm:$0xff]
    %v3552 = vld [vmem:[#allocation8 + $0x4b8] sm:$0xff]
    %v3553 = vld [vmem:[#allocation8 + $0x4c0] sm:$0xff]
    %v3554 = vld [vmem:[#allocation8 + $0x4c8] sm:$0xff]
    %v3555 = vld [vmem:[#allocation8 + $0x4d0] sm:$0xff]
    %v3556 = vld [vmem:[#allocation8 + $0x4d8] sm:$0xff]
    %v3557 = vld [vmem:[#allocation8 + $0x4e0] sm:$0xff]
    %v3558 = vld [vmem:[#allocation8 + $0x4e8] sm:$0xff]
    %v3559 = vld [vmem:[#allocation8 + $0x4f0] sm:$0xff]
    %v3560 = vld [vmem:[#allocation8 + $0x4f8] sm:$0xff]
    %v3561 = vld [vmem:[#allocation8 + $0x500] sm:$0xff]
    %v3562 = vld [vmem:[#allocation8 + $0x508] sm:$0xff]
    %v3563 = vld [vmem:[#allocation8 + $0x510] sm:$0xff]
    %v3564 = vld [vmem:[#allocation8 + $0x518] sm:$0xff]
    %v3565 = vld [vmem:[#allocation8 + $0x520] sm:$0xff]
    %v3566 = vld [vmem:[#allocation8 + $0x528] sm:$0xff]
    %v3567 = vld [vmem:[#allocation8 + $0x530] sm:$0xff]
    %v3568 = vld [vmem:[#allocation8 + $0x538] sm:$0xff]
    %v3569 = vld [vmem:[#allocation8 + $0x540] sm:$0xff]
    %v3570 = vld [vmem:[#allocation8 + $0x548] sm:$0xff]
    %v3571 = vld [vmem:[#allocation8 + $0x550] sm:$0xff]
    %v3572 = vld [vmem:[#allocation8 + $0x558] sm:$0xff]
    %v3573 = vld [vmem:[#allocation8 + $0x560] sm:$0xff]
    %v3574 = vld [vmem:[#allocation8 + $0x568] sm:$0xff]
    %v3575 = vld [vmem:[#allocation8 + $0x570] sm:$0xff]
    %v3576 = vld [vmem:[#allocation8 + $0x578] sm:$0xff]
    %v3577 = vld [vmem:[#allocation8 + $0x580] sm:$0xff]
    %v3578 = vld [vmem:[#allocation8 + $0x588] sm:$0xff]
    %v3579 = vld [vmem:[#allocation8 + $0x590] sm:$0xff]
    %v3580 = vld [vmem:[#allocation8 + $0x598] sm:$0xff]
    %v3581 = vld [vmem:[#allocation8 + $0x5a0] sm:$0xff]
    %v3582 = vld [vmem:[#allocation8 + $0x5a8] sm:$0xff]
    %v3583 = vld [vmem:[#allocation8 + $0x5b0] sm:$0xff]
    %v3584 = vld [vmem:[#allocation8 + $0x5b8] sm:$0xff]
    %v3585 = vld [vmem:[#allocation8 + $0x5c0] sm:$0xff]
    %v3586 = vld [vmem:[#allocation8 + $0x5c8] sm:$0xff]
    %v3587 = vld [vmem:[#allocation8 + $0x5d0] sm:$0xff]
    %v3588 = vld [vmem:[#allocation8 + $0x5d8] sm:$0xff]
    %v3589 = vld [vmem:[#allocation8 + $0x5e0] sm:$0xff]
    %v3590 = vld [vmem:[#allocation8 + $0x5e8] sm:$0xff]
    %v3591 = vld [vmem:[#allocation8 + $0x5f0] sm:$0xff]
    %v3592 = vld [vmem:[#allocation8 + $0x5f8] sm:$0xff]
    %v3593 = vld [vmem:[#allocation8 + $0x600] sm:$0xff]
    %v3594 = vld [vmem:[#allocation8 + $0x608] sm:$0xff]
    %v3595 = vld [vmem:[#allocation8 + $0x610] sm:$0xff]
    %v3596 = vld [vmem:[#allocation8 + $0x618] sm:$0xff]
    %v3597 = vld [vmem:[#allocation8 + $0x620] sm:$0xff]
    %v3598 = vld [vmem:[#allocation8 + $0x628] sm:$0xff]
    %v3599 = vld [vmem:[#allocation8 + $0x630] sm:$0xff]
    %v3600 = vld [vmem:[#allocation8 + $0x638] sm:$0xff]
    %v3601 = vld [vmem:[#allocation8 + $0x640] sm:$0xff]
    %v3602 = vld [vmem:[#allocation8 + $0x648] sm:$0xff]
    %v3603 = vld [vmem:[#allocation8 + $0x650] sm:$0xff]
    %v3604 = vld [vmem:[#allocation8 + $0x658] sm:$0xff]
    %v3605 = vld [vmem:[#allocation8 + $0x660] sm:$0xff]
    %v3606 = vld [vmem:[#allocation8 + $0x668] sm:$0xff]
    %v3607 = vld [vmem:[#allocation8 + $0x670] sm:$0xff]
    %v3608 = vld [vmem:[#allocation8 + $0x678] sm:$0xff]
    %v3609 = vld [vmem:[#allocation8 + $0x680] sm:$0xff]
    %v3610 = vld [vmem:[#allocation8 + $0x688] sm:$0xff]
    %v3611 = vld [vmem:[#allocation8 + $0x690] sm:$0xff]
    %v3612 = vld [vmem:[#allocation8 + $0x698] sm:$0xff]
    %v3613 = vld [vmem:[#allocation8 + $0x6a0] sm:$0xff]
    %v3614 = vld [vmem:[#allocation8 + $0x6a8] sm:$0xff]
    %v3615 = vld [vmem:[#allocation8 + $0x6b0] sm:$0xff]
    %v3616 = vld [vmem:[#allocation8 + $0x6b8] sm:$0xff]
    %v3617 = vld [vmem:[#allocation8 + $0x6c0] sm:$0xff]
    %v3618 = vld [vmem:[#allocation8 + $0x6c8] sm:$0xff]
    %v3619 = vld [vmem:[#allocation8 + $0x6d0] sm:$0xff]
    %v3620 = vld [vmem:[#allocation8 + $0x6d8] sm:$0xff]
    %v3621 = vld [vmem:[#allocation8 + $0x6e0] sm:$0xff]
    %v3622 = vld [vmem:[#allocation8 + $0x6e8] sm:$0xff]
    %v3623 = vld [vmem:[#allocation8 + $0x6f0] sm:$0xff]
    %v3624 = vld [vmem:[#allocation8 + $0x6f8] sm:$0xff]
    %v3625 = vld [vmem:[#allocation8 + $0x700] sm:$0xff]
    %v3626 = vld [vmem:[#allocation8 + $0x708] sm:$0xff]
    %v3627 = vld [vmem:[#allocation8 + $0x710] sm:$0xff]
    %v3628 = vld [vmem:[#allocation8 + $0x718] sm:$0xff]
    %v3629 = vld [vmem:[#allocation8 + $0x720] sm:$0xff]
    %v3630 = vld [vmem:[#allocation8 + $0x728] sm:$0xff]
    %v3631 = vld [vmem:[#allocation8 + $0x730] sm:$0xff]
    %v3632 = vld [vmem:[#allocation8 + $0x738] sm:$0xff]
    %v3633 = vld [vmem:[#allocation8 + $0x740] sm:$0xff]
    %v3634 = vld [vmem:[#allocation8 + $0x748] sm:$0xff]
    %v3635 = vld [vmem:[#allocation8 + $0x750] sm:$0xff]
    %v3636 = vld [vmem:[#allocation8 + $0x758] sm:$0xff]
    %v3637 = vld [vmem:[#allocation8 + $0x760] sm:$0xff]
    %v3638 = vld [vmem:[#allocation8 + $0x768] sm:$0xff]
    %v3639 = vld [vmem:[#allocation8 + $0x770] sm:$0xff]
    %v3640 = vld [vmem:[#allocation8 + $0x778] sm:$0xff]
    %v3641 = vld [vmem:[#allocation8 + $0x780] sm:$0xff]
    %v3642 = vld [vmem:[#allocation8 + $0x788] sm:$0xff]
    %v3643 = vld [vmem:[#allocation8 + $0x790] sm:$0xff]
    %v3644 = vld [vmem:[#allocation8 + $0x798] sm:$0xff]
    %v3645 = vld [vmem:[#allocation8 + $0x7a0] sm:$0xff]
    %v3646 = vld [vmem:[#allocation8 + $0x7a8] sm:$0xff]
    %v3647 = vld [vmem:[#allocation8 + $0x7b0] sm:$0xff]
    %v3648 = vld [vmem:[#allocation8 + $0x7b8] sm:$0xff]
    %v3649 = vld [vmem:[#allocation8 + $0x7c0] sm:$0xff]
    %v3650 = vld [vmem:[#allocation8 + $0x7c8] sm:$0xff]
    %v3651 = vld [vmem:[#allocation8 + $0x7d0] sm:$0xff]
    %v3652 = vld [vmem:[#allocation8 + $0x7d8] sm:$0xff]
    %v3653 = vld [vmem:[#allocation8 + $0x7e0] sm:$0xff]
    %v3654 = vld [vmem:[#allocation8 + $0x7e8] sm:$0xff]
    %v3655 = vld [vmem:[#allocation8 + $0x7f0] sm:$0xff]
    %v3656 = vld [vmem:[#allocation8 + $0x7f8] sm:$0xff]
    %v3657 = vld [vmem:[#allocation10] sm:$0xf]
    %v3659 = vperm.slane %v3657, 0
    %v3660 = vperm.slane %v3657, 1
    %v3661 = vperm.slane %v3657, 2
    %v3662 = vperm.slane %v3657, 3
    %v3923 = vunpack.c.l.b16 %v3401
    %v3924 = vunpack.c.h.b16 %v3401
    %v3925 = vunpack.c.l.b16 %v3402
    %v3926 = vunpack.c.h.b16 %v3402
    %v3927 = vunpack.c.l.b16 %v3403
    %v3928 = vunpack.c.h.b16 %v3403
    %v3929 = vunpack.c.l.b16 %v3404
    %v3930 = vunpack.c.h.b16 %v3404
    %v3931 = vunpack.c.l.b16 %v3405
    %v3932 = vunpack.c.h.b16 %v3405
    %v3933 = vunpack.c.l.b16 %v3406
    %v3934 = vunpack.c.h.b16 %v3406
    %v3935 = vunpack.c.l.b16 %v3407
    %v3936 = vunpack.c.h.b16 %v3407
    %v3937 = vunpack.c.l.b16 %v3408
    %v3938 = vunpack.c.h.b16 %v3408
    %v3939 = vunpack.c.l.b16 %v3409
    %v3940 = vunpack.c.h.b16 %v3409
    %v3941 = vunpack.c.l.b16 %v3410
    %v3942 = vunpack.c.h.b16 %v3410
    %v3943 = vunpack.c.l.b16 %v3411
    %v3944 = vunpack.c.h.b16 %v3411
    %v3945 = vunpack.c.l.b16 %v3412
    %v3946 = vunpack.c.h.b16 %v3412
    %v3947 = vunpack.c.l.b16 %v3413
    %v3948 = vunpack.c.h.b16 %v3413
    %v3949 = vunpack.c.l.b16 %v3414
    %v3950 = vunpack.c.h.b16 %v3414
    %v3951 = vunpack.c.l.b16 %v3415
    %v3952 = vunpack.c.h.b16 %v3415
    %v3953 = vunpack.c.l.b16 %v3416
    %v3954 = vunpack.c.h.b16 %v3416
    %v3955 = vunpack.c.l.b16 %v3417
    %v3956 = vunpack.c.h.b16 %v3417
    %v3957 = vunpack.c.l.b16 %v3418
    %v3958 = vunpack.c.h.b16 %v3418
    %v3959 = vunpack.c.l.b16 %v3419
    %v3960 = vunpack.c.h.b16 %v3419
    %v3961 = vunpack.c.l.b16 %v3420
    %v3962 = vunpack.c.h.b16 %v3420
    %v3963 = vunpack.c.l.b16 %v3421
    %v3964 = vunpack.c.h.b16 %v3421
    %v3965 = vunpack.c.l.b16 %v3422
    %v3966 = vunpack.c.h.b16 %v3422
    %v3967 = vunpack.c.l.b16 %v3423
    %v3968 = vunpack.c.h.b16 %v3423
    %v3969 = vunpack.c.l.b16 %v3424
    %v3970 = vunpack.c.h.b16 %v3424
    %v3971 = vunpack.c.l.b16 %v3425
    %v3972 = vunpack.c.h.b16 %v3425
    %v3973 = vunpack.c.l.b16 %v3426
    %v3974 = vunpack.c.h.b16 %v3426
    %v3975 = vunpack.c.l.b16 %v3427
    %v3976 = vunpack.c.h.b16 %v3427
    %v3977 = vunpack.c.l.b16 %v3428
    %v3978 = vunpack.c.h.b16 %v3428
    %v3979 = vunpack.c.l.b16 %v3429
    %v3980 = vunpack.c.h.b16 %v3429
    %v3981 = vunpack.c.l.b16 %v3430
    %v3982 = vunpack.c.h.b16 %v3430
    %v3983 = vunpack.c.l.b16 %v3431
    %v3984 = vunpack.c.h.b16 %v3431
    %v3985 = vunpack.c.l.b16 %v3432
    %v3986 = vunpack.c.h.b16 %v3432
    %v3987 = vunpack.c.l.b16 %v3433
    %v3988 = vunpack.c.h.b16 %v3433
    %v3989 = vunpack.c.l.b16 %v3434
    %v3990 = vunpack.c.h.b16 %v3434
    %v3991 = vunpack.c.l.b16 %v3435
    %v3992 = vunpack.c.h.b16 %v3435
    %v3993 = vunpack.c.l.b16 %v3436
    %v3994 = vunpack.c.h.b16 %v3436
    %v3995 = vunpack.c.l.b16 %v3437
    %v3996 = vunpack.c.h.b16 %v3437
    %v3997 = vunpack.c.l.b16 %v3438
    %v3998 = vunpack.c.h.b16 %v3438
    %v3999 = vunpack.c.l.b16 %v3439
    %v4000 = vunpack.c.h.b16 %v3439
    %v4001 = vunpack.c.l.b16 %v3440
    %v4002 = vunpack.c.h.b16 %v3440
    %v4003 = vunpack.c.l.b16 %v3441
    %v4004 = vunpack.c.h.b16 %v3441
    %v4005 = vunpack.c.l.b16 %v3442
    %v4006 = vunpack.c.h.b16 %v3442
    %v4007 = vunpack.c.l.b16 %v3443
    %v4008 = vunpack.c.h.b16 %v3443
    %v4009 = vunpack.c.l.b16 %v3444
    %v4010 = vunpack.c.h.b16 %v3444
    %v4011 = vunpack.c.l.b16 %v3445
    %v4012 = vunpack.c.h.b16 %v3445
    %v4013 = vunpack.c.l.b16 %v3446
    %v4014 = vunpack.c.h.b16 %v3446
    %v4015 = vunpack.c.l.b16 %v3447
    %v4016 = vunpack.c.h.b16 %v3447
    %v4017 = vunpack.c.l.b16 %v3448
    %v4018 = vunpack.c.h.b16 %v3448
    %v4019 = vunpack.c.l.b16 %v3449
    %v4020 = vunpack.c.h.b16 %v3449
    %v4021 = vunpack.c.l.b16 %v3450
    %v4022 = vunpack.c.h.b16 %v3450
    %v4023 = vunpack.c.l.b16 %v3451
    %v4024 = vunpack.c.h.b16 %v3451
    %v4025 = vunpack.c.l.b16 %v3452
    %v4026 = vunpack.c.h.b16 %v3452
    %v4027 = vunpack.c.l.b16 %v3453
    %v4028 = vunpack.c.h.b16 %v3453
    %v4029 = vunpack.c.l.b16 %v3454
    %v4030 = vunpack.c.h.b16 %v3454
    %v4031 = vunpack.c.l.b16 %v3455
    %v4032 = vunpack.c.h.b16 %v3455
    %v4033 = vunpack.c.l.b16 %v3456
    %v4034 = vunpack.c.h.b16 %v3456
    %v4035 = vunpack.c.l.b16 %v3457
    %v4036 = vunpack.c.h.b16 %v3457
    %v4037 = vunpack.c.l.b16 %v3458
    %v4038 = vunpack.c.h.b16 %v3458
    %v4039 = vunpack.c.l.b16 %v3459
    %v4040 = vunpack.c.h.b16 %v3459
    %v4041 = vunpack.c.l.b16 %v3460
    %v4042 = vunpack.c.h.b16 %v3460
    %v4043 = vunpack.c.l.b16 %v3461
    %v4044 = vunpack.c.h.b16 %v3461
    %v4045 = vunpack.c.l.b16 %v3462
    %v4046 = vunpack.c.h.b16 %v3462
    %v4047 = vunpack.c.l.b16 %v3463
    %v4048 = vunpack.c.h.b16 %v3463
    %v4049 = vunpack.c.l.b16 %v3464
    %v4050 = vunpack.c.h.b16 %v3464
    %v4051 = vunpack.c.l.b16 %v3465
    %v4052 = vunpack.c.h.b16 %v3465
    %v4053 = vunpack.c.l.b16 %v3466
    %v4054 = vunpack.c.h.b16 %v3466
    %v4055 = vunpack.c.l.b16 %v3467
    %v4056 = vunpack.c.h.b16 %v3467
    %v4057 = vunpack.c.l.b16 %v3468
    %v4058 = vunpack.c.h.b16 %v3468
    %v4059 = vunpack.c.l.b16 %v3469
    %v4060 = vunpack.c.h.b16 %v3469
    %v4061 = vunpack.c.l.b16 %v3470
    %v4062 = vunpack.c.h.b16 %v3470
    %v4063 = vunpack.c.l.b16 %v3471
    %v4064 = vunpack.c.h.b16 %v3471
    %v4065 = vunpack.c.l.b16 %v3472
    %v4066 = vunpack.c.h.b16 %v3472
    %v4067 = vunpack.c.l.b16 %v3473
    %v4068 = vunpack.c.h.b16 %v3473
    %v4069 = vunpack.c.l.b16 %v3474
    %v4070 = vunpack.c.h.b16 %v3474
    %v4071 = vunpack.c.l.b16 %v3475
    %v4072 = vunpack.c.h.b16 %v3475
    %v4073 = vunpack.c.l.b16 %v3476
    %v4074 = vunpack.c.h.b16 %v3476
    %v4075 = vunpack.c.l.b16 %v3477
    %v4076 = vunpack.c.h.b16 %v3477
    %v4077 = vunpack.c.l.b16 %v3478
    %v4078 = vunpack.c.h.b16 %v3478
    %v4079 = vunpack.c.l.b16 %v3479
    %v4080 = vunpack.c.h.b16 %v3479
    %v4081 = vunpack.c.l.b16 %v3480
    %v4082 = vunpack.c.h.b16 %v3480
    %v4083 = vunpack.c.l.b16 %v3481
    %v4084 = vunpack.c.h.b16 %v3481
    %v4085 = vunpack.c.l.b16 %v3482
    %v4086 = vunpack.c.h.b16 %v3482
    %v4087 = vunpack.c.l.b16 %v3483
    %v4088 = vunpack.c.h.b16 %v3483
    %v4089 = vunpack.c.l.b16 %v3484
    %v4090 = vunpack.c.h.b16 %v3484
    %v4091 = vunpack.c.l.b16 %v3485
    %v4092 = vunpack.c.h.b16 %v3485
    %v4093 = vunpack.c.l.b16 %v3486
    %v4094 = vunpack.c.h.b16 %v3486
    %v4095 = vunpack.c.l.b16 %v3487
    %v4096 = vunpack.c.h.b16 %v3487
    %v4097 = vunpack.c.l.b16 %v3488
    %v4098 = vunpack.c.h.b16 %v3488
    %v4099 = vunpack.c.l.b16 %v3489
    %v4100 = vunpack.c.h.b16 %v3489
    %v4101 = vunpack.c.l.b16 %v3490
    %v4102 = vunpack.c.h.b16 %v3490
    %v4103 = vunpack.c.l.b16 %v3491
    %v4104 = vunpack.c.h.b16 %v3491
    %v4105 = vunpack.c.l.b16 %v3492
    %v4106 = vunpack.c.h.b16 %v3492
    %v4107 = vunpack.c.l.b16 %v3493
    %v4108 = vunpack.c.h.b16 %v3493
    %v4109 = vunpack.c.l.b16 %v3494
    %v4110 = vunpack.c.h.b16 %v3494
    %v4111 = vunpack.c.l.b16 %v3495
    %v4112 = vunpack.c.h.b16 %v3495
    %v4113 = vunpack.c.l.b16 %v3496
    %v4114 = vunpack.c.h.b16 %v3496
    %v4115 = vunpack.c.l.b16 %v3497
    %v4116 = vunpack.c.h.b16 %v3497
    %v4117 = vunpack.c.l.b16 %v3498
    %v4118 = vunpack.c.h.b16 %v3498
    %v4119 = vunpack.c.l.b16 %v3499
    %v4120 = vunpack.c.h.b16 %v3499
    %v4121 = vunpack.c.l.b16 %v3500
    %v4122 = vunpack.c.h.b16 %v3500
    %v4123 = vunpack.c.l.b16 %v3501
    %v4124 = vunpack.c.h.b16 %v3501
    %v4125 = vunpack.c.l.b16 %v3502
    %v4126 = vunpack.c.h.b16 %v3502
    %v4127 = vunpack.c.l.b16 %v3503
    %v4128 = vunpack.c.h.b16 %v3503
    %v4129 = vunpack.c.l.b16 %v3504
    %v4130 = vunpack.c.h.b16 %v3504
    %v4131 = vunpack.c.l.b16 %v3505
    %v4132 = vunpack.c.h.b16 %v3505
    %v4133 = vunpack.c.l.b16 %v3506
    %v4134 = vunpack.c.h.b16 %v3506
    %v4135 = vunpack.c.l.b16 %v3507
    %v4136 = vunpack.c.h.b16 %v3507
    %v4137 = vunpack.c.l.b16 %v3508
    %v4138 = vunpack.c.h.b16 %v3508
    %v4139 = vunpack.c.l.b16 %v3509
    %v4140 = vunpack.c.h.b16 %v3509
    %v4141 = vunpack.c.l.b16 %v3510
    %v4142 = vunpack.c.h.b16 %v3510
    %v4143 = vunpack.c.l.b16 %v3511
    %v4144 = vunpack.c.h.b16 %v3511
    %v4145 = vunpack.c.l.b16 %v3512
    %v4146 = vunpack.c.h.b16 %v3512
    %v4147 = vunpack.c.l.b16 %v3513
    %v4148 = vunpack.c.h.b16 %v3513
    %v4149 = vunpack.c.l.b16 %v3514
    %v4150 = vunpack.c.h.b16 %v3514
    %v4151 = vunpack.c.l.b16 %v3515
    %v4152 = vunpack.c.h.b16 %v3515
    %v4153 = vunpack.c.l.b16 %v3516
    %v4154 = vunpack.c.h.b16 %v3516
    %v4155 = vunpack.c.l.b16 %v3517
    %v4156 = vunpack.c.h.b16 %v3517
    %v4157 = vunpack.c.l.b16 %v3518
    %v4158 = vunpack.c.h.b16 %v3518
    %v4159 = vunpack.c.l.b16 %v3519
    %v4160 = vunpack.c.h.b16 %v3519
    %v4161 = vunpack.c.l.b16 %v3520
    %v4162 = vunpack.c.h.b16 %v3520
    %v4163 = vunpack.c.l.b16 %v3521
    %v4164 = vunpack.c.h.b16 %v3521
    %v4165 = vunpack.c.l.b16 %v3522
    %v4166 = vunpack.c.h.b16 %v3522
    %v4167 = vunpack.c.l.b16 %v3523
    %v4168 = vunpack.c.h.b16 %v3523
    %v4169 = vunpack.c.l.b16 %v3524
    %v4170 = vunpack.c.h.b16 %v3524
    %v4171 = vunpack.c.l.b16 %v3525
    %v4172 = vunpack.c.h.b16 %v3525
    %v4173 = vunpack.c.l.b16 %v3526
    %v4174 = vunpack.c.h.b16 %v3526
    %v4175 = vunpack.c.l.b16 %v3527
    %v4176 = vunpack.c.h.b16 %v3527
    %v4177 = vunpack.c.l.b16 %v3528
    %v4178 = vunpack.c.h.b16 %v3528
    %v4179 = vunpack.c.l.b16 %v3529
    %v4180 = vunpack.c.h.b16 %v3529
    %v4181 = vunpack.c.l.b16 %v3530
    %v4182 = vunpack.c.h.b16 %v3530
    %v4183 = vunpack.c.l.b16 %v3531
    %v4184 = vunpack.c.h.b16 %v3531
    %v4185 = vunpack.c.l.b16 %v3532
    %v4186 = vunpack.c.h.b16 %v3532
    %v4187 = vunpack.c.l.b16 %v3533
    %v4188 = vunpack.c.h.b16 %v3533
    %v4189 = vunpack.c.l.b16 %v3534
    %v4190 = vunpack.c.h.b16 %v3534
    %v4191 = vunpack.c.l.b16 %v3535
    %v4192 = vunpack.c.h.b16 %v3535
    %v4193 = vunpack.c.l.b16 %v3536
    %v4194 = vunpack.c.h.b16 %v3536
    %v4195 = vunpack.c.l.b16 %v3537
    %v4196 = vunpack.c.h.b16 %v3537
    %v4197 = vunpack.c.l.b16 %v3538
    %v4198 = vunpack.c.h.b16 %v3538
    %v4199 = vunpack.c.l.b16 %v3539
    %v4200 = vunpack.c.h.b16 %v3539
    %v4201 = vunpack.c.l.b16 %v3540
    %v4202 = vunpack.c.h.b16 %v3540
    %v4203 = vunpack.c.l.b16 %v3541
    %v4204 = vunpack.c.h.b16 %v3541
    %v4205 = vunpack.c.l.b16 %v3542
    %v4206 = vunpack.c.h.b16 %v3542
    %v4207 = vunpack.c.l.b16 %v3543
    %v4208 = vunpack.c.h.b16 %v3543
    %v4209 = vunpack.c.l.b16 %v3544
    %v4210 = vunpack.c.h.b16 %v3544
    %v4211 = vunpack.c.l.b16 %v3545
    %v4212 = vunpack.c.h.b16 %v3545
    %v4213 = vunpack.c.l.b16 %v3546
    %v4214 = vunpack.c.h.b16 %v3546
    %v4215 = vunpack.c.l.b16 %v3547
    %v4216 = vunpack.c.h.b16 %v3547
    %v4217 = vunpack.c.l.b16 %v3548
    %v4218 = vunpack.c.h.b16 %v3548
    %v4219 = vunpack.c.l.b16 %v3549
    %v4220 = vunpack.c.h.b16 %v3549
    %v4221 = vunpack.c.l.b16 %v3550
    %v4222 = vunpack.c.h.b16 %v3550
    %v4223 = vunpack.c.l.b16 %v3551
    %v4224 = vunpack.c.h.b16 %v3551
    %v4225 = vunpack.c.l.b16 %v3552
    %v4226 = vunpack.c.h.b16 %v3552
    %v4227 = vunpack.c.l.b16 %v3553
    %v4228 = vunpack.c.h.b16 %v3553
    %v4229 = vunpack.c.l.b16 %v3554
    %v4230 = vunpack.c.h.b16 %v3554
    %v4231 = vunpack.c.l.b16 %v3555
    %v4232 = vunpack.c.h.b16 %v3555
    %v4233 = vunpack.c.l.b16 %v3556
    %v4234 = vunpack.c.h.b16 %v3556
    %v4235 = vunpack.c.l.b16 %v3557
    %v4236 = vunpack.c.h.b16 %v3557
    %v4237 = vunpack.c.l.b16 %v3558
    %v4238 = vunpack.c.h.b16 %v3558
    %v4239 = vunpack.c.l.b16 %v3559
    %v4240 = vunpack.c.h.b16 %v3559
    %v4241 = vunpack.c.l.b16 %v3560
    %v4242 = vunpack.c.h.b16 %v3560
    %v4243 = vunpack.c.l.b16 %v3561
    %v4244 = vunpack.c.h.b16 %v3561
    %v4245 = vunpack.c.l.b16 %v3562
    %v4246 = vunpack.c.h.b16 %v3562
    %v4247 = vunpack.c.l.b16 %v3563
    %v4248 = vunpack.c.h.b16 %v3563
    %v4249 = vunpack.c.l.b16 %v3564
    %v4250 = vunpack.c.h.b16 %v3564
    %v4251 = vunpack.c.l.b16 %v3565
    %v4252 = vunpack.c.h.b16 %v3565
    %v4253 = vunpack.c.l.b16 %v3566
    %v4254 = vunpack.c.h.b16 %v3566
    %v4255 = vunpack.c.l.b16 %v3567
    %v4256 = vunpack.c.h.b16 %v3567
    %v4257 = vunpack.c.l.b16 %v3568
    %v4258 = vunpack.c.h.b16 %v3568
    %v4259 = vunpack.c.l.b16 %v3569
    %v4260 = vunpack.c.h.b16 %v3569
    %v4261 = vunpack.c.l.b16 %v3570
    %v4262 = vunpack.c.h.b16 %v3570
    %v4263 = vunpack.c.l.b16 %v3571
    %v4264 = vunpack.c.h.b16 %v3571
    %v4265 = vunpack.c.l.b16 %v3572
    %v4266 = vunpack.c.h.b16 %v3572
    %v4267 = vunpack.c.l.b16 %v3573
    %v4268 = vunpack.c.h.b16 %v3573
    %v4269 = vunpack.c.l.b16 %v3574
    %v4270 = vunpack.c.h.b16 %v3574
    %v4271 = vunpack.c.l.b16 %v3575
    %v4272 = vunpack.c.h.b16 %v3575
    %v4273 = vunpack.c.l.b16 %v3576
    %v4274 = vunpack.c.h.b16 %v3576
    %v4275 = vunpack.c.l.b16 %v3577
    %v4276 = vunpack.c.h.b16 %v3577
    %v4277 = vunpack.c.l.b16 %v3578
    %v4278 = vunpack.c.h.b16 %v3578
    %v4279 = vunpack.c.l.b16 %v3579
    %v4280 = vunpack.c.h.b16 %v3579
    %v4281 = vunpack.c.l.b16 %v3580
    %v4282 = vunpack.c.h.b16 %v3580
    %v4283 = vunpack.c.l.b16 %v3581
    %v4284 = vunpack.c.h.b16 %v3581
    %v4285 = vunpack.c.l.b16 %v3582
    %v4286 = vunpack.c.h.b16 %v3582
    %v4287 = vunpack.c.l.b16 %v3583
    %v4288 = vunpack.c.h.b16 %v3583
    %v4289 = vunpack.c.l.b16 %v3584
    %v4290 = vunpack.c.h.b16 %v3584
    %v4291 = vunpack.c.l.b16 %v3585
    %v4292 = vunpack.c.h.b16 %v3585
    %v4293 = vunpack.c.l.b16 %v3586
    %v4294 = vunpack.c.h.b16 %v3586
    %v4295 = vunpack.c.l.b16 %v3587
    %v4296 = vunpack.c.h.b16 %v3587
    %v4297 = vunpack.c.l.b16 %v3588
    %v4298 = vunpack.c.h.b16 %v3588
    %v4299 = vunpack.c.l.b16 %v3589
    %v4300 = vunpack.c.h.b16 %v3589
    %v4301 = vunpack.c.l.b16 %v3590
    %v4302 = vunpack.c.h.b16 %v3590
    %v4303 = vunpack.c.l.b16 %v3591
    %v4304 = vunpack.c.h.b16 %v3591
    %v4305 = vunpack.c.l.b16 %v3592
    %v4306 = vunpack.c.h.b16 %v3592
    %v4307 = vunpack.c.l.b16 %v3593
    %v4308 = vunpack.c.h.b16 %v3593
    %v4309 = vunpack.c.l.b16 %v3594
    %v4310 = vunpack.c.h.b16 %v3594
    %v4311 = vunpack.c.l.b16 %v3595
    %v4312 = vunpack.c.h.b16 %v3595
    %v4313 = vunpack.c.l.b16 %v3596
    %v4314 = vunpack.c.h.b16 %v3596
    %v4315 = vunpack.c.l.b16 %v3597
    %v4316 = vunpack.c.h.b16 %v3597
    %v4317 = vunpack.c.l.b16 %v3598
    %v4318 = vunpack.c.h.b16 %v3598
    %v4319 = vunpack.c.l.b16 %v3599
    %v4320 = vunpack.c.h.b16 %v3599
    %v4321 = vunpack.c.l.b16 %v3600
    %v4322 = vunpack.c.h.b16 %v3600
    %v4323 = vunpack.c.l.b16 %v3601
    %v4324 = vunpack.c.h.b16 %v3601
    %v4325 = vunpack.c.l.b16 %v3602
    %v4326 = vunpack.c.h.b16 %v3602
    %v4327 = vunpack.c.l.b16 %v3603
    %v4328 = vunpack.c.h.b16 %v3603
    %v4329 = vunpack.c.l.b16 %v3604
    %v4330 = vunpack.c.h.b16 %v3604
    %v4331 = vunpack.c.l.b16 %v3605
    %v4332 = vunpack.c.h.b16 %v3605
    %v4333 = vunpack.c.l.b16 %v3606
    %v4334 = vunpack.c.h.b16 %v3606
    %v4335 = vunpack.c.l.b16 %v3607
    %v4336 = vunpack.c.h.b16 %v3607
    %v4337 = vunpack.c.l.b16 %v3608
    %v4338 = vunpack.c.h.b16 %v3608
    %v4339 = vunpack.c.l.b16 %v3609
    %v4340 = vunpack.c.h.b16 %v3609
    %v4341 = vunpack.c.l.b16 %v3610
    %v4342 = vunpack.c.h.b16 %v3610
    %v4343 = vunpack.c.l.b16 %v3611
    %v4344 = vunpack.c.h.b16 %v3611
    %v4345 = vunpack.c.l.b16 %v3612
    %v4346 = vunpack.c.h.b16 %v3612
    %v4347 = vunpack.c.l.b16 %v3613
    %v4348 = vunpack.c.h.b16 %v3613
    %v4349 = vunpack.c.l.b16 %v3614
    %v4350 = vunpack.c.h.b16 %v3614
    %v4351 = vunpack.c.l.b16 %v3615
    %v4352 = vunpack.c.h.b16 %v3615
    %v4353 = vunpack.c.l.b16 %v3616
    %v4354 = vunpack.c.h.b16 %v3616
    %v4355 = vunpack.c.l.b16 %v3617
    %v4356 = vunpack.c.h.b16 %v3617
    %v4357 = vunpack.c.l.b16 %v3618
    %v4358 = vunpack.c.h.b16 %v3618
    %v4359 = vunpack.c.l.b16 %v3619
    %v4360 = vunpack.c.h.b16 %v3619
    %v4361 = vunpack.c.l.b16 %v3620
    %v4362 = vunpack.c.h.b16 %v3620
    %v4363 = vunpack.c.l.b16 %v3621
    %v4364 = vunpack.c.h.b16 %v3621
    %v4365 = vunpack.c.l.b16 %v3622
    %v4366 = vunpack.c.h.b16 %v3622
    %v4367 = vunpack.c.l.b16 %v3623
    %v4368 = vunpack.c.h.b16 %v3623
    %v4369 = vunpack.c.l.b16 %v3624
    %v4370 = vunpack.c.h.b16 %v3624
    %v4371 = vunpack.c.l.b16 %v3625
    %v4372 = vunpack.c.h.b16 %v3625
    %v4373 = vunpack.c.l.b16 %v3626
    %v4374 = vunpack.c.h.b16 %v3626
    %v4375 = vunpack.c.l.b16 %v3627
    %v4376 = vunpack.c.h.b16 %v3627
    %v4377 = vunpack.c.l.b16 %v3628
    %v4378 = vunpack.c.h.b16 %v3628
    %v4379 = vunpack.c.l.b16 %v3629
    %v4380 = vunpack.c.h.b16 %v3629
    %v4381 = vunpack.c.l.b16 %v3630
    %v4382 = vunpack.c.h.b16 %v3630
    %v4383 = vunpack.c.l.b16 %v3631
    %v4384 = vunpack.c.h.b16 %v3631
    %v4385 = vunpack.c.l.b16 %v3632
    %v4386 = vunpack.c.h.b16 %v3632
    %v4387 = vunpack.c.l.b16 %v3633
    %v4388 = vunpack.c.h.b16 %v3633
    %v4389 = vunpack.c.l.b16 %v3634
    %v4390 = vunpack.c.h.b16 %v3634
    %v4391 = vunpack.c.l.b16 %v3635
    %v4392 = vunpack.c.h.b16 %v3635
    %v4393 = vunpack.c.l.b16 %v3636
    %v4394 = vunpack.c.h.b16 %v3636
    %v4395 = vunpack.c.l.b16 %v3637
    %v4396 = vunpack.c.h.b16 %v3637
    %v4397 = vunpack.c.l.b16 %v3638
    %v4398 = vunpack.c.h.b16 %v3638
    %v4399 = vunpack.c.l.b16 %v3639
    %v4400 = vunpack.c.h.b16 %v3639
    %v4401 = vunpack.c.l.b16 %v3640
    %v4402 = vunpack.c.h.b16 %v3640
    %v4403 = vunpack.c.l.b16 %v3641
    %v4404 = vunpack.c.h.b16 %v3641
    %v4405 = vunpack.c.l.b16 %v3642
    %v4406 = vunpack.c.h.b16 %v3642
    %v4407 = vunpack.c.l.b16 %v3643
    %v4408 = vunpack.c.h.b16 %v3643
    %v4409 = vunpack.c.l.b16 %v3644
    %v4410 = vunpack.c.h.b16 %v3644
    %v4411 = vunpack.c.l.b16 %v3645
    %v4412 = vunpack.c.h.b16 %v3645
    %v4413 = vunpack.c.l.b16 %v3646
    %v4414 = vunpack.c.h.b16 %v3646
    %v4415 = vunpack.c.l.b16 %v3647
    %v4416 = vunpack.c.h.b16 %v3647
    %v4417 = vunpack.c.l.b16 %v3648
    %v4418 = vunpack.c.h.b16 %v3648
    %v4419 = vunpack.c.l.b16 %v3649
    %v4420 = vunpack.c.h.b16 %v3649
    %v4421 = vunpack.c.l.b16 %v3650
    %v4422 = vunpack.c.h.b16 %v3650
    %v4423 = vunpack.c.l.b16 %v3651
    %v4424 = vunpack.c.h.b16 %v3651
    %v4425 = vunpack.c.l.b16 %v3652
    %v4426 = vunpack.c.h.b16 %v3652
    %v4427 = vunpack.c.l.b16 %v3653
    %v4428 = vunpack.c.h.b16 %v3653
    %v4429 = vunpack.c.l.b16 %v3654
    %v4430 = vunpack.c.h.b16 %v3654
    %v4431 = vunpack.c.l.b16 %v3655
    %v4432 = vunpack.c.h.b16 %v3655
    %v4433 = vunpack.c.l.b16 %v3656
    %v4434 = vunpack.c.h.b16 %v3656
    %v4435 = vpack.c.b16 %v3927, %v3923
    %v4436 = vpack.c.b16 %v3928, %v3924
    %v4437 = vpack.c.b16 %v3929, %v3925
    %v4438 = vpack.c.b16 %v3930, %v3926
    %v4439 = vpack.c.b16 %v3935, %v3931
    %v4440 = vpack.c.b16 %v3936, %v3932
    %v4441 = vpack.c.b16 %v3937, %v3933
    %v4442 = vpack.c.b16 %v3938, %v3934
    %v4443 = vpack.c.b16 %v3943, %v3939
    %v4444 = vpack.c.b16 %v3944, %v3940
    %v4445 = vpack.c.b16 %v3945, %v3941
    %v4446 = vpack.c.b16 %v3946, %v3942
    %v4447 = vpack.c.b16 %v3951, %v3947
    %v4448 = vpack.c.b16 %v3952, %v3948
    %v4449 = vpack.c.b16 %v3953, %v3949
    %v4450 = vpack.c.b16 %v3954, %v3950
    %v4451 = vpack.c.b16 %v3959, %v3955
    %v4452 = vpack.c.b16 %v3960, %v3956
    %v4453 = vpack.c.b16 %v3961, %v3957
    %v4454 = vpack.c.b16 %v3962, %v3958
    %v4455 = vpack.c.b16 %v3967, %v3963
    %v4456 = vpack.c.b16 %v3968, %v3964
    %v4457 = vpack.c.b16 %v3969, %v3965
    %v4458 = vpack.c.b16 %v3970, %v3966
    %v4459 = vpack.c.b16 %v3975, %v3971
    %v4460 = vpack.c.b16 %v3976, %v3972
    %v4461 = vpack.c.b16 %v3977, %v3973
    %v4462 = vpack.c.b16 %v3978, %v3974
    %v4463 = vpack.c.b16 %v3983, %v3979
    %v4464 = vpack.c.b16 %v3984, %v3980
    %v4465 = vpack.c.b16 %v3985, %v3981
    %v4466 = vpack.c.b16 %v3986, %v3982
    %v4467 = vpack.c.b16 %v3991, %v3987
    %v4468 = vpack.c.b16 %v3992, %v3988
    %v4469 = vpack.c.b16 %v3993, %v3989
    %v4470 = vpack.c.b16 %v3994, %v3990
    %v4471 = vpack.c.b16 %v3999, %v3995
    %v4472 = vpack.c.b16 %v4000, %v3996
    %v4473 = vpack.c.b16 %v4001, %v3997
    %v4474 = vpack.c.b16 %v4002, %v3998
    %v4475 = vpack.c.b16 %v4007, %v4003
    %v4476 = vpack.c.b16 %v4008, %v4004
    %v4477 = vpack.c.b16 %v4009, %v4005
    %v4478 = vpack.c.b16 %v4010, %v4006
    %v4479 = vpack.c.b16 %v4015, %v4011
    %v4480 = vpack.c.b16 %v4016, %v4012
    %v4481 = vpack.c.b16 %v4017, %v4013
    %v4482 = vpack.c.b16 %v4018, %v4014
    %v4483 = vpack.c.b16 %v4023, %v4019
    %v4484 = vpack.c.b16 %v4024, %v4020
    %v4485 = vpack.c.b16 %v4025, %v4021
    %v4486 = vpack.c.b16 %v4026, %v4022
    %v4487 = vpack.c.b16 %v4031, %v4027
    %v4488 = vpack.c.b16 %v4032, %v4028
    %v4489 = vpack.c.b16 %v4033, %v4029
    %v4490 = vpack.c.b16 %v4034, %v4030
    %v4491 = vpack.c.b16 %v4039, %v4035
    %v4492 = vpack.c.b16 %v4040, %v4036
    %v4493 = vpack.c.b16 %v4041, %v4037
    %v4494 = vpack.c.b16 %v4042, %v4038
    %v4495 = vpack.c.b16 %v4047, %v4043
    %v4496 = vpack.c.b16 %v4048, %v4044
    %v4497 = vpack.c.b16 %v4049, %v4045
    %v4498 = vpack.c.b16 %v4050, %v4046
    %v4499 = vpack.c.b16 %v4055, %v4051
    %v4500 = vpack.c.b16 %v4056, %v4052
    %v4501 = vpack.c.b16 %v4057, %v4053
    %v4502 = vpack.c.b16 %v4058, %v4054
    %v4503 = vpack.c.b16 %v4063, %v4059
    %v4504 = vpack.c.b16 %v4064, %v4060
    %v4505 = vpack.c.b16 %v4065, %v4061
    %v4506 = vpack.c.b16 %v4066, %v4062
    %v4507 = vpack.c.b16 %v4071, %v4067
    %v4508 = vpack.c.b16 %v4072, %v4068
    %v4509 = vpack.c.b16 %v4073, %v4069
    %v4510 = vpack.c.b16 %v4074, %v4070
    %v4511 = vpack.c.b16 %v4079, %v4075
    %v4512 = vpack.c.b16 %v4080, %v4076
    %v4513 = vpack.c.b16 %v4081, %v4077
    %v4514 = vpack.c.b16 %v4082, %v4078
    %v4515 = vpack.c.b16 %v4087, %v4083
    %v4516 = vpack.c.b16 %v4088, %v4084
    %v4517 = vpack.c.b16 %v4089, %v4085
    %v4518 = vpack.c.b16 %v4090, %v4086
    %v4519 = vpack.c.b16 %v4095, %v4091
    %v4520 = vpack.c.b16 %v4096, %v4092
    %v4521 = vpack.c.b16 %v4097, %v4093
    %v4522 = vpack.c.b16 %v4098, %v4094
    %v4523 = vpack.c.b16 %v4103, %v4099
    %v4524 = vpack.c.b16 %v4104, %v4100
    %v4525 = vpack.c.b16 %v4105, %v4101
    %v4526 = vpack.c.b16 %v4106, %v4102
    %v4527 = vpack.c.b16 %v4111, %v4107
    %v4528 = vpack.c.b16 %v4112, %v4108
    %v4529 = vpack.c.b16 %v4113, %v4109
    %v4530 = vpack.c.b16 %v4114, %v4110
    %v4531 = vpack.c.b16 %v4119, %v4115
    %v4532 = vpack.c.b16 %v4120, %v4116
    %v4533 = vpack.c.b16 %v4121, %v4117
    %v4534 = vpack.c.b16 %v4122, %v4118
    %v4535 = vpack.c.b16 %v4127, %v4123
    %v4536 = vpack.c.b16 %v4128, %v4124
    %v4537 = vpack.c.b16 %v4129, %v4125
    %v4538 = vpack.c.b16 %v4130, %v4126
    %v4539 = vpack.c.b16 %v4135, %v4131
    %v4540 = vpack.c.b16 %v4136, %v4132
    %v4541 = vpack.c.b16 %v4137, %v4133
    %v4542 = vpack.c.b16 %v4138, %v4134
    %v4543 = vpack.c.b16 %v4143, %v4139
    %v4544 = vpack.c.b16 %v4144, %v4140
    %v4545 = vpack.c.b16 %v4145, %v4141
    %v4546 = vpack.c.b16 %v4146, %v4142
    %v4547 = vpack.c.b16 %v4151, %v4147
    %v4548 = vpack.c.b16 %v4152, %v4148
    %v4549 = vpack.c.b16 %v4153, %v4149
    %v4550 = vpack.c.b16 %v4154, %v4150
    %v4551 = vpack.c.b16 %v4159, %v4155
    %v4552 = vpack.c.b16 %v4160, %v4156
    %v4553 = vpack.c.b16 %v4161, %v4157
    %v4554 = vpack.c.b16 %v4162, %v4158
    %v4555 = vpack.c.b16 %v4167, %v4163
    %v4556 = vpack.c.b16 %v4168, %v4164
    %v4557 = vpack.c.b16 %v4169, %v4165
    %v4558 = vpack.c.b16 %v4170, %v4166
    %v4559 = vpack.c.b16 %v4175, %v4171
    %v4560 = vpack.c.b16 %v4176, %v4172
    %v4561 = vpack.c.b16 %v4177, %v4173
    %v4562 = vpack.c.b16 %v4178, %v4174
    %v4563 = vpack.c.b16 %v4183, %v4179
    %v4564 = vpack.c.b16 %v4184, %v4180
    %v4565 = vpack.c.b16 %v4185, %v4181
    %v4566 = vpack.c.b16 %v4186, %v4182
    %v4567 = vpack.c.b16 %v4191, %v4187
    %v4568 = vpack.c.b16 %v4192, %v4188
    %v4569 = vpack.c.b16 %v4193, %v4189
    %v4570 = vpack.c.b16 %v4194, %v4190
    %v4571 = vpack.c.b16 %v4199, %v4195
    %v4572 = vpack.c.b16 %v4200, %v4196
    %v4573 = vpack.c.b16 %v4201, %v4197
    %v4574 = vpack.c.b16 %v4202, %v4198
    %v4575 = vpack.c.b16 %v4207, %v4203
    %v4576 = vpack.c.b16 %v4208, %v4204
    %v4577 = vpack.c.b16 %v4209, %v4205
    %v4578 = vpack.c.b16 %v4210, %v4206
    %v4579 = vpack.c.b16 %v4215, %v4211
    %v4580 = vpack.c.b16 %v4216, %v4212
    %v4581 = vpack.c.b16 %v4217, %v4213
    %v4582 = vpack.c.b16 %v4218, %v4214
    %v4583 = vpack.c.b16 %v4223, %v4219
    %v4584 = vpack.c.b16 %v4224, %v4220
    %v4585 = vpack.c.b16 %v4225, %v4221
    %v4586 = vpack.c.b16 %v4226, %v4222
    %v4587 = vpack.c.b16 %v4231, %v4227
    %v4588 = vpack.c.b16 %v4232, %v4228
    %v4589 = vpack.c.b16 %v4233, %v4229
    %v4590 = vpack.c.b16 %v4234, %v4230
    %v4591 = vpack.c.b16 %v4239, %v4235
    %v4592 = vpack.c.b16 %v4240, %v4236
    %v4593 = vpack.c.b16 %v4241, %v4237
    %v4594 = vpack.c.b16 %v4242, %v4238
    %v4595 = vpack.c.b16 %v4247, %v4243
    %v4596 = vpack.c.b16 %v4248, %v4244
    %v4597 = vpack.c.b16 %v4249, %v4245
    %v4598 = vpack.c.b16 %v4250, %v4246
    %v4599 = vpack.c.b16 %v4255, %v4251
    %v4600 = vpack.c.b16 %v4256, %v4252
    %v4601 = vpack.c.b16 %v4257, %v4253
    %v4602 = vpack.c.b16 %v4258, %v4254
    %v4603 = vpack.c.b16 %v4263, %v4259
    %v4604 = vpack.c.b16 %v4264, %v4260
    %v4605 = vpack.c.b16 %v4265, %v4261
    %v4606 = vpack.c.b16 %v4266, %v4262
    %v4607 = vpack.c.b16 %v4271, %v4267
    %v4608 = vpack.c.b16 %v4272, %v4268
    %v4609 = vpack.c.b16 %v4273, %v4269
    %v4610 = vpack.c.b16 %v4274, %v4270
    %v4611 = vpack.c.b16 %v4279, %v4275
    %v4612 = vpack.c.b16 %v4280, %v4276
    %v4613 = vpack.c.b16 %v4281, %v4277
    %v4614 = vpack.c.b16 %v4282, %v4278
    %v4615 = vpack.c.b16 %v4287, %v4283
    %v4616 = vpack.c.b16 %v4288, %v4284
    %v4617 = vpack.c.b16 %v4289, %v4285
    %v4618 = vpack.c.b16 %v4290, %v4286
    %v4619 = vpack.c.b16 %v4295, %v4291
    %v4620 = vpack.c.b16 %v4296, %v4292
    %v4621 = vpack.c.b16 %v4297, %v4293
    %v4622 = vpack.c.b16 %v4298, %v4294
    %v4623 = vpack.c.b16 %v4303, %v4299
    %v4624 = vpack.c.b16 %v4304, %v4300
    %v4625 = vpack.c.b16 %v4305, %v4301
    %v4626 = vpack.c.b16 %v4306, %v4302
    %v4627 = vpack.c.b16 %v4311, %v4307
    %v4628 = vpack.c.b16 %v4312, %v4308
    %v4629 = vpack.c.b16 %v4313, %v4309
    %v4630 = vpack.c.b16 %v4314, %v4310
    %v4631 = vpack.c.b16 %v4319, %v4315
    %v4632 = vpack.c.b16 %v4320, %v4316
    %v4633 = vpack.c.b16 %v4321, %v4317
    %v4634 = vpack.c.b16 %v4322, %v4318
    %v4635 = vpack.c.b16 %v4327, %v4323
    %v4636 = vpack.c.b16 %v4328, %v4324
    %v4637 = vpack.c.b16 %v4329, %v4325
    %v4638 = vpack.c.b16 %v4330, %v4326
    %v4639 = vpack.c.b16 %v4335, %v4331
    %v4640 = vpack.c.b16 %v4336, %v4332
    %v4641 = vpack.c.b16 %v4337, %v4333
    %v4642 = vpack.c.b16 %v4338, %v4334
    %v4643 = vpack.c.b16 %v4343, %v4339
    %v4644 = vpack.c.b16 %v4344, %v4340
    %v4645 = vpack.c.b16 %v4345, %v4341
    %v4646 = vpack.c.b16 %v4346, %v4342
    %v4647 = vpack.c.b16 %v4351, %v4347
    %v4648 = vpack.c.b16 %v4352, %v4348
    %v4649 = vpack.c.b16 %v4353, %v4349
    %v4650 = vpack.c.b16 %v4354, %v4350
    %v4651 = vpack.c.b16 %v4359, %v4355
    %v4652 = vpack.c.b16 %v4360, %v4356
    %v4653 = vpack.c.b16 %v4361, %v4357
    %v4654 = vpack.c.b16 %v4362, %v4358
    %v4655 = vpack.c.b16 %v4367, %v4363
    %v4656 = vpack.c.b16 %v4368, %v4364
    %v4657 = vpack.c.b16 %v4369, %v4365
    %v4658 = vpack.c.b16 %v4370, %v4366
    %v4659 = vpack.c.b16 %v4375, %v4371
    %v4660 = vpack.c.b16 %v4376, %v4372
    %v4661 = vpack.c.b16 %v4377, %v4373
    %v4662 = vpack.c.b16 %v4378, %v4374
    %v4663 = vpack.c.b16 %v4383, %v4379
    %v4664 = vpack.c.b16 %v4384, %v4380
    %v4665 = vpack.c.b16 %v4385, %v4381
    %v4666 = vpack.c.b16 %v4386, %v4382
    %v4667 = vpack.c.b16 %v4391, %v4387
    %v4668 = vpack.c.b16 %v4392, %v4388
    %v4669 = vpack.c.b16 %v4393, %v4389
    %v4670 = vpack.c.b16 %v4394, %v4390
    %v4671 = vpack.c.b16 %v4399, %v4395
    %v4672 = vpack.c.b16 %v4400, %v4396
    %v4673 = vpack.c.b16 %v4401, %v4397
    %v4674 = vpack.c.b16 %v4402, %v4398
    %v4675 = vpack.c.b16 %v4407, %v4403
    %v4676 = vpack.c.b16 %v4408, %v4404
    %v4677 = vpack.c.b16 %v4409, %v4405
    %v4678 = vpack.c.b16 %v4410, %v4406
    %v4679 = vpack.c.b16 %v4415, %v4411
    %v4680 = vpack.c.b16 %v4416, %v4412
    %v4681 = vpack.c.b16 %v4417, %v4413
    %v4682 = vpack.c.b16 %v4418, %v4414
    %v4683 = vpack.c.b16 %v4423, %v4419
    %v4684 = vpack.c.b16 %v4424, %v4420
    %v4685 = vpack.c.b16 %v4425, %v4421
    %v4686 = vpack.c.b16 %v4426, %v4422
    %v4687 = vpack.c.b16 %v4431, %v4427
    %v4688 = vpack.c.b16 %v4432, %v4428
    %v4689 = vpack.c.b16 %v4433, %v4429
    %v4690 = vpack.c.b16 %v4434, %v4430
    %4947 = vmatpush.bf16.msra.mxu0 %v4463
    %4948 = vmatpush.bf16.msra.mxu0 %v4459
    %4949 = vmatpush.bf16.msra.mxu0 %v4455
    %4950 = vmatpush.bf16.msra.mxu0 %v4451
    %4951 = vmatpush.bf16.msra.mxu0 %v4447
    %4952 = vmatpush.bf16.msra.mxu0 %v4443
    %4953 = vmatpush.bf16.msra.mxu0 %v4439
    %4954 = vmatpush.bf16.msra.mxu0 %v4435
    %4955 = vmatmul.bf16.gmra.mxu0 %v3393
    %v4956 = vpop.f32.mrf.mxu0
    %v4957 = vadd.f32 %v3659, %v4956
    %v4958 = vpop.f32.mrf.mxu0
    %v4959 = vadd.f32 %v3659, %v4958
    %4960 = vdwg.mxu0
    %4961 = vmatpush.bf16.msra.mxu0 %v4495
    %4962 = vmatpush.bf16.msra.mxu0 %v4491
    %4963 = vmatpush.bf16.msra.mxu0 %v4487
    %4964 = vmatpush.bf16.msra.mxu0 %v4483
    %4965 = vmatpush.bf16.msra.mxu0 %v4479
    %4966 = vmatpush.bf16.msra.mxu0 %v4475
    %4967 = vmatpush.bf16.msra.mxu0 %v4471
    %4968 = vmatpush.bf16.msra.mxu0 %v4467
    %4969 = vmatmul.bf16.gmra.mxu0 %v3394
    %v4970 = vpop.f32.mrf.mxu0
    %v4971 = vadd.f32 %v4957, %v4970
    %v4972 = vpop.f32.mrf.mxu0
    %v4973 = vadd.f32 %v4959, %v4972
    %4974 = vdwg.mxu0
    %4975 = vmatpush.bf16.msra.mxu0 %v4527
    %4976 = vmatpush.bf16.msra.mxu0 %v4523
    %4977 = vmatpush.bf16.msra.mxu0 %v4519
    %4978 = vmatpush.bf16.msra.mxu0 %v4515
    %4979 = vmatpush.bf16.msra.mxu0 %v4511
    %4980 = vmatpush.bf16.msra.mxu0 %v4507
    %4981 = vmatpush.bf16.msra.mxu0 %v4503
    %4982 = vmatpush.bf16.msra.mxu0 %v4499
    %4983 = vmatmul.bf16.gmra.mxu0 %v3395
    %v4984 = vpop.f32.mrf.mxu0
    %v4985 = vadd.f32 %v4971, %v4984
    %v4986 = vpop.f32.mrf.mxu0
    %v4987 = vadd.f32 %v4973, %v4986
    %4988 = vdwg.mxu0
    %4989 = vmatpush.bf16.msra.mxu0 %v4559
    %4990 = vmatpush.bf16.msra.mxu0 %v4555
    %4991 = vmatpush.bf16.msra.mxu0 %v4551
    %4992 = vmatpush.bf16.msra.mxu0 %v4547
    %4993 = vmatpush.bf16.msra.mxu0 %v4543
    %4994 = vmatpush.bf16.msra.mxu0 %v4539
    %4995 = vmatpush.bf16.msra.mxu0 %v4535
    %4996 = vmatpush.bf16.msra.mxu0 %v4531
    %4997 = vmatmul.bf16.gmra.mxu0 %v3396
    %v4998 = vpop.f32.mrf.mxu0
    %v4999 = vadd.f32 %v4985, %v4998
    %v5000 = vpop.f32.mrf.mxu0
    %v5001 = vadd.f32 %v4987, %v5000
    %5002 = vdwg.mxu0
    %5003 = vmatpush.bf16.msra.mxu0 %v4591
    %5004 = vmatpush.bf16.msra.mxu0 %v4587
    %5005 = vmatpush.bf16.msra.mxu0 %v4583
    %5006 = vmatpush.bf16.msra.mxu0 %v4579
    %5007 = vmatpush.bf16.msra.mxu0 %v4575
    %5008 = vmatpush.bf16.msra.mxu0 %v4571
    %5009 = vmatpush.bf16.msra.mxu0 %v4567
    %5010 = vmatpush.bf16.msra.mxu0 %v4563
    %5011 = vmatmul.bf16.gmra.mxu0 %v3397
    %v5012 = vpop.f32.mrf.mxu0
    %v5013 = vadd.f32 %v4999, %v5012
    %v5014 = vpop.f32.mrf.mxu0
    %v5015 = vadd.f32 %v5001, %v5014
    %5016 = vdwg.mxu0
    %5017 = vmatpush.bf16.msra.mxu0 %v4623
    %5018 = vmatpush.bf16.msra.mxu0 %v4619
    %5019 = vmatpush.bf16.msra.mxu0 %v4615
    %5020 = vmatpush.bf16.msra.mxu0 %v4611
    %5021 = vmatpush.bf16.msra.mxu0 %v4607
    %5022 = vmatpush.bf16.msra.mxu0 %v4603
    %5023 = vmatpush.bf16.msra.mxu0 %v4599
    %5024 = vmatpush.bf16.msra.mxu0 %v4595
    %5025 = vmatmul.bf16.gmra.mxu0 %v3398
    %v5026 = vpop.f32.mrf.mxu0
    %v5027 = vadd.f32 %v5013, %v5026
    %v5028 = vpop.f32.mrf.mxu0
    %v5029 = vadd.f32 %v5015, %v5028
    %5030 = vdwg.mxu0
    %5031 = vmatpush.bf16.msra.mxu0 %v4655
    %5032 = vmatpush.bf16.msra.mxu0 %v4651
    %5033 = vmatpush.bf16.msra.mxu0 %v4647
    %5034 = vmatpush.bf16.msra.mxu0 %v4643
    %5035 = vmatpush.bf16.msra.mxu0 %v4639
    %5036 = vmatpush.bf16.msra.mxu0 %v4635
    %5037 = vmatpush.bf16.msra.mxu0 %v4631
    %5038 = vmatpush.bf16.msra.mxu0 %v4627
    %5039 = vmatmul.bf16.gmra.mxu0 %v3399
    %v5040 = vpop.f32.mrf.mxu0
    %v5041 = vadd.f32 %v5027, %v5040
    %v5042 = vpop.f32.mrf.mxu0
    %v5043 = vadd.f32 %v5029, %v5042
    %5044 = vdwg.mxu0
    %5045 = vmatpush.bf16.msra.mxu0 %v4687
    %5046 = vmatpush.bf16.msra.mxu0 %v4683
    %5047 = vmatpush.bf16.msra.mxu0 %v4679
    %5048 = vmatpush.bf16.msra.mxu0 %v4675
    %5049 = vmatpush.bf16.msra.mxu0 %v4671
    %5050 = vmatpush.bf16.msra.mxu0 %v4667
    %5051 = vmatpush.bf16.msra.mxu0 %v4663
    %5052 = vmatpush.bf16.msra.mxu0 %v4659
    %5053 = vmatmul.bf16.gmra.mxu0 %v3400
    %v5054 = vpop.f32.mrf.mxu0
    %v5055 = vadd.f32 %v5041, %v5054
    %v5056 = vpop.f32.mrf.mxu0
    %v5057 = vadd.f32 %v5043, %v5056
    %5058 = vdwg.mxu0
    %5059 = vmatpush.bf16.msra.mxu0 %v4464
    %5060 = vmatpush.bf16.msra.mxu0 %v4460
    %5061 = vmatpush.bf16.msra.mxu0 %v4456
    %5062 = vmatpush.bf16.msra.mxu0 %v4452
    %5063 = vmatpush.bf16.msra.mxu0 %v4448
    %5064 = vmatpush.bf16.msra.mxu0 %v4444
    %5065 = vmatpush.bf16.msra.mxu0 %v4440
    %5066 = vmatpush.bf16.msra.mxu0 %v4436
    %5067 = vmatmul.bf16.gmra.mxu0 %v3393
    %v5068 = vpop.f32.mrf.mxu0
    %v5069 = vadd.f32 %v3660, %v5068
    %v5070 = vpop.f32.mrf.mxu0
    %v5071 = vadd.f32 %v3660, %v5070
    %5072 = vdwg.mxu0
    %5073 = vmatpush.bf16.msra.mxu0 %v4496
    %5074 = vmatpush.bf16.msra.mxu0 %v4492
    %5075 = vmatpush.bf16.msra.mxu0 %v4488
    %5076 = vmatpush.bf16.msra.mxu0 %v4484
    %5077 = vmatpush.bf16.msra.mxu0 %v4480
    %5078 = vmatpush.bf16.msra.mxu0 %v4476
    %5079 = vmatpush.bf16.msra.mxu0 %v4472
    %5080 = vmatpush.bf16.msra.mxu0 %v4468
    %5081 = vmatmul.bf16.gmra.mxu0 %v3394
    %v5082 = vpop.f32.mrf.mxu0
    %v5083 = vadd.f32 %v5069, %v5082
    %v5084 = vpop.f32.mrf.mxu0
    %v5085 = vadd.f32 %v5071, %v5084
    %5086 = vdwg.mxu0
    %5087 = vmatpush.bf16.msra.mxu0 %v4528
    %5088 = vmatpush.bf16.msra.mxu0 %v4524
    %5089 = vmatpush.bf16.msra.mxu0 %v4520
    %5090 = vmatpush.bf16.msra.mxu0 %v4516
    %5091 = vmatpush.bf16.msra.mxu0 %v4512
    %5092 = vmatpush.bf16.msra.mxu0 %v4508
    %5093 = vmatpush.bf16.msra.mxu0 %v4504
    %5094 = vmatpush.bf16.msra.mxu0 %v4500
    %5095 = vmatmul.bf16.gmra.mxu0 %v3395
    %v5096 = vpop.f32.mrf.mxu0
    %v5097 = vadd.f32 %v5083, %v5096
    %v5098 = vpop.f32.mrf.mxu0
    %v5099 = vadd.f32 %v5085, %v5098
    %5100 = vdwg.mxu0
    %5101 = vmatpush.bf16.msra.mxu0 %v4560
    %5102 = vmatpush.bf16.msra.mxu0 %v4556
    %5103 = vmatpush.bf16.msra.mxu0 %v4552
    %5104 = vmatpush.bf16.msra.mxu0 %v4548
    %5105 = vmatpush.bf16.msra.mxu0 %v4544
    %5106 = vmatpush.bf16.msra.mxu0 %v4540
    %5107 = vmatpush.bf16.msra.mxu0 %v4536
    %5108 = vmatpush.bf16.msra.mxu0 %v4532
    %5109 = vmatmul.bf16.gmra.mxu0 %v3396
    %v5110 = vpop.f32.mrf.mxu0
    %v5111 = vadd.f32 %v5097, %v5110
    %v5112 = vpop.f32.mrf.mxu0
    %v5113 = vadd.f32 %v5099, %v5112
    %5114 = vdwg.mxu0
    %5115 = vmatpush.bf16.msra.mxu0 %v4592
    %5116 = vmatpush.bf16.msra.mxu0 %v4588
    %5117 = vmatpush.bf16.msra.mxu0 %v4584
    %5118 = vmatpush.bf16.msra.mxu0 %v4580
    %5119 = vmatpush.bf16.msra.mxu0 %v4576
    %5120 = vmatpush.bf16.msra.mxu0 %v4572
    %5121 = vmatpush.bf16.msra.mxu0 %v4568
    %5122 = vmatpush.bf16.msra.mxu0 %v4564
    %5123 = vmatmul.bf16.gmra.mxu0 %v3397
    %v5124 = vpop.f32.mrf.mxu0
    %v5125 = vadd.f32 %v5111, %v5124
    %v5126 = vpop.f32.mrf.mxu0
    %v5127 = vadd.f32 %v5113, %v5126
    %5128 = vdwg.mxu0
    %5129 = vmatpush.bf16.msra.mxu0 %v4624
    %5130 = vmatpush.bf16.msra.mxu0 %v4620
    %5131 = vmatpush.bf16.msra.mxu0 %v4616
    %5132 = vmatpush.bf16.msra.mxu0 %v4612
    %5133 = vmatpush.bf16.msra.mxu0 %v4608
    %5134 = vmatpush.bf16.msra.mxu0 %v4604
    %5135 = vmatpush.bf16.msra.mxu0 %v4600
    %5136 = vmatpush.bf16.msra.mxu0 %v4596
    %5137 = vmatmul.bf16.gmra.mxu0 %v3398
    %v5138 = vpop.f32.mrf.mxu0
    %v5139 = vadd.f32 %v5125, %v5138
    %v5140 = vpop.f32.mrf.mxu0
    %v5141 = vadd.f32 %v5127, %v5140
    %5142 = vdwg.mxu0
    %5143 = vmatpush.bf16.msra.mxu0 %v4656
    %5144 = vmatpush.bf16.msra.mxu0 %v4652
    %5145 = vmatpush.bf16.msra.mxu0 %v4648
    %5146 = vmatpush.bf16.msra.mxu0 %v4644
    %5147 = vmatpush.bf16.msra.mxu0 %v4640
    %5148 = vmatpush.bf16.msra.mxu0 %v4636
    %5149 = vmatpush.bf16.msra.mxu0 %v4632
    %5150 = vmatpush.bf16.msra.mxu0 %v4628
    %5151 = vmatmul.bf16.gmra.mxu0 %v3399
    %v5152 = vpop.f32.mrf.mxu0
    %v5153 = vadd.f32 %v5139, %v5152
    %v5154 = vpop.f32.mrf.mxu0
    %v5155 = vadd.f32 %v5141, %v5154
    %5156 = vdwg.mxu0
    %5157 = vmatpush.bf16.msra.mxu0 %v4688
    %5158 = vmatpush.bf16.msra.mxu0 %v4684
    %5159 = vmatpush.bf16.msra.mxu0 %v4680
    %5160 = vmatpush.bf16.msra.mxu0 %v4676
    %5161 = vmatpush.bf16.msra.mxu0 %v4672
    %5162 = vmatpush.bf16.msra.mxu0 %v4668
    %5163 = vmatpush.bf16.msra.mxu0 %v4664
    %5164 = vmatpush.bf16.msra.mxu0 %v4660
    %5165 = vmatmul.bf16.gmra.mxu0 %v3400
    %v5166 = vpop.f32.mrf.mxu0
    %v5167 = vadd.f32 %v5153, %v5166
    %v5168 = vpop.f32.mrf.mxu0
    %v5169 = vadd.f32 %v5155, %v5168
    %5170 = vdwg.mxu0
    %5171 = vmatpush.bf16.msra.mxu0 %v4465
    %5172 = vmatpush.bf16.msra.mxu0 %v4461
    %5173 = vmatpush.bf16.msra.mxu0 %v4457
    %5174 = vmatpush.bf16.msra.mxu0 %v4453
    %5175 = vmatpush.bf16.msra.mxu0 %v4449
    %5176 = vmatpush.bf16.msra.mxu0 %v4445
    %5177 = vmatpush.bf16.msra.mxu0 %v4441
    %5178 = vmatpush.bf16.msra.mxu0 %v4437
    %5179 = vmatmul.bf16.gmra.mxu0 %v3393
    %v5180 = vpop.f32.mrf.mxu0
    %v5181 = vadd.f32 %v3661, %v5180
    %v5182 = vpop.f32.mrf.mxu0
    %v5183 = vadd.f32 %v3661, %v5182
    %5184 = vdwg.mxu0
    %5185 = vmatpush.bf16.msra.mxu0 %v4497
    %5186 = vmatpush.bf16.msra.mxu0 %v4493
    %5187 = vmatpush.bf16.msra.mxu0 %v4489
    %5188 = vmatpush.bf16.msra.mxu0 %v4485
    %5189 = vmatpush.bf16.msra.mxu0 %v4481
    %5190 = vmatpush.bf16.msra.mxu0 %v4477
    %5191 = vmatpush.bf16.msra.mxu0 %v4473
    %5192 = vmatpush.bf16.msra.mxu0 %v4469
    %5193 = vmatmul.bf16.gmra.mxu0 %v3394
    %v5194 = vpop.f32.mrf.mxu0
    %v5195 = vadd.f32 %v5181, %v5194
    %v5196 = vpop.f32.mrf.mxu0
    %v5197 = vadd.f32 %v5183, %v5196
    %5198 = vdwg.mxu0
    %5199 = vmatpush.bf16.msra.mxu0 %v4529
    %5200 = vmatpush.bf16.msra.mxu0 %v4525
    %5201 = vmatpush.bf16.msra.mxu0 %v4521
    %5202 = vmatpush.bf16.msra.mxu0 %v4517
    %5203 = vmatpush.bf16.msra.mxu0 %v4513
    %5204 = vmatpush.bf16.msra.mxu0 %v4509
    %5205 = vmatpush.bf16.msra.mxu0 %v4505
    %5206 = vmatpush.bf16.msra.mxu0 %v4501
    %5207 = vmatmul.bf16.gmra.mxu0 %v3395
    %v5208 = vpop.f32.mrf.mxu0
    %v5209 = vadd.f32 %v5195, %v5208
    %v5210 = vpop.f32.mrf.mxu0
    %v5211 = vadd.f32 %v5197, %v5210
    %5212 = vdwg.mxu0
    %5213 = vmatpush.bf16.msra.mxu0 %v4561
    %5214 = vmatpush.bf16.msra.mxu0 %v4557
    %5215 = vmatpush.bf16.msra.mxu0 %v4553
    %5216 = vmatpush.bf16.msra.mxu0 %v4549
    %5217 = vmatpush.bf16.msra.mxu0 %v4545
    %5218 = vmatpush.bf16.msra.mxu0 %v4541
    %5219 = vmatpush.bf16.msra.mxu0 %v4537
    %5220 = vmatpush.bf16.msra.mxu0 %v4533
    %5221 = vmatmul.bf16.gmra.mxu0 %v3396
    %v5222 = vpop.f32.mrf.mxu0
    %v5223 = vadd.f32 %v5209, %v5222
    %v5224 = vpop.f32.mrf.mxu0
    %v5225 = vadd.f32 %v5211, %v5224
    %5226 = vdwg.mxu0
    %5227 = vmatpush.bf16.msra.mxu0 %v4593
    %5228 = vmatpush.bf16.msra.mxu0 %v4589
    %5229 = vmatpush.bf16.msra.mxu0 %v4585
    %5230 = vmatpush.bf16.msra.mxu0 %v4581
    %5231 = vmatpush.bf16.msra.mxu0 %v4577
    %5232 = vmatpush.bf16.msra.mxu0 %v4573
    %5233 = vmatpush.bf16.msra.mxu0 %v4569
    %5234 = vmatpush.bf16.msra.mxu0 %v4565
    %5235 = vmatmul.bf16.gmra.mxu0 %v3397
    %v5236 = vpop.f32.mrf.mxu0
    %v5237 = vadd.f32 %v5223, %v5236
    %v5238 = vpop.f32.mrf.mxu0
    %v5239 = vadd.f32 %v5225, %v5238
    %5240 = vdwg.mxu0
    %5241 = vmatpush.bf16.msra.mxu0 %v4625
    %5242 = vmatpush.bf16.msra.mxu0 %v4621
    %5243 = vmatpush.bf16.msra.mxu0 %v4617
    %5244 = vmatpush.bf16.msra.mxu0 %v4613
    %5245 = vmatpush.bf16.msra.mxu0 %v4609
    %5246 = vmatpush.bf16.msra.mxu0 %v4605
    %5247 = vmatpush.bf16.msra.mxu0 %v4601
    %5248 = vmatpush.bf16.msra.mxu0 %v4597
    %5249 = vmatmul.bf16.gmra.mxu0 %v3398
    %v5250 = vpop.f32.mrf.mxu0
    %v5251 = vadd.f32 %v5237, %v5250
    %v5252 = vpop.f32.mrf.mxu0
    %v5253 = vadd.f32 %v5239, %v5252
    %5254 = vdwg.mxu0
    %5255 = vmatpush.bf16.msra.mxu0 %v4657
    %5256 = vmatpush.bf16.msra.mxu0 %v4653
    %5257 = vmatpush.bf16.msra.mxu0 %v4649
    %5258 = vmatpush.bf16.msra.mxu0 %v4645
    %5259 = vmatpush.bf16.msra.mxu0 %v4641
    %5260 = vmatpush.bf16.msra.mxu0 %v4637
    %5261 = vmatpush.bf16.msra.mxu0 %v4633
    %5262 = vmatpush.bf16.msra.mxu0 %v4629
    %5263 = vmatmul.bf16.gmra.mxu0 %v3399
    %v5264 = vpop.f32.mrf.mxu0
    %v5265 = vadd.f32 %v5251, %v5264
    %v5266 = vpop.f32.mrf.mxu0
    %v5267 = vadd.f32 %v5253, %v5266
    %5268 = vdwg.mxu0
    %5269 = vmatpush.bf16.msra.mxu0 %v4689
    %5270 = vmatpush.bf16.msra.mxu0 %v4685
    %5271 = vmatpush.bf16.msra.mxu0 %v4681
    %5272 = vmatpush.bf16.msra.mxu0 %v4677
    %5273 = vmatpush.bf16.msra.mxu0 %v4673
    %5274 = vmatpush.bf16.msra.mxu0 %v4669
    %5275 = vmatpush.bf16.msra.mxu0 %v4665
    %5276 = vmatpush.bf16.msra.mxu0 %v4661
    %5277 = vmatmul.bf16.gmra.mxu0 %v3400
    %v5278 = vpop.f32.mrf.mxu0
    %v5279 = vadd.f32 %v5265, %v5278
    %v5280 = vpop.f32.mrf.mxu0
    %v5281 = vadd.f32 %v5267, %v5280
    %5282 = vdwg.mxu0
    %5283 = vmatpush.bf16.msra.mxu0 %v4466
    %5284 = vmatpush.bf16.msra.mxu0 %v4462
    %5285 = vmatpush.bf16.msra.mxu0 %v4458
    %5286 = vmatpush.bf16.msra.mxu0 %v4454
    %5287 = vmatpush.bf16.msra.mxu0 %v4450
    %5288 = vmatpush.bf16.msra.mxu0 %v4446
    %5289 = vmatpush.bf16.msra.mxu0 %v4442
    %5290 = vmatpush.bf16.msra.mxu0 %v4438
    %5291 = vmatmul.bf16.gmra.mxu0 %v3393
    %v5292 = vpop.f32.mrf.mxu0
    %v5293 = vadd.f32 %v3662, %v5292
    %v5294 = vpop.f32.mrf.mxu0
    %v5295 = vadd.f32 %v3662, %v5294
    %5296 = vdwg.mxu0
    %5297 = vmatpush.bf16.msra.mxu0 %v4498
    %5298 = vmatpush.bf16.msra.mxu0 %v4494
    %5299 = vmatpush.bf16.msra.mxu0 %v4490
    %5300 = vmatpush.bf16.msra.mxu0 %v4486
    %5301 = vmatpush.bf16.msra.mxu0 %v4482
    %5302 = vmatpush.bf16.msra.mxu0 %v4478
    %5303 = vmatpush.bf16.msra.mxu0 %v4474
    %5304 = vmatpush.bf16.msra.mxu0 %v4470
    %5305 = vmatmul.bf16.gmra.mxu0 %v3394
    %v5306 = vpop.f32.mrf.mxu0
    %v5307 = vadd.f32 %v5293, %v5306
    %v5308 = vpop.f32.mrf.mxu0
    %v5309 = vadd.f32 %v5295, %v5308
    %5310 = vdwg.mxu0
    %5311 = vmatpush.bf16.msra.mxu0 %v4530
    %5312 = vmatpush.bf16.msra.mxu0 %v4526
    %5313 = vmatpush.bf16.msra.mxu0 %v4522
    %5314 = vmatpush.bf16.msra.mxu0 %v4518
    %5315 = vmatpush.bf16.msra.mxu0 %v4514
    %5316 = vmatpush.bf16.msra.mxu0 %v4510
    %5317 = vmatpush.bf16.msra.mxu0 %v4506
    %5318 = vmatpush.bf16.msra.mxu0 %v4502
    %5319 = vmatmul.bf16.gmra.mxu0 %v3395
    %v5320 = vpop.f32.mrf.mxu0
    %v5321 = vadd.f32 %v5307, %v5320
    %v5322 = vpop.f32.mrf.mxu0
    %v5323 = vadd.f32 %v5309, %v5322
    %5324 = vdwg.mxu0
    %5325 = vmatpush.bf16.msra.mxu0 %v4562
    %5326 = vmatpush.bf16.msra.mxu0 %v4558
    %5327 = vmatpush.bf16.msra.mxu0 %v4554
    %5328 = vmatpush.bf16.msra.mxu0 %v4550
    %5329 = vmatpush.bf16.msra.mxu0 %v4546
    %5330 = vmatpush.bf16.msra.mxu0 %v4542
    %5331 = vmatpush.bf16.msra.mxu0 %v4538
    %5332 = vmatpush.bf16.msra.mxu0 %v4534
    %5333 = vmatmul.bf16.gmra.mxu0 %v3396
    %v5334 = vpop.f32.mrf.mxu0
    %v5335 = vadd.f32 %v5321, %v5334
    %v5336 = vpop.f32.mrf.mxu0
    %v5337 = vadd.f32 %v5323, %v5336
    %5338 = vdwg.mxu0
    %5339 = vmatpush.bf16.msra.mxu0 %v4594
    %5340 = vmatpush.bf16.msra.mxu0 %v4590
    %5341 = vmatpush.bf16.msra.mxu0 %v4586
    %5342 = vmatpush.bf16.msra.mxu0 %v4582
    %5343 = vmatpush.bf16.msra.mxu0 %v4578
    %5344 = vmatpush.bf16.msra.mxu0 %v4574
    %5345 = vmatpush.bf16.msra.mxu0 %v4570
    %5346 = vmatpush.bf16.msra.mxu0 %v4566
    %5347 = vmatmul.bf16.gmra.mxu0 %v3397
    %v5348 = vpop.f32.mrf.mxu0
    %v5349 = vadd.f32 %v5335, %v5348
    %v5350 = vpop.f32.mrf.mxu0
    %v5351 = vadd.f32 %v5337, %v5350
    %5352 = vdwg.mxu0
    %5353 = vmatpush.bf16.msra.mxu0 %v4626
    %5354 = vmatpush.bf16.msra.mxu0 %v4622
    %5355 = vmatpush.bf16.msra.mxu0 %v4618
    %5356 = vmatpush.bf16.msra.mxu0 %v4614
    %5357 = vmatpush.bf16.msra.mxu0 %v4610
    %5358 = vmatpush.bf16.msra.mxu0 %v4606
    %5359 = vmatpush.bf16.msra.mxu0 %v4602
    %5360 = vmatpush.bf16.msra.mxu0 %v4598
    %5361 = vmatmul.bf16.gmra.mxu0 %v3398
    %v5362 = vpop.f32.mrf.mxu0
    %v5363 = vadd.f32 %v5349, %v5362
    %v5364 = vpop.f32.mrf.mxu0
    %v5365 = vadd.f32 %v5351, %v5364
    %5366 = vdwg.mxu0
    %5367 = vmatpush.bf16.msra.mxu0 %v4658
    %5368 = vmatpush.bf16.msra.mxu0 %v4654
    %5369 = vmatpush.bf16.msra.mxu0 %v4650
    %5370 = vmatpush.bf16.msra.mxu0 %v4646
    %5371 = vmatpush.bf16.msra.mxu0 %v4642
    %5372 = vmatpush.bf16.msra.mxu0 %v4638
    %5373 = vmatpush.bf16.msra.mxu0 %v4634
    %5374 = vmatpush.bf16.msra.mxu0 %v4630
    %5375 = vmatmul.bf16.gmra.mxu0 %v3399
    %v5376 = vpop.f32.mrf.mxu0
    %v5377 = vadd.f32 %v5363, %v5376
    %v5378 = vpop.f32.mrf.mxu0
    %v5379 = vadd.f32 %v5365, %v5378
    %5380 = vdwg.mxu0
    %5381 = vmatpush.bf16.msra.mxu0 %v4690
    %5382 = vmatpush.bf16.msra.mxu0 %v4686
    %5383 = vmatpush.bf16.msra.mxu0 %v4682
    %5384 = vmatpush.bf16.msra.mxu0 %v4678
    %5385 = vmatpush.bf16.msra.mxu0 %v4674
    %5386 = vmatpush.bf16.msra.mxu0 %v4670
    %5387 = vmatpush.bf16.msra.mxu0 %v4666
    %5388 = vmatpush.bf16.msra.mxu0 %v4662
    %5389 = vmatmul.bf16.gmra.mxu0 %v3400
    %v5390 = vpop.f32.mrf.mxu0
    %v5391 = vadd.f32 %v5377, %v5390
    %v5392 = vpop.f32.mrf.mxu0
    %v5393 = vadd.f32 %v5379, %v5392
    %5394 = vdwg.mxu0
    %vm5395 = vcmp.gt.f32.partialorder %v5055, 0.0
    %vm5396 = vcmp.gt.f32.partialorder %v5167, 0.0
    %vm5397 = vcmp.gt.f32.partialorder %v5279, 0.0
    %vm5398 = vcmp.gt.f32.partialorder %v5391, 0.0
    %vm5399 = vcmp.gt.f32.partialorder %v5057, 0.0
    %vm5400 = vcmp.gt.f32.partialorder %v5169, 0.0
    %vm5401 = vcmp.gt.f32.partialorder %v5281, 0.0
    %vm5402 = vcmp.gt.f32.partialorder %v5393, 0.0
    %v5403 = vmul.f32 %v5055, 0.2
    %v5404 = vmul.f32 %v5167, 0.2
    %v5405 = vmul.f32 %v5279, 0.2
    %v5406 = vmul.f32 %v5391, 0.2
    %v5407 = vmul.f32 %v5057, 0.2
    %v5408 = vmul.f32 %v5169, 0.2
    %v5409 = vmul.f32 %v5281, 0.2
    %v5410 = vmul.f32 %v5393, 0.2
    %v5411 = vsel %vm5395, %v5055, %v5403
    %v5412 = vsel %vm5396, %v5167, %v5404
    %v5413 = vsel %vm5397, %v5279, %v5405
    %v5414 = vsel %vm5398, %v5391, %v5406
    %v5415 = vsel %vm5399, %v5057, %v5407
    %v5416 = vsel %vm5400, %v5169, %v5408
    %v5417 = vsel %vm5401, %v5281, %v5409
    %v5418 = vsel %vm5402, %v5393, %v5410
    %v5419 = vpack.c.bf16 %v5415, %v5411
    %v5420 = vpack.c.bf16 %v5416, %v5412
    %v5421 = vpack.c.bf16 %v5417, %v5413
    %v5422 = vpack.c.bf16 %v5418, %v5414
    %v5423 = vld [vmem:[#allocation11] sm:$0xff]
    %v5424 = vld [vmem:[#allocation11 + $0x8] sm:$0xff]
    %v5425 = vld [vmem:[#allocation11 + $0x10] sm:$0xff]
    %v5426 = vld [vmem:[#allocation11 + $0x18] sm:$0xff]
    %v5427 = vld [vmem:[#allocation11 + $0x20] sm:$0xff]
    %v5428 = vld [vmem:[#allocation11 + $0x28] sm:$0xff]
    %v5429 = vld [vmem:[#allocation11 + $0x30] sm:$0xff]
    %v5430 = vld [vmem:[#allocation11 + $0x38] sm:$0xff]
    %v5431 = vld [vmem:[#allocation11 + $0x40] sm:$0xff]
    %v5432 = vld [vmem:[#allocation11 + $0x48] sm:$0xff]
    %v5433 = vld [vmem:[#allocation11 + $0x50] sm:$0xff]
    %v5434 = vld [vmem:[#allocation11 + $0x58] sm:$0xff]
    %v5435 = vld [vmem:[#allocation11 + $0x60] sm:$0xff]
    %v5436 = vld [vmem:[#allocation11 + $0x68] sm:$0xff]
    %v5437 = vld [vmem:[#allocation11 + $0x70] sm:$0xff]
    %v5438 = vld [vmem:[#allocation11 + $0x78] sm:$0xff]
    %v5439 = vld [vmem:[#allocation11 + $0x80] sm:$0xff]
    %v5440 = vld [vmem:[#allocation11 + $0x88] sm:$0xff]
    %v5441 = vld [vmem:[#allocation11 + $0x90] sm:$0xff]
    %v5442 = vld [vmem:[#allocation11 + $0x98] sm:$0xff]
    %v5443 = vld [vmem:[#allocation11 + $0xa0] sm:$0xff]
    %v5444 = vld [vmem:[#allocation11 + $0xa8] sm:$0xff]
    %v5445 = vld [vmem:[#allocation11 + $0xb0] sm:$0xff]
    %v5446 = vld [vmem:[#allocation11 + $0xb8] sm:$0xff]
    %v5447 = vld [vmem:[#allocation11 + $0xc0] sm:$0xff]
    %v5448 = vld [vmem:[#allocation11 + $0xc8] sm:$0xff]
    %v5449 = vld [vmem:[#allocation11 + $0xd0] sm:$0xff]
    %v5450 = vld [vmem:[#allocation11 + $0xd8] sm:$0xff]
    %v5451 = vld [vmem:[#allocation11 + $0xe0] sm:$0xff]
    %v5452 = vld [vmem:[#allocation11 + $0xe8] sm:$0xff]
    %v5453 = vld [vmem:[#allocation11 + $0xf0] sm:$0xff]
    %v5454 = vld [vmem:[#allocation11 + $0xf8] sm:$0xff]
    %v5455 = vld [vmem:[#allocation11 + $0x100] sm:$0xff]
    %v5456 = vld [vmem:[#allocation11 + $0x108] sm:$0xff]
    %v5457 = vld [vmem:[#allocation11 + $0x110] sm:$0xff]
    %v5458 = vld [vmem:[#allocation11 + $0x118] sm:$0xff]
    %v5459 = vld [vmem:[#allocation11 + $0x120] sm:$0xff]
    %v5460 = vld [vmem:[#allocation11 + $0x128] sm:$0xff]
    %v5461 = vld [vmem:[#allocation11 + $0x130] sm:$0xff]
    %v5462 = vld [vmem:[#allocation11 + $0x138] sm:$0xff]
    %v5463 = vld [vmem:[#allocation11 + $0x140] sm:$0xff]
    %v5464 = vld [vmem:[#allocation11 + $0x148] sm:$0xff]
    %v5465 = vld [vmem:[#allocation11 + $0x150] sm:$0xff]
    %v5466 = vld [vmem:[#allocation11 + $0x158] sm:$0xff]
    %v5467 = vld [vmem:[#allocation11 + $0x160] sm:$0xff]
    %v5468 = vld [vmem:[#allocation11 + $0x168] sm:$0xff]
    %v5469 = vld [vmem:[#allocation11 + $0x170] sm:$0xff]
    %v5470 = vld [vmem:[#allocation11 + $0x178] sm:$0xff]
    %v5471 = vld [vmem:[#allocation11 + $0x180] sm:$0xff]
    %v5472 = vld [vmem:[#allocation11 + $0x188] sm:$0xff]
    %v5473 = vld [vmem:[#allocation11 + $0x190] sm:$0xff]
    %v5474 = vld [vmem:[#allocation11 + $0x198] sm:$0xff]
    %v5475 = vld [vmem:[#allocation11 + $0x1a0] sm:$0xff]
    %v5476 = vld [vmem:[#allocation11 + $0x1a8] sm:$0xff]
    %v5477 = vld [vmem:[#allocation11 + $0x1b0] sm:$0xff]
    %v5478 = vld [vmem:[#allocation11 + $0x1b8] sm:$0xff]
    %v5479 = vld [vmem:[#allocation11 + $0x1c0] sm:$0xff]
    %v5480 = vld [vmem:[#allocation11 + $0x1c8] sm:$0xff]
    %v5481 = vld [vmem:[#allocation11 + $0x1d0] sm:$0xff]
    %v5482 = vld [vmem:[#allocation11 + $0x1d8] sm:$0xff]
    %v5483 = vld [vmem:[#allocation11 + $0x1e0] sm:$0xff]
    %v5484 = vld [vmem:[#allocation11 + $0x1e8] sm:$0xff]
    %v5485 = vld [vmem:[#allocation11 + $0x1f0] sm:$0xff]
    %v5486 = vld [vmem:[#allocation11 + $0x1f8] sm:$0xff]
    %v5487 = vld [vmem:[#allocation13] sm:$0x3]
    %v5489 = vperm.slane %v5487, 0
    %v5490 = vperm.slane %v5487, 1
    %v5557 = vunpack.c.l.b16 %v5423
    %v5558 = vunpack.c.h.b16 %v5423
    %v5559 = vunpack.c.l.b16 %v5424
    %v5560 = vunpack.c.h.b16 %v5424
    %v5561 = vunpack.c.l.b16 %v5425
    %v5562 = vunpack.c.h.b16 %v5425
    %v5563 = vunpack.c.l.b16 %v5426
    %v5564 = vunpack.c.h.b16 %v5426
    %v5565 = vunpack.c.l.b16 %v5427
    %v5566 = vunpack.c.h.b16 %v5427
    %v5567 = vunpack.c.l.b16 %v5428
    %v5568 = vunpack.c.h.b16 %v5428
    %v5569 = vunpack.c.l.b16 %v5429
    %v5570 = vunpack.c.h.b16 %v5429
    %v5571 = vunpack.c.l.b16 %v5430
    %v5572 = vunpack.c.h.b16 %v5430
    %v5573 = vunpack.c.l.b16 %v5431
    %v5574 = vunpack.c.h.b16 %v5431
    %v5575 = vunpack.c.l.b16 %v5432
    %v5576 = vunpack.c.h.b16 %v5432
    %v5577 = vunpack.c.l.b16 %v5433
    %v5578 = vunpack.c.h.b16 %v5433
    %v5579 = vunpack.c.l.b16 %v5434
    %v5580 = vunpack.c.h.b16 %v5434
    %v5581 = vunpack.c.l.b16 %v5435
    %v5582 = vunpack.c.h.b16 %v5435
    %v5583 = vunpack.c.l.b16 %v5436
    %v5584 = vunpack.c.h.b16 %v5436
    %v5585 = vunpack.c.l.b16 %v5437
    %v5586 = vunpack.c.h.b16 %v5437
    %v5587 = vunpack.c.l.b16 %v5438
    %v5588 = vunpack.c.h.b16 %v5438
    %v5589 = vunpack.c.l.b16 %v5439
    %v5590 = vunpack.c.h.b16 %v5439
    %v5591 = vunpack.c.l.b16 %v5440
    %v5592 = vunpack.c.h.b16 %v5440
    %v5593 = vunpack.c.l.b16 %v5441
    %v5594 = vunpack.c.h.b16 %v5441
    %v5595 = vunpack.c.l.b16 %v5442
    %v5596 = vunpack.c.h.b16 %v5442
    %v5597 = vunpack.c.l.b16 %v5443
    %v5598 = vunpack.c.h.b16 %v5443
    %v5599 = vunpack.c.l.b16 %v5444
    %v5600 = vunpack.c.h.b16 %v5444
    %v5601 = vunpack.c.l.b16 %v5445
    %v5602 = vunpack.c.h.b16 %v5445
    %v5603 = vunpack.c.l.b16 %v5446
    %v5604 = vunpack.c.h.b16 %v5446
    %v5605 = vunpack.c.l.b16 %v5447
    %v5606 = vunpack.c.h.b16 %v5447
    %v5607 = vunpack.c.l.b16 %v5448
    %v5608 = vunpack.c.h.b16 %v5448
    %v5609 = vunpack.c.l.b16 %v5449
    %v5610 = vunpack.c.h.b16 %v5449
    %v5611 = vunpack.c.l.b16 %v5450
    %v5612 = vunpack.c.h.b16 %v5450
    %v5613 = vunpack.c.l.b16 %v5451
    %v5614 = vunpack.c.h.b16 %v5451
    %v5615 = vunpack.c.l.b16 %v5452
    %v5616 = vunpack.c.h.b16 %v5452
    %v5617 = vunpack.c.l.b16 %v5453
    %v5618 = vunpack.c.h.b16 %v5453
    %v5619 = vunpack.c.l.b16 %v5454
    %v5620 = vunpack.c.h.b16 %v5454
    %v5621 = vunpack.c.l.b16 %v5455
    %v5622 = vunpack.c.h.b16 %v5455
    %v5623 = vunpack.c.l.b16 %v5456
    %v5624 = vunpack.c.h.b16 %v5456
    %v5625 = vunpack.c.l.b16 %v5457
    %v5626 = vunpack.c.h.b16 %v5457
    %v5627 = vunpack.c.l.b16 %v5458
    %v5628 = vunpack.c.h.b16 %v5458
    %v5629 = vunpack.c.l.b16 %v5459
    %v5630 = vunpack.c.h.b16 %v5459
    %v5631 = vunpack.c.l.b16 %v5460
    %v5632 = vunpack.c.h.b16 %v5460
    %v5633 = vunpack.c.l.b16 %v5461
    %v5634 = vunpack.c.h.b16 %v5461
    %v5635 = vunpack.c.l.b16 %v5462
    %v5636 = vunpack.c.h.b16 %v5462
    %v5637 = vunpack.c.l.b16 %v5463
    %v5638 = vunpack.c.h.b16 %v5463
    %v5639 = vunpack.c.l.b16 %v5464
    %v5640 = vunpack.c.h.b16 %v5464
    %v5641 = vunpack.c.l.b16 %v5465
    %v5642 = vunpack.c.h.b16 %v5465
    %v5643 = vunpack.c.l.b16 %v5466
    %v5644 = vunpack.c.h.b16 %v5466
    %v5645 = vunpack.c.l.b16 %v5467
    %v5646 = vunpack.c.h.b16 %v5467
    %v5647 = vunpack.c.l.b16 %v5468
    %v5648 = vunpack.c.h.b16 %v5468
    %v5649 = vunpack.c.l.b16 %v5469
    %v5650 = vunpack.c.h.b16 %v5469
    %v5651 = vunpack.c.l.b16 %v5470
    %v5652 = vunpack.c.h.b16 %v5470
    %v5653 = vunpack.c.l.b16 %v5471
    %v5654 = vunpack.c.h.b16 %v5471
    %v5655 = vunpack.c.l.b16 %v5472
    %v5656 = vunpack.c.h.b16 %v5472
    %v5657 = vunpack.c.l.b16 %v5473
    %v5658 = vunpack.c.h.b16 %v5473
    %v5659 = vunpack.c.l.b16 %v5474
    %v5660 = vunpack.c.h.b16 %v5474
    %v5661 = vunpack.c.l.b16 %v5475
    %v5662 = vunpack.c.h.b16 %v5475
    %v5663 = vunpack.c.l.b16 %v5476
    %v5664 = vunpack.c.h.b16 %v5476
    %v5665 = vunpack.c.l.b16 %v5477
    %v5666 = vunpack.c.h.b16 %v5477
    %v5667 = vunpack.c.l.b16 %v5478
    %v5668 = vunpack.c.h.b16 %v5478
    %v5669 = vunpack.c.l.b16 %v5479
    %v5670 = vunpack.c.h.b16 %v5479
    %v5671 = vunpack.c.l.b16 %v5480
    %v5672 = vunpack.c.h.b16 %v5480
    %v5673 = vunpack.c.l.b16 %v5481
    %v5674 = vunpack.c.h.b16 %v5481
    %v5675 = vunpack.c.l.b16 %v5482
    %v5676 = vunpack.c.h.b16 %v5482
    %v5677 = vunpack.c.l.b16 %v5483
    %v5678 = vunpack.c.h.b16 %v5483
    %v5679 = vunpack.c.l.b16 %v5484
    %v5680 = vunpack.c.h.b16 %v5484
    %v5681 = vunpack.c.l.b16 %v5485
    %v5682 = vunpack.c.h.b16 %v5485
    %v5683 = vunpack.c.l.b16 %v5486
    %v5684 = vunpack.c.h.b16 %v5486
    %v5685 = vpack.c.b16 %v5559, %v5557
    %v5686 = vpack.c.b16 %v5560, %v5558
    %v5687 = vpack.c.b16 %v5563, %v5561
    %v5688 = vpack.c.b16 %v5564, %v5562
    %v5689 = vpack.c.b16 %v5567, %v5565
    %v5690 = vpack.c.b16 %v5568, %v5566
    %v5691 = vpack.c.b16 %v5571, %v5569
    %v5692 = vpack.c.b16 %v5572, %v5570
    %v5693 = vpack.c.b16 %v5575, %v5573
    %v5694 = vpack.c.b16 %v5576, %v5574
    %v5695 = vpack.c.b16 %v5579, %v5577
    %v5696 = vpack.c.b16 %v5580, %v5578
    %v5697 = vpack.c.b16 %v5583, %v5581
    %v5698 = vpack.c.b16 %v5584, %v5582
    %v5699 = vpack.c.b16 %v5587, %v5585
    %v5700 = vpack.c.b16 %v5588, %v5586
    %v5701 = vpack.c.b16 %v5591, %v5589
    %v5702 = vpack.c.b16 %v5592, %v5590
    %v5703 = vpack.c.b16 %v5595, %v5593
    %v5704 = vpack.c.b16 %v5596, %v5594
    %v5705 = vpack.c.b16 %v5599, %v5597
    %v5706 = vpack.c.b16 %v5600, %v5598
    %v5707 = vpack.c.b16 %v5603, %v5601
    %v5708 = vpack.c.b16 %v5604, %v5602
    %v5709 = vpack.c.b16 %v5607, %v5605
    %v5710 = vpack.c.b16 %v5608, %v5606
    %v5711 = vpack.c.b16 %v5611, %v5609
    %v5712 = vpack.c.b16 %v5612, %v5610
    %v5713 = vpack.c.b16 %v5615, %v5613
    %v5714 = vpack.c.b16 %v5616, %v5614
    %v5715 = vpack.c.b16 %v5619, %v5617
    %v5716 = vpack.c.b16 %v5620, %v5618
    %v5717 = vpack.c.b16 %v5623, %v5621
    %v5718 = vpack.c.b16 %v5624, %v5622
    %v5719 = vpack.c.b16 %v5627, %v5625
    %v5720 = vpack.c.b16 %v5628, %v5626
    %v5721 = vpack.c.b16 %v5631, %v5629
    %v5722 = vpack.c.b16 %v5632, %v5630
    %v5723 = vpack.c.b16 %v5635, %v5633
    %v5724 = vpack.c.b16 %v5636, %v5634
    %v5725 = vpack.c.b16 %v5639, %v5637
    %v5726 = vpack.c.b16 %v5640, %v5638
    %v5727 = vpack.c.b16 %v5643, %v5641
    %v5728 = vpack.c.b16 %v5644, %v5642
    %v5729 = vpack.c.b16 %v5647, %v5645
    %v5730 = vpack.c.b16 %v5648, %v5646
    %v5731 = vpack.c.b16 %v5651, %v5649
    %v5732 = vpack.c.b16 %v5652, %v5650
    %v5733 = vpack.c.b16 %v5655, %v5653
    %v5734 = vpack.c.b16 %v5656, %v5654
    %v5735 = vpack.c.b16 %v5659, %v5657
    %v5736 = vpack.c.b16 %v5660, %v5658
    %v5737 = vpack.c.b16 %v5663, %v5661
    %v5738 = vpack.c.b16 %v5664, %v5662
    %v5739 = vpack.c.b16 %v5667, %v5665
    %v5740 = vpack.c.b16 %v5668, %v5666
    %v5741 = vpack.c.b16 %v5671, %v5669
    %v5742 = vpack.c.b16 %v5672, %v5670
    %v5743 = vpack.c.b16 %v5675, %v5673
    %v5744 = vpack.c.b16 %v5676, %v5674
    %v5745 = vpack.c.b16 %v5679, %v5677
    %v5746 = vpack.c.b16 %v5680, %v5678
    %v5747 = vpack.c.b16 %v5683, %v5681
    %v5748 = vpack.c.b16 %v5684, %v5682
    %5813 = vmatpush.bf16.msra.mxu0 %v5699
    %5814 = vmatpush.bf16.msra.mxu0 %v5697
    %5815 = vmatpush.bf16.msra.mxu0 %v5695
    %5816 = vmatpush.bf16.msra.mxu0 %v5693
    %5817 = vmatpush.bf16.msra.mxu0 %v5691
    %5818 = vmatpush.bf16.msra.mxu0 %v5689
    %5819 = vmatpush.bf16.msra.mxu0 %v5687
    %5820 = vmatpush.bf16.msra.mxu0 %v5685
    %5821 = vmatmul.bf16.gmra.mxu0 %v5419
    %v5822 = vpop.f32.mrf.mxu0
    %v5823 = vadd.f32 %v5489, %v5822
    %v5824 = vpop.f32.mrf.mxu0
    %v5825 = vadd.f32 %v5489, %v5824
    %5826 = vdwg.mxu0
    %5827 = vmatpush.bf16.msra.mxu0 %v5715
    %5828 = vmatpush.bf16.msra.mxu0 %v5713
    %5829 = vmatpush.bf16.msra.mxu0 %v5711
    %5830 = vmatpush.bf16.msra.mxu0 %v5709
    %5831 = vmatpush.bf16.msra.mxu0 %v5707
    %5832 = vmatpush.bf16.msra.mxu0 %v5705
    %5833 = vmatpush.bf16.msra.mxu0 %v5703
    %5834 = vmatpush.bf16.msra.mxu0 %v5701
    %5835 = vmatmul.bf16.gmra.mxu0 %v5420
    %v5836 = vpop.f32.mrf.mxu0
    %v5837 = vadd.f32 %v5823, %v5836
    %v5838 = vpop.f32.mrf.mxu0
    %v5839 = vadd.f32 %v5825, %v5838
    %5840 = vdwg.mxu0
    %5841 = vmatpush.bf16.msra.mxu0 %v5731
    %5842 = vmatpush.bf16.msra.mxu0 %v5729
    %5843 = vmatpush.bf16.msra.mxu0 %v5727
    %5844 = vmatpush.bf16.msra.mxu0 %v5725
    %5845 = vmatpush.bf16.msra.mxu0 %v5723
    %5846 = vmatpush.bf16.msra.mxu0 %v5721
    %5847 = vmatpush.bf16.msra.mxu0 %v5719
    %5848 = vmatpush.bf16.msra.mxu0 %v5717
    %5849 = vmatmul.bf16.gmra.mxu0 %v5421
    %v5850 = vpop.f32.mrf.mxu0
    %v5851 = vadd.f32 %v5837, %v5850
    %v5852 = vpop.f32.mrf.mxu0
    %v5853 = vadd.f32 %v5839, %v5852
    %5854 = vdwg.mxu0
    %5855 = vmatpush.bf16.msra.mxu0 %v5747
    %5856 = vmatpush.bf16.msra.mxu0 %v5745
    %5857 = vmatpush.bf16.msra.mxu0 %v5743
    %5858 = vmatpush.bf16.msra.mxu0 %v5741
    %5859 = vmatpush.bf16.msra.mxu0 %v5739
    %5860 = vmatpush.bf16.msra.mxu0 %v5737
    %5861 = vmatpush.bf16.msra.mxu0 %v5735
    %5862 = vmatpush.bf16.msra.mxu0 %v5733
    %5863 = vmatmul.bf16.gmra.mxu0 %v5422
    %v5864 = vpop.f32.mrf.mxu0
    %v5865 = vadd.f32 %v5851, %v5864
    %v5866 = vpop.f32.mrf.mxu0
    %v5867 = vadd.f32 %v5853, %v5866
    %5868 = vdwg.mxu0
    %5869 = vmatpush.bf16.msra.mxu0 %v5700
    %5870 = vmatpush.bf16.msra.mxu0 %v5698
    %5871 = vmatpush.bf16.msra.mxu0 %v5696
    %5872 = vmatpush.bf16.msra.mxu0 %v5694
    %5873 = vmatpush.bf16.msra.mxu0 %v5692
    %5874 = vmatpush.bf16.msra.mxu0 %v5690
    %5875 = vmatpush.bf16.msra.mxu0 %v5688
    %5876 = vmatpush.bf16.msra.mxu0 %v5686
    %5877 = vmatmul.bf16.gmra.mxu0 %v5419
    %v5878 = vpop.f32.mrf.mxu0
    %v5879 = vadd.f32 %v5490, %v5878
    %v5880 = vpop.f32.mrf.mxu0
    %v5881 = vadd.f32 %v5490, %v5880
    %5882 = vdwg.mxu0
    %5883 = vmatpush.bf16.msra.mxu0 %v5716
    %5884 = vmatpush.bf16.msra.mxu0 %v5714
    %5885 = vmatpush.bf16.msra.mxu0 %v5712
    %5886 = vmatpush.bf16.msra.mxu0 %v5710
    %5887 = vmatpush.bf16.msra.mxu0 %v5708
    %5888 = vmatpush.bf16.msra.mxu0 %v5706
    %5889 = vmatpush.bf16.msra.mxu0 %v5704
    %5890 = vmatpush.bf16.msra.mxu0 %v5702
    %5891 = vmatmul.bf16.gmra.mxu0 %v5420
    %v5892 = vpop.f32.mrf.mxu0
    %v5893 = vadd.f32 %v5879, %v5892
    %v5894 = vpop.f32.mrf.mxu0
    %v5895 = vadd.f32 %v5881, %v5894
    %5896 = vdwg.mxu0
    %5897 = vmatpush.bf16.msra.mxu0 %v5732
    %5898 = vmatpush.bf16.msra.mxu0 %v5730
    %5899 = vmatpush.bf16.msra.mxu0 %v5728
    %5900 = vmatpush.bf16.msra.mxu0 %v5726
    %5901 = vmatpush.bf16.msra.mxu0 %v5724
    %5902 = vmatpush.bf16.msra.mxu0 %v5722
    %5903 = vmatpush.bf16.msra.mxu0 %v5720
    %5904 = vmatpush.bf16.msra.mxu0 %v5718
    %5905 = vmatmul.bf16.gmra.mxu0 %v5421
    %v5906 = vpop.f32.mrf.mxu0
    %v5907 = vadd.f32 %v5893, %v5906
    %v5908 = vpop.f32.mrf.mxu0
    %v5909 = vadd.f32 %v5895, %v5908
    %5910 = vdwg.mxu0
    %5911 = vmatpush.bf16.msra.mxu0 %v5748
    %5912 = vmatpush.bf16.msra.mxu0 %v5746
    %5913 = vmatpush.bf16.msra.mxu0 %v5744
    %5914 = vmatpush.bf16.msra.mxu0 %v5742
    %5915 = vmatpush.bf16.msra.mxu0 %v5740
    %5916 = vmatpush.bf16.msra.mxu0 %v5738
    %5917 = vmatpush.bf16.msra.mxu0 %v5736
    %5918 = vmatpush.bf16.msra.mxu0 %v5734
    %5919 = vmatmul.bf16.gmra.mxu0 %v5422
    %v5920 = vpop.f32.mrf.mxu0
    %v5921 = vadd.f32 %v5907, %v5920
    %v5922 = vpop.f32.mrf.mxu0
    %v5923 = vadd.f32 %v5909, %v5922
    %5924 = vdwg.mxu0
    %vm5925 = vcmp.gt.f32.partialorder %v5865, 0.0
    %vm5926 = vcmp.gt.f32.partialorder %v5921, 0.0
    %vm5927 = vcmp.gt.f32.partialorder %v5867, 0.0
    %vm5928 = vcmp.gt.f32.partialorder %v5923, 0.0
    %v5929 = vmul.f32 %v5865, 0.2
    %v5930 = vmul.f32 %v5921, 0.2
    %v5931 = vmul.f32 %v5867, 0.2
    %v5932 = vmul.f32 %v5923, 0.2
    %v5933 = vsel %vm5925, %v5865, %v5929
    %v5934 = vsel %vm5926, %v5921, %v5930
    %v5935 = vsel %vm5927, %v5867, %v5931
    %v5936 = vsel %vm5928, %v5923, %v5932
    %v5937 = vpack.c.bf16 %v5935, %v5933
    %v5938 = vpack.c.bf16 %v5936, %v5934
    %v5939 = vld [vmem:[#allocation14] sm:$0xf]
    %v5940 = vld [vmem:[#allocation14 + $0x4] sm:$0xf]
    %v5941 = vld [vmem:[#allocation14 + $0x8] sm:$0xf]
    %v5942 = vld [vmem:[#allocation14 + $0xc] sm:$0xf]
    %v5943 = vld [vmem:[#allocation14 + $0x10] sm:$0xf]
    %v5944 = vld [vmem:[#allocation14 + $0x14] sm:$0xf]
    %v5945 = vld [vmem:[#allocation14 + $0x18] sm:$0xf]
    %v5946 = vld [vmem:[#allocation14 + $0x1c] sm:$0xf]
    %v5947 = vld [vmem:[#allocation14 + $0x20] sm:$0xf]
    %v5948 = vld [vmem:[#allocation14 + $0x24] sm:$0xf]
    %v5949 = vld [vmem:[#allocation14 + $0x28] sm:$0xf]
    %v5950 = vld [vmem:[#allocation14 + $0x2c] sm:$0xf]
    %v5951 = vld [vmem:[#allocation14 + $0x30] sm:$0xf]
    %v5952 = vld [vmem:[#allocation14 + $0x34] sm:$0xf]
    %v5953 = vld [vmem:[#allocation14 + $0x38] sm:$0xf]
    %v5954 = vld [vmem:[#allocation14 + $0x3c] sm:$0xf]
    %v5955 = vld [vmem:[#allocation14 + $0x40] sm:$0xf]
    %v5956 = vld [vmem:[#allocation14 + $0x44] sm:$0xf]
    %v5957 = vld [vmem:[#allocation14 + $0x48] sm:$0xf]
    %v5958 = vld [vmem:[#allocation14 + $0x4c] sm:$0xf]
    %v5959 = vld [vmem:[#allocation14 + $0x50] sm:$0xf]
    %v5960 = vld [vmem:[#allocation14 + $0x54] sm:$0xf]
    %v5961 = vld [vmem:[#allocation14 + $0x58] sm:$0xf]
    %v5962 = vld [vmem:[#allocation14 + $0x5c] sm:$0xf]
    %v5963 = vld [vmem:[#allocation14 + $0x60] sm:$0xf]
    %v5964 = vld [vmem:[#allocation14 + $0x64] sm:$0xf]
    %v5965 = vld [vmem:[#allocation14 + $0x68] sm:$0xf]
    %v5966 = vld [vmem:[#allocation14 + $0x6c] sm:$0xf]
    %v5967 = vld [vmem:[#allocation14 + $0x70] sm:$0xf]
    %v5968 = vld [vmem:[#allocation14 + $0x74] sm:$0xf]
    %v5969 = vld [vmem:[#allocation14 + $0x78] sm:$0xf]
    %v5970 = vld [vmem:[#allocation14 + $0x7c] sm:$0xf]
    %v5971 = vld [vmem:[#allocation16] sm:$0x1]
    %v5973 = vperm.slane %v5971, 0
    %v6007 = vunpack.c.l.b16 %v5939
    %v6008 = vunpack.c.l.b16 %v5940
    %v6009 = vunpack.c.l.b16 %v5941
    %v6010 = vunpack.c.l.b16 %v5942
    %v6011 = vunpack.c.l.b16 %v5943
    %v6012 = vunpack.c.l.b16 %v5944
    %v6013 = vunpack.c.l.b16 %v5945
    %v6014 = vunpack.c.l.b16 %v5946
    %v6015 = vunpack.c.l.b16 %v5947
    %v6016 = vunpack.c.l.b16 %v5948
    %v6017 = vunpack.c.l.b16 %v5949
    %v6018 = vunpack.c.l.b16 %v5950
    %v6019 = vunpack.c.l.b16 %v5951
    %v6020 = vunpack.c.l.b16 %v5952
    %v6021 = vunpack.c.l.b16 %v5953
    %v6022 = vunpack.c.l.b16 %v5954
    %v6023 = vunpack.c.l.b16 %v5955
    %v6024 = vunpack.c.l.b16 %v5956
    %v6025 = vunpack.c.l.b16 %v5957
    %v6026 = vunpack.c.l.b16 %v5958
    %v6027 = vunpack.c.l.b16 %v5959
    %v6028 = vunpack.c.l.b16 %v5960
    %v6029 = vunpack.c.l.b16 %v5961
    %v6030 = vunpack.c.l.b16 %v5962
    %v6031 = vunpack.c.l.b16 %v5963
    %v6032 = vunpack.c.l.b16 %v5964
    %v6033 = vunpack.c.l.b16 %v5965
    %v6034 = vunpack.c.l.b16 %v5966
    %v6035 = vunpack.c.l.b16 %v5967
    %v6036 = vunpack.c.l.b16 %v5968
    %v6037 = vunpack.c.l.b16 %v5969
    %v6038 = vunpack.c.l.b16 %v5970
    %v6039 = vpack.c.b16 %v6008, %v6007
    %v6040 = vpack.c.b16 %v6010, %v6009
    %v6041 = vpack.c.b16 %v6012, %v6011
    %v6042 = vpack.c.b16 %v6014, %v6013
    %v6043 = vpack.c.b16 %v6016, %v6015
    %v6044 = vpack.c.b16 %v6018, %v6017
    %v6045 = vpack.c.b16 %v6020, %v6019
    %v6046 = vpack.c.b16 %v6022, %v6021
    %v6047 = vpack.c.b16 %v6024, %v6023
    %v6048 = vpack.c.b16 %v6026, %v6025
    %v6049 = vpack.c.b16 %v6028, %v6027
    %v6050 = vpack.c.b16 %v6030, %v6029
    %v6051 = vpack.c.b16 %v6032, %v6031
    %v6052 = vpack.c.b16 %v6034, %v6033
    %v6053 = vpack.c.b16 %v6036, %v6035
    %v6054 = vpack.c.b16 %v6038, %v6037
    %6071 = vmatpush.bf16.msra.mxu0 %v6046
    %6072 = vmatpush.bf16.msra.mxu0 %v6045
    %6073 = vmatpush.bf16.msra.mxu0 %v6044
    %6074 = vmatpush.bf16.msra.mxu0 %v6043
    %6075 = vmatpush.bf16.msra.mxu0 %v6042
    %6076 = vmatpush.bf16.msra.mxu0 %v6041
    %6077 = vmatpush.bf16.msra.mxu0 %v6040
    %6078 = vmatpush.bf16.msra.mxu0 %v6039
    %6079 = vmatmul.bf16.gmra.mxu0 %v5937
    %v6080 = vpop.f32.mrf.mxu0
    %v6081 = vadd.f32 %v5973, %v6080
    %v6082 = vpop.f32.mrf.mxu0
    %v6083 = vadd.f32 %v5973, %v6082
    %6084 = vdwg.mxu0
    %6085 = vmatpush.bf16.msra.mxu0 %v6054
    %6086 = vmatpush.bf16.msra.mxu0 %v6053
    %6087 = vmatpush.bf16.msra.mxu0 %v6052
    %6088 = vmatpush.bf16.msra.mxu0 %v6051
    %6089 = vmatpush.bf16.msra.mxu0 %v6050
    %6090 = vmatpush.bf16.msra.mxu0 %v6049
    %6091 = vmatpush.bf16.msra.mxu0 %v6048
    %6092 = vmatpush.bf16.msra.mxu0 %v6047
    %6093 = vmatmul.bf16.gmra.mxu0 %v5938
    %v6094 = vpop.f32.mrf.mxu0
    %v6095 = vadd.f32 %v6081, %v6094
    %v6096 = vpop.f32.mrf.mxu0
    %v6097 = vadd.f32 %v6083, %v6096
    %6098 = vdwg.mxu0
    %6099 = vst [vmem:[#allocation17] sm:$0xff] %v6095
    %6100 = vst [vmem:[#allocation17 + $0x8] sm:$0xff] %v6097
    // Predicated region
    $region74: #{tpu_custom_call.1} parent=1 // pred_check
      _
    $region75: #{tpu_custom_call.1} parent=1 // pred_check_branch
      %6102 = sbr.rel (0) target = $region77
    $region76: #{tpu_custom_call.1} parent=1 // pred_region
      %6104 = vsyncadd [#allocation4], 0
      %s6105 = sshll.u32 [#allocation17], 4
      %s6106 = int_to_ptr.vmem [resolvable:$true] %s6105
      %s6107 = sshll.u32 %s9, 4
      %s6108 = int_to_ptr.hbm [resolvable:$true] %s6107
      %6113 = dma.vmem_to_hbm [thread:$0]  %s6106, 256, %s6108, [#allocation4], 128, 128, 8
    $region77: #{tpu_custom_call.1} parent=1 // pred_fallthru
      _
    // Predicated region
    $region78: #{tpu_custom_call.1} parent=1 // pred_check
      _
    $region79: #{tpu_custom_call.1} parent=1 // pred_check_branch
      %6115 = sbr.rel (0) target = $region81
    $region80: #{tpu_custom_call.1} parent=1 // pred_region
      %6117 = dma.done [#allocation4], 256
    $region81: #{tpu_custom_call.1} parent=1 // pred_fallthru
      _
    %6118 = vsyncpa [#allocation3], 1
    %6119 = vsyncpa [#allocation6], 1
    %6120 = vsyncpa [#allocation9], 1
    %6121 = vsyncpa [#allocation12], 1
    %6122 = vsyncpa [#allocation15], 1
    %6123 = vsyncpa [#allocation4], 1

</llo_original>
